<compile_context>
chip_gen: v7x
topology: tpu7x:2x2x1
jax: 0.10.0
libtpu: 0.0.40
codegen_flags: <defaults>
</compile_context>

<pallas_src>
import numpy as np
import jax
import jax.numpy as jnp
from jax.experimental import pallas as pl
from jax.experimental.pallas import tpu as pltpu


def _haar_matrix(W, G, dtype):
    """Constant (G*2W, 4*G*Wh) matrix mapping a packed row-pair block to
    concatenated [LL | HL | LH | HH] rows (1/2 scale folded in)."""
    Wh = W // 2
    K = G * 2 * W            # packed input row width (G row-pairs)
    P = G * Wh               # per-band output width
    p = np.arange(K)
    gp = p // (2 * W)        # which row-pair inside the packed row
    rp = (p % (2 * W)) // W  # row parity: 0 = even image row, 1 = odd
    w = p % W                # column inside the image row
    jj = w // 2              # output column
    cp = w % 2               # column parity
    q = np.arange(4 * P)
    band = q // P            # 0=LL, 1=HL, 2=LH, 3=HH
    gq = (q % P) // Wh
    jq = q % Wh
    match = (gp[:, None] == gq[None, :]) & (jj[:, None] == jq[None, :])
    sr = (2 * rp - 1).astype(np.float32)[:, None]   # -1 even row, +1 odd row
    sc = (2 * cp - 1).astype(np.float32)[:, None]   # -1 even col, +1 odd col
    sign = (np.where(np.isin(band, (2, 3))[None, :], sr, 1.0)      # LH, HH
            * np.where(np.isin(band, (1, 3))[None, :], sc, 1.0))   # HL, HH
    A = np.where(match, 0.5 * sign, 0.0).astype(np.float32)
    return jnp.asarray(A, dtype=dtype)


def _pick_group(row_pairs, W, Wh):
    """G = row-pairs packed per block row: must divide row_pairs; prefer
    lane-dense outputs (G*Wh >= 128) while capping K = 2*G*W (bounds both the
    constant matrix size and the MXU work per element)."""
    cap = min(max(1, 512 // W), row_pairs)
    divs = [d for d in range(1, cap + 1) if row_pairs % d == 0]
    dense = [d for d in divs if d * Wh >= 128]
    return min(dense) if dense else max(divs)


def _pick_rows(m, row_bytes):
    """Packed rows per grid step: divisor of m, ~2 MiB of input per block,
    multiple of 8 (or the full extent) to satisfy the (8,128) tiling rule."""
    budget = 2 * 1024 * 1024
    if m * row_bytes <= budget:
        return m
    limit = max(8, budget // row_bytes)
    best = 0
    for d in range(8, m + 1, 8):
        if m % d == 0 and d <= limit:
            best = d
    return best if best else m


def _dwt_haar_kernel(a_ref, x_ref, ll_ref, hi_ref):
    # x_ref: (R, K) packed row-pairs;  a_ref: (K, 4P) constant butterfly matrix.
    out = jnp.dot(x_ref[...], a_ref[...],
                  preferred_element_type=jnp.float32,
                  precision=jax.lax.Precision.HIGHEST)
    P = ll_ref.shape[-1]
    ll_ref[...] = out[:, :P].astype(ll_ref.dtype)
    hi_ref[0] = out[:, P:2 * P].astype(hi_ref.dtype)       # HL
    hi_ref[1] = out[:, 2 * P:3 * P].astype(hi_ref.dtype)   # LH
    hi_ref[2] = out[:, 3 * P:4 * P].astype(hi_ref.dtype)   # HH


def dwt_haar(x):
    B, C, H, W = x.shape
    assert H % 2 == 0 and W % 2 == 0, "DWT requires even spatial dims"
    Hh, Wh = H // 2, W // 2
    itemsize = jnp.dtype(x.dtype).itemsize

    G = _pick_group(C * Hh, W, Wh)     # row-pairs packed per block row
    K = G * 2 * W                      # packed-row width (input lane axis)
    P = G * Wh                         # per-band output width (output lane axis)
    Mb = (C * Hh) // G                 # packed rows per batch element
    R = _pick_rows(Mb, K * itemsize)   # packed rows per grid step
    T = Mb // R

    A = _haar_matrix(W, G, x.dtype)

    # Free reshape: each packed row is 2*G*W contiguous elements of NCHW x.
    x_in = x.reshape(B, Mb, K)

    cost = pl.CostEstimate(
        flops=2 * B * Mb * K * 4 * P,
        bytes_accessed=2 * x.size * itemsize + int(A.size) * itemsize,
        transcendentals=0)

    ll, hi = pl.pallas_call(
        _dwt_haar_kernel,
        grid=(B, T),
        in_specs=[
            pl.BlockSpec((K, 4 * P), lambda b, t: (0, 0)),       # A: resident
            pl.BlockSpec((None, R, K), lambda b, t: (b, t, 0)),  # x block
        ],
        out_specs=[
            pl.BlockSpec((None, R, P), lambda b, t: (b, t, 0)),
            pl.BlockSpec((None, 3, R, P), lambda b, t: (b, 0, t, 0)),
        ],
        out_shape=[
            jax.ShapeDtypeStruct((B, Mb, P), x.dtype),
            jax.ShapeDtypeStruct((B, 3, Mb, P), x.dtype),
        ],
        compiler_params=pltpu.CompilerParams(
            dimension_semantics=("parallel", "parallel"),
            vmem_limit_bytes=32 * 1024 * 1024),
        cost_estimate=cost,
    )(A, x_in)

    # Free reshapes (contiguous views). Band-major-then-channel order matches
    # torch.cat((HL, LH, HH), dim=1).
    ll = ll.reshape(B, C, Hh, Wh)
    high = hi.reshape(B, 3 * C, Hh, Wh)
    return ll, high


def _dwt_haar_ref(x):
    # Pure-JAX transcription of the PyTorch forward (for verification).
    x01 = x[:, :, 0::2, :] / 2
    x02 = x[:, :, 1::2, :] / 2
    x1 = x01[:, :, :, 0::2]
    x2 = x02[:, :, :, 0::2]
    x3 = x01[:, :, :, 1::2]
    x4 = x02[:, :, :, 1::2]
    x_LL = x1 + x2 + x3 + x4
    x_HL = -x1 - x2 + x3 + x4
    x_LH = -x1 + x2 - x3 + x4
    x_HH = x1 - x2 - x3 + x4
    return x_LL, jnp.concatenate((x_HL, x_LH, x_HH), axis=1)


if __name__ == "__main__":
    # DWT has no learnable parameters; only the input is needed.
    key = jax.random.PRNGKey(0)
    x = jax.random.normal(key, (2, 4, 16, 16), dtype=jnp.float32)

    ll, high = dwt_haar(x)
    jax.block_until_ready((ll, high))

    ll_ref, high_ref = _dwt_haar_ref(x)
    assert ll.shape == ll_ref.shape == (2, 4, 8, 8)
    assert high.shape == high_ref.shape == (2, 12, 8, 8)
    assert jnp.allclose(ll, ll_ref, atol=1e-5, rtol=1e-5)
    assert jnp.allclose(high, high_ref, atol=1e-5, rtol=1e-5)
    print("KERNEL_OK")
</pallas_src>

<mosaic_0001>
module attributes {stable_mosaic.version = 11 : i64} {
  func.func @_dwt_haar_kernel(%arg0: i32, %arg1: i32, %arg2: memref<512x512xf32, #tpu.memory_space<vmem>>, %arg3: memref<1x2x512xf32, #tpu.memory_space<vmem>>, %arg4: memref<1x2x128xf32, #tpu.memory_space<vmem>>, %arg5: memref<1x3x2x128xf32, #tpu.memory_space<vmem>>) attributes {dimension_semantics = [#tpu.dimension_semantics<parallel>, #tpu.dimension_semantics<parallel>], iteration_bounds = array<i64: 2, 1>, scalar_prefetch = 0 : i64, scratch_operands = 0 : i64, tpu.core_type = #tpu.core_type<tc>, window_params = [{pipeline_mode = #tpu.pipeline_mode<synchronous>, transform_indices = @transform_0, window_bounds = array<i64: 512, 512>}, {transform_indices = @transform_1, window_bounds = array<i64: 1, 2, 512>}, {transform_indices = @transform_2, window_bounds = array<i64: 1, 2, 128>}, {transform_indices = @transform_3, window_bounds = array<i64: 1, 3, 2, 128>}]} {
    %c0 = arith.constant 0 : index
    %c0_0 = arith.constant 0 : index
    %c0_1 = arith.constant 0 : index
    %0 = vector.load %arg3[%c0, %c0_0, %c0_1] : memref<1x2x512xf32, #tpu.memory_space<vmem>>, vector<1x2x512xf32>
    %1 = vector.shape_cast %0 : vector<1x2x512xf32> to vector<2x512xf32>
    %c0_2 = arith.constant 0 : index
    %c0_3 = arith.constant 0 : index
    %2 = vector.load %arg2[%c0_2, %c0_3] : memref<512x512xf32, #tpu.memory_space<vmem>>, vector<512x512xf32>
    %cst = arith.constant dense<0.000000e+00> : vector<2x512xf32>
    %3 = tpu.matmul %1, %2, %cst {dimension_numbers = #tpu.dot_dimension_numbers<[1], [0], [0], [1], [0, 0, 1, 1], [], []>, precision = #tpu.contract_precision<fp32>} : vector<2x512xf32>, vector<512x512xf32>, vector<2x512xf32> -> vector<2x512xf32>
    %4 = vector.extract_strided_slice %3 {offsets = [0, 0], sizes = [2, 128], strides = [1, 1]} : vector<2x512xf32> to vector<2x128xf32>
    %c0_4 = arith.constant 0 : index
    %c0_5 = arith.constant 0 : index
    %c0_6 = arith.constant 0 : index
    %5 = vector.load %arg4[%c0_4, %c0_5, %c0_6] : memref<1x2x128xf32, #tpu.memory_space<vmem>>, vector<1x2x128xf32>
    %6 = vector.shape_cast %5 : vector<1x2x128xf32> to vector<2x128xf32>
    %7 = vector.shape_cast %4 : vector<2x128xf32> to vector<1x2x128xf32>
    tpu.vector_store %arg4[%c0_4, %c0_5, %c0_6], %7 {strides = array<i32>} : memref<1x2x128xf32, #tpu.memory_space<vmem>>, vector<1x2x128xf32>,
    %8 = vector.extract_strided_slice %3 {offsets = [0, 128], sizes = [2, 128], strides = [1, 1]} : vector<2x512xf32> to vector<2x128xf32>
    %c0_7 = arith.constant 0 : index
    %c0_8 = arith.constant 0 : index
    %c0_9 = arith.constant 0 : index
    %c0_10 = arith.constant 0 : index
    %9 = vector.load %arg5[%c0_7, %c0_8, %c0_9, %c0_10] : memref<1x3x2x128xf32, #tpu.memory_space<vmem>>, vector<1x1x2x128xf32>
    %10 = vector.shape_cast %9 : vector<1x1x2x128xf32> to vector<2x128xf32>
    %11 = vector.shape_cast %8 : vector<2x128xf32> to vector<1x1x2x128xf32>
    tpu.vector_store %arg5[%c0_7, %c0_8, %c0_9, %c0_10], %11 {strides = array<i32>} : memref<1x3x2x128xf32, #tpu.memory_space<vmem>>, vector<1x1x2x128xf32>,
    %12 = vector.extract_strided_slice %3 {offsets = [0, 256], sizes = [2, 128], strides = [1, 1]} : vector<2x512xf32> to vector<2x128xf32>
    %c0_11 = arith.constant 0 : index
    %c1 = arith.constant 1 : index
    %c0_12 = arith.constant 0 : index
    %c0_13 = arith.constant 0 : index
    %13 = vector.load %arg5[%c0_11, %c1, %c0_12, %c0_13] : memref<1x3x2x128xf32, #tpu.memory_space<vmem>>, vector<1x1x2x128xf32>
    %14 = vector.shape_cast %13 : vector<1x1x2x128xf32> to vector<2x128xf32>
    %15 = vector.shape_cast %12 : vector<2x128xf32> to vector<1x1x2x128xf32>
    tpu.vector_store %arg5[%c0_11, %c1, %c0_12, %c0_13], %15 {strides = array<i32>} : memref<1x3x2x128xf32, #tpu.memory_space<vmem>>, vector<1x1x2x128xf32>,
    %16 = vector.extract_strided_slice %3 {offsets = [0, 384], sizes = [2, 128], strides = [1, 1]} : vector<2x512xf32> to vector<2x128xf32>
    %c0_14 = arith.constant 0 : index
    %c2 = arith.constant 2 : index
    %c0_15 = arith.constant 0 : index
    %c0_16 = arith.constant 0 : index
    %17 = vector.load %arg5[%c0_14, %c2, %c0_15, %c0_16] : memref<1x3x2x128xf32, #tpu.memory_space<vmem>>, vector<1x1x2x128xf32>
    %18 = vector.shape_cast %17 : vector<1x1x2x128xf32> to vector<2x128xf32>
    %19 = vector.shape_cast %16 : vector<2x128xf32> to vector<1x1x2x128xf32>
    tpu.vector_store %arg5[%c0_14, %c2, %c0_15, %c0_16], %19 {strides = array<i32>} : memref<1x3x2x128xf32, #tpu.memory_space<vmem>>, vector<1x1x2x128xf32>,
    return
  }
  func.func @transform_0(%arg0: i32, %arg1: i32) -> (i32, i32) {
    %c0_i32 = arith.constant 0 : i32
    %c0_i32_0 = arith.constant 0 : i32
    %c0_i32_1 = arith.constant 0 : i32
    return %c0_i32, %c0_i32_0 : i32, i32
  }
  func.func @transform_1(%arg0: i32, %arg1: i32) -> (i32, i32, i32) {
    %c0_i32 = arith.constant 0 : i32
    %c0_i32_0 = arith.constant 0 : i32
    return %arg0, %arg1, %c0_i32 : i32, i32, i32
  }
  func.func @transform_2(%arg0: i32, %arg1: i32) -> (i32, i32, i32) {
    %c0_i32 = arith.constant 0 : i32
    %c0_i32_0 = arith.constant 0 : i32
    return %arg0, %arg1, %c0_i32 : i32, i32, i32
  }
  func.func @transform_3(%arg0: i32, %arg1: i32) -> (i32, i32, i32, i32) {
    %c0_i32 = arith.constant 0 : i32
    %c0_i32_0 = arith.constant 0 : i32
    %c0_i32_1 = arith.constant 0 : i32
    return %arg0, %c0_i32, %arg1, %c0_i32_0 : i32, i32, i32, i32
  }
}

</mosaic_0001>

<llo_original>
// kernel: tpu_custom_call.1
$region0: #{tpu_custom_call.1}
  #allocation0 [shape = 'u32[]', space=smem, size = 0x4, offset = 0x4, fixed_abs, tag = 'smem constant byte address 0x4 - core index']
  #allocation1 [shape = 'u32[144,128]{1,0:T(1,128)}', space=vmem, size = 0x12000, scoped, tag = 'internal scratch']
  %s0 = inlined_call_operand.hbm [shape: f32[512,512], index: 0, kind: input, shape index: {}]
  %s1 = inlined_call_operand.hbm [shape: f32[2,2,512], index: 1, kind: input, shape index: {}]
  %s2 = inlined_call_operand.hbm [shape: f32[2,2,128], index: 2, kind: output, shape index: {0}]
  %s3 = inlined_call_operand.hbm [shape: f32[2,3,2,128], index: 3, kind: output, shape index: {1}]
  %4 = xla_tuple %s2, %s3
  %s5 = sld [smem:[#allocation0]]
  $region57: #{tpu_custom_call.1} parent=0
    _
  %s7 = ssub.s32 1, %s5
  %s8 = scalar_select 0, %s7, %s5
  $region1: #{tpu_custom_call.1} parent=0
    #allocation2 [shape = 'u8[1048576]{0}', space=vmem, size = 0x100000, scoped, tag = 'input window, operand 0, single buffered']
    #allocation3 [shape = 's32[2]{0}', space=sflag, size = 0x8, scoped, tag = 'scoped memory for tpu_custom_call.1']
    #allocation4 [shape = 's32[2]{0}', space=sflag, size = 0x8, scoped, tag = 'scoped memory for tpu_custom_call.1']
    #allocation5 [shape = 'u8[8192]{0}', space=vmem, size = 0x2000, scoped, tag = 'input window, operand 1']
    #allocation6 [shape = 's32[2]{0}', space=sflag, size = 0x8, scoped, tag = 'scoped memory for tpu_custom_call.1']
    #allocation7 [shape = 'u8[2048]{0}', space=vmem, size = 0x800, scoped, tag = 'output window, operand 0']
    #allocation8 [shape = 'u8[6144]{0}', space=vmem, size = 0x1800, scoped, tag = 'output window, operand 1']
    #allocation9 [shape = 's32[2]{0}', space=sflag, size = 0x8, scoped, tag = 'scoped memory for tpu_custom_call.1']
    %9 = vsyncpa [#allocation3], 0
    %10 = vsyncpa [#allocation6], 0
    %s11 = scalar_lea.sflag [#allocation6], 1
    %12 = vsyncpa %s11, 0
    %13 = vsyncpa [#allocation4], 0
    %s14 = scalar_lea.sflag [#allocation4], 1
    %15 = vsyncpa %s14, 0
    %16 = vsyncpa [#allocation9], 0
    %s17 = scalar_lea.sflag [#allocation9], 1
    %18 = vsyncpa %s17, 0
    loop: start=0, step=1, limit=4
    $region2: #{tpu_custom_call.1} parent=1 // loop_pre_header
      _
    $region3: #{tpu_custom_call.1} parent=1 // loop_header
      %s20 = sphi 0, %s24
      %p21 = scmp.ge.s32.totalorder %s20, 4
      %s27 = sphi 0, %s39
      %s28 = sphi 0, %s35
      %s29 = sphi 0, %s27
      %s30 = sphi 0, %s28
      %s31 = sphi 0, %s29
      %s32 = sphi 0, %s30
      %s40 = sphi 0, %s40
      %s42 = sphi 0, %s40
      %s43 = sphi 0, %s42
      %s57 = sphi 0, %s43
      %s65 = sphi 0, %s67
      %s68 = sphi 0, %s65
      %s69 = sphi 0, %s68
      %s85 = sphi 0, %s69
      %s93 = sphi 0, %s95
      %s96 = sphi 0, %s93
      %s97 = sphi 0, %s96
      %s113 = sphi 0, %s97
      %s121 = sphi 0, %s123
      %s124 = sphi 0, %s121
      %s125 = sphi 0, %s124
      %s141 = sphi 0, %s125
    $region4: #{tpu_custom_call.1} parent=1 // loop_header_branch
      %23 = sbr.rel (%p21) target = $region8
    $region5: #{tpu_custom_call.1} parent=1 // loop_body
      %s25 = ssub.s32 %s20, 1
      %s26 = ssub.s32 %s20, 2
      %s33 = sadd.s32 1, %s28
      %p34 = scmp.ge.s32.totalorder %s33, 1
      %s35 = scalar_select %p34, 0, %s33
      %s36 = sadd.s32 1, %s27
      %s37 = scalar_select %p34, %s36, %s27
      %p38 = scmp.ge.s32.totalorder %s37, 2
      %s39 = scalar_select %p38, 0, %s37
      %s41 = sadd.s32 %s40, 1
      %p44 = scmp.eq.s32.totalorder %s20, 1
      %p45 = scmp.ne.s32.totalorder %s40, %s42
      %p46 = scmp.eq.s32.totalorder %s20, 0
      %p47 = por %p45, %p46
      %p48 = scmp.ne.s32.totalorder %s40, %s42
      %p49 = scmp.eq.s32.totalorder %s25, 1
      %p50 = por %p48, %p49
      %p51 = scmp.ne.s32.totalorder %s42, %s43
      %p52 = scmp.eq.s32.totalorder %s25, 0
      %p53 = por %p51, %p52
      %p54 = scmp.ne.s32.totalorder %s42, %s43
      %p55 = scmp.eq.s32.totalorder %s26, 1
      %p56 = por %p54, %p55
      %p58 = scmp.ne.s32.totalorder %s43, %s57
      %p59 = scmp.eq.s32.totalorder %s26, 0
      %p60 = por %p58, %p59
      %s61 = ssub.s32 %s27, %s39
      %s62 = ssub.s32 %s28, %s35
      %s63 = sor.u32 %s61, %s62
      %p64 = scmp.eq.s32.totalorder %s63, 0
      %s66 = sadd.s32 %s65, 1
      %s67 = scalar_select %p64, %s65, %s66
      %p70 = pneg %p64
      %p71 = scmp.eq.s32.totalorder %s20, 1
      %p72 = por %p70, %p71
      %p73 = scmp.ne.s32.totalorder %s65, %s68
      %p74 = scmp.eq.s32.totalorder %s20, 0
      %p75 = por %p73, %p74
      %p76 = scmp.ne.s32.totalorder %s65, %s68
      %p77 = scmp.eq.s32.totalorder %s25, 1
      %p78 = por %p76, %p77
      %p79 = scmp.ne.s32.totalorder %s68, %s69
      %p80 = scmp.eq.s32.totalorder %s25, 0
      %p81 = por %p79, %p80
      %p82 = scmp.ne.s32.totalorder %s68, %s69
      %p83 = scmp.eq.s32.totalorder %s26, 1
      %p84 = por %p82, %p83
      %p86 = scmp.ne.s32.totalorder %s69, %s85
      %p87 = scmp.eq.s32.totalorder %s26, 0
      %p88 = por %p86, %p87
      %s89 = ssub.s32 %s27, %s39
      %s90 = ssub.s32 %s28, %s35
      %s91 = sor.u32 %s89, %s90
      %p92 = scmp.eq.s32.totalorder %s91, 0
      %s94 = sadd.s32 %s93, 1
      %s95 = scalar_select %p92, %s93, %s94
      %p98 = pneg %p92
      %p99 = scmp.eq.s32.totalorder %s20, 1
      %p100 = por %p98, %p99
      %p101 = scmp.ne.s32.totalorder %s93, %s96
      %p102 = scmp.eq.s32.totalorder %s20, 0
      %p103 = por %p101, %p102
      %p104 = scmp.ne.s32.totalorder %s93, %s96
      %p105 = scmp.eq.s32.totalorder %s25, 1
      %p106 = por %p104, %p105
      %p107 = scmp.ne.s32.totalorder %s96, %s97
      %p108 = scmp.eq.s32.totalorder %s25, 0
      %p109 = por %p107, %p108
      %p110 = scmp.ne.s32.totalorder %s96, %s97
      %p111 = scmp.eq.s32.totalorder %s26, 1
      %p112 = por %p110, %p111
      %p114 = scmp.ne.s32.totalorder %s97, %s113
      %p115 = scmp.eq.s32.totalorder %s26, 0
      %p116 = por %p114, %p115
      %s117 = ssub.s32 %s27, %s39
      %s118 = ssub.s32 %s28, %s35
      %s119 = sor.u32 %s117, %s118
      %p120 = scmp.eq.s32.totalorder %s119, 0
      %s122 = sadd.s32 %s121, 1
      %s123 = scalar_select %p120, %s121, %s122
      %p126 = pneg %p120
      %p127 = scmp.eq.s32.totalorder %s20, 1
      %p128 = por %p126, %p127
      %p129 = scmp.ne.s32.totalorder %s121, %s124
      %p130 = scmp.eq.s32.totalorder %s20, 0
      %p131 = por %p129, %p130
      %p132 = scmp.ne.s32.totalorder %s121, %s124
      %p133 = scmp.eq.s32.totalorder %s25, 1
      %p134 = por %p132, %p133
      %p135 = scmp.ne.s32.totalorder %s124, %s125
      %p136 = scmp.eq.s32.totalorder %s25, 0
      %p137 = por %p135, %p136
      %p138 = scmp.ne.s32.totalorder %s124, %s125
      %p139 = scmp.eq.s32.totalorder %s26, 1
      %p140 = por %p138, %p139
      %p142 = scmp.ne.s32.totalorder %s125, %s141
      %p143 = scmp.eq.s32.totalorder %s26, 0
      %p144 = por %p142, %p143
      %p145 = scmp.le.s32.totalorder 1, %s20
      %p146 = scmp.lt.s32.totalorder %s20, 3
      %p147 = pnand %p145, %p146
      %p148 = pneg %p147
      // Predicated region
      $region9: #{tpu_custom_call.1} parent=5 // pred_check
        _
      $region10: #{tpu_custom_call.1} parent=5 // pred_check_branch
        %150 = sbr.rel (%p147) target = $region12
      $region11: #{tpu_custom_call.1} parent=5 // pred_region
        %s151 = ssub.s32 %s20, 1
        // Predicated region
        $region13: #{tpu_custom_call.1} parent=11 // pred_check
          %p152 = pneg %p53
        $region14: #{tpu_custom_call.1} parent=11 // pred_check_branch
          %154 = sbr.rel (%p152) target = $region16
        $region15: #{tpu_custom_call.1} parent=11 // pred_region
          %s156 = ssub.s32 32768, 32768
          %157 = vsyncadd [#allocation3], %s156
          %s158 = sshll.u32 [#allocation2], 4
          %s159 = int_to_ptr.vmem [resolvable:$true] %s158
          %164 = dma.hbm_to_vmem [thread:$0]  %s0, 32768, %s159, [#allocation3], 512, 512, 32
        $region16: #{tpu_custom_call.1} parent=11 // pred_fallthru
          _
      $region12: #{tpu_custom_call.1} parent=5 // pred_fallthru
        _
      %p165 = scmp.lt.s32.totalorder %s20, 2
      // Predicated region
      $region17: #{tpu_custom_call.1} parent=5 // pred_check
        %p166 = pneg %p165
      $region18: #{tpu_custom_call.1} parent=5 // pred_check_branch
        %168 = sbr.rel (%p166) target = $region20
      $region19: #{tpu_custom_call.1} parent=5 // pred_region
        // Predicated region
        $region21: #{tpu_custom_call.1} parent=19 // pred_check
          %p169 = pneg %p75
        $region22: #{tpu_custom_call.1} parent=19 // pred_check_branch
          %171 = sbr.rel (%p169) target = $region24
        $region23: #{tpu_custom_call.1} parent=19 // pred_region
          %s172 = sand.u32 %s65, 1
          %s173 = scalar_lea.sflag [#allocation6], %s172
          %s174 = sand.u32 %s65, 1
          %s175 = smul.addr %s174, 8
          %s176 = scalar_lea.vmem [#allocation5], %s175
          %s178 = ssub.s32 128, 128
          %179 = vsyncadd %s173, %s178
          %s180 = smul.addr %s28, 4
          %s181 = smul.addr %s27, 4
          %s182 = sadd.s32 %s180, %s181
          %s183 = smul.addr %s182, 32
          %s184 = scalar_lea.hbm %s1, %s183
          %s186 = sshll.u32 %s176, 4
          %s187 = int_to_ptr.vmem [resolvable:$true] %s186
          %189 = dma.hbm_to_vmem [thread:$0]  %s184, 128, %s187, %s173
        $region24: #{tpu_custom_call.1} parent=19 // pred_fallthru
          _
      $region20: #{tpu_custom_call.1} parent=5 // pred_fallthru
        _
      %p190 = scmp.le.s32.totalorder 1, %s20
      %p191 = scmp.lt.s32.totalorder %s20, 3
      %p192 = pnand %p190, %p191
      %p193 = pneg %p192
      // Predicated region
      $region25: #{tpu_custom_call.1} parent=5 // pred_check
        _
      $region26: #{tpu_custom_call.1} parent=5 // pred_check_branch
        %195 = sbr.rel (%p192) target = $region28
      $region27: #{tpu_custom_call.1} parent=5 // pred_region
        %s196 = ssub.s32 %s20, 1
        // Predicated region
        $region29: #{tpu_custom_call.1} parent=27 // pred_check
          %p197 = pneg %p53
        $region30: #{tpu_custom_call.1} parent=27 // pred_check_branch
          %199 = sbr.rel (%p197) target = $region32
        $region31: #{tpu_custom_call.1} parent=27 // pred_region
          %200 = dma.done [#allocation3], 32768
        $region32: #{tpu_custom_call.1} parent=27 // pred_fallthru
          _
        %s201 = sand.u32 %s68, 1
        %s202 = scalar_lea.sflag [#allocation6], %s201
        %s203 = sand.u32 %s68, 1
        %s204 = smul.addr %s203, 8
        %s205 = scalar_lea.vmem [#allocation5], %s204
        // Predicated region
        $region33: #{tpu_custom_call.1} parent=27 // pred_check
          %p206 = pneg %p81
        $region34: #{tpu_custom_call.1} parent=27 // pred_check_branch
          %208 = sbr.rel (%p206) target = $region36
        $region35: #{tpu_custom_call.1} parent=27 // pred_region
          %209 = dma.done %s202, 128
        $region36: #{tpu_custom_call.1} parent=27 // pred_fallthru
          _
        %p210 = pneg %p53
        %p211 = pneg %p50
        %s212 = sand.u32 %s68, 1
        %s213 = scalar_lea.sflag [#allocation6], %s212
        %s214 = sand.u32 %s68, 1
        %s215 = smul.addr %s214, 8
        %s216 = scalar_lea.vmem [#allocation5], %s215
        %p217 = pneg %p81
        %p218 = pneg %p78
        %p219 = pneg %p109
        %p220 = pneg %p106
        %s221 = sand.u32 %s96, 1
        %s222 = scalar_lea.sflag [#allocation4], %s221
        %s223 = sand.u32 %s96, 1
        %s224 = smul.addr %s223, 2
        %s225 = scalar_lea.vmem [#allocation7], %s224
        %p226 = pneg %p137
        %p227 = pneg %p134
        %s228 = sand.u32 %s124, 1
        %s229 = scalar_lea.sflag [#allocation9], %s228
        %s230 = sand.u32 %s124, 1
        %s231 = smul.addr %s230, 6
        %s232 = scalar_lea.vmem [#allocation8], %s231
        %v233 = vld [vmem:[%s205] sm:$0xff]
        %v234 = vld [vmem:[#allocation2] sm:$0xff]
        %v235 = vld [vmem:[#allocation2 + $0x8] sm:$0xff]
        %v236 = vld [vmem:[#allocation2 + $0x10] sm:$0xff]
        %v237 = vld [vmem:[#allocation2 + $0x18] sm:$0xff]
        %v238 = vld [vmem:[#allocation2 + $0x20] sm:$0xff]
        %v239 = vld [vmem:[#allocation2 + $0x28] sm:$0xff]
        %v240 = vld [vmem:[#allocation2 + $0x30] sm:$0xff]
        %v241 = vld [vmem:[#allocation2 + $0x38] sm:$0xff]
        %v242 = vld [vmem:[#allocation2 + $0x40] sm:$0xff]
        %v243 = vld [vmem:[#allocation2 + $0x48] sm:$0xff]
        %v244 = vld [vmem:[#allocation2 + $0x50] sm:$0xff]
        %v245 = vld [vmem:[#allocation2 + $0x58] sm:$0xff]
        %v246 = vld [vmem:[#allocation2 + $0x60] sm:$0xff]
        %v247 = vld [vmem:[#allocation2 + $0x68] sm:$0xff]
        %v248 = vld [vmem:[#allocation2 + $0x70] sm:$0xff]
        %v249 = vld [vmem:[#allocation2 + $0x78] sm:$0xff]
        %v250 = vld [vmem:[#allocation2 + $0x80] sm:$0xff]
        %v251 = vld [vmem:[#allocation2 + $0x88] sm:$0xff]
        %v252 = vld [vmem:[#allocation2 + $0x90] sm:$0xff]
        %v253 = vld [vmem:[#allocation2 + $0x98] sm:$0xff]
        %v254 = vld [vmem:[#allocation2 + $0xa0] sm:$0xff]
        %v255 = vld [vmem:[#allocation2 + $0xa8] sm:$0xff]
        %v256 = vld [vmem:[#allocation2 + $0xb0] sm:$0xff]
        %v257 = vld [vmem:[#allocation2 + $0xb8] sm:$0xff]
        %v258 = vld [vmem:[#allocation2 + $0xc0] sm:$0xff]
        %v259 = vld [vmem:[#allocation2 + $0xc8] sm:$0xff]
        %v260 = vld [vmem:[#allocation2 + $0xd0] sm:$0xff]
        %v261 = vld [vmem:[#allocation2 + $0xd8] sm:$0xff]
        %v262 = vld [vmem:[#allocation2 + $0xe0] sm:$0xff]
        %v263 = vld [vmem:[#allocation2 + $0xe8] sm:$0xff]
        %v264 = vld [vmem:[#allocation2 + $0xf0] sm:$0xff]
        %v265 = vld [vmem:[#allocation2 + $0xf8] sm:$0xff]
        %v266 = vld [vmem:[#allocation2 + $0x100] sm:$0xff]
        %v267 = vld [vmem:[#allocation2 + $0x108] sm:$0xff]
        %v268 = vld [vmem:[#allocation2 + $0x110] sm:$0xff]
        %v269 = vld [vmem:[#allocation2 + $0x118] sm:$0xff]
        %v270 = vld [vmem:[#allocation2 + $0x120] sm:$0xff]
        %v271 = vld [vmem:[#allocation2 + $0x128] sm:$0xff]
        %v272 = vld [vmem:[#allocation2 + $0x130] sm:$0xff]
        %v273 = vld [vmem:[#allocation2 + $0x138] sm:$0xff]
        %v274 = vld [vmem:[#allocation2 + $0x140] sm:$0xff]
        %v275 = vld [vmem:[#allocation2 + $0x148] sm:$0xff]
        %v276 = vld [vmem:[#allocation2 + $0x150] sm:$0xff]
        %v277 = vld [vmem:[#allocation2 + $0x158] sm:$0xff]
        %v278 = vld [vmem:[#allocation2 + $0x160] sm:$0xff]
        %v279 = vld [vmem:[#allocation2 + $0x168] sm:$0xff]
        %v280 = vld [vmem:[#allocation2 + $0x170] sm:$0xff]
        %v281 = vld [vmem:[#allocation2 + $0x178] sm:$0xff]
        %v282 = vld [vmem:[#allocation2 + $0x180] sm:$0xff]
        %v283 = vld [vmem:[#allocation2 + $0x188] sm:$0xff]
        %v284 = vld [vmem:[#allocation2 + $0x190] sm:$0xff]
        %v285 = vld [vmem:[#allocation2 + $0x198] sm:$0xff]
        %v286 = vld [vmem:[#allocation2 + $0x1a0] sm:$0xff]
        %v287 = vld [vmem:[#allocation2 + $0x1a8] sm:$0xff]
        %v288 = vld [vmem:[#allocation2 + $0x1b0] sm:$0xff]
        %v289 = vld [vmem:[#allocation2 + $0x1b8] sm:$0xff]
        %v290 = vld [vmem:[#allocation2 + $0x1c0] sm:$0xff]
        %v291 = vld [vmem:[#allocation2 + $0x1c8] sm:$0xff]
        %v292 = vld [vmem:[#allocation2 + $0x1d0] sm:$0xff]
        %v293 = vld [vmem:[#allocation2 + $0x1d8] sm:$0xff]
        %v294 = vld [vmem:[#allocation2 + $0x1e0] sm:$0xff]
        %v295 = vld [vmem:[#allocation2 + $0x1e8] sm:$0xff]
        %v296 = vld [vmem:[#allocation2 + $0x1f0] sm:$0xff]
        %v297 = vld [vmem:[#allocation2 + $0x1f8] sm:$0xff]
        %v298 = vld [vmem:[#allocation2 + $0x200] sm:$0xff]
        %v299 = vld [vmem:[#allocation2 + $0x208] sm:$0xff]
        %v300 = vld [vmem:[#allocation2 + $0x210] sm:$0xff]
        %v301 = vld [vmem:[#allocation2 + $0x218] sm:$0xff]
        %v302 = vld [vmem:[#allocation2 + $0x220] sm:$0xff]
        %v303 = vld [vmem:[#allocation2 + $0x228] sm:$0xff]
        %v304 = vld [vmem:[#allocation2 + $0x230] sm:$0xff]
        %v305 = vld [vmem:[#allocation2 + $0x238] sm:$0xff]
        %v306 = vld [vmem:[#allocation2 + $0x240] sm:$0xff]
        %v307 = vld [vmem:[#allocation2 + $0x248] sm:$0xff]
        %v308 = vld [vmem:[#allocation2 + $0x250] sm:$0xff]
        %v309 = vld [vmem:[#allocation2 + $0x258] sm:$0xff]
        %v310 = vld [vmem:[#allocation2 + $0x260] sm:$0xff]
        %v311 = vld [vmem:[#allocation2 + $0x268] sm:$0xff]
        %v312 = vld [vmem:[#allocation2 + $0x270] sm:$0xff]
        %v313 = vld [vmem:[#allocation2 + $0x278] sm:$0xff]
        %v314 = vld [vmem:[#allocation2 + $0x280] sm:$0xff]
        %v315 = vld [vmem:[#allocation2 + $0x288] sm:$0xff]
        %v316 = vld [vmem:[#allocation2 + $0x290] sm:$0xff]
        %v317 = vld [vmem:[#allocation2 + $0x298] sm:$0xff]
        %v318 = vld [vmem:[#allocation2 + $0x2a0] sm:$0xff]
        %v319 = vld [vmem:[#allocation2 + $0x2a8] sm:$0xff]
        %v320 = vld [vmem:[#allocation2 + $0x2b0] sm:$0xff]
        %v321 = vld [vmem:[#allocation2 + $0x2b8] sm:$0xff]
        %v322 = vld [vmem:[#allocation2 + $0x2c0] sm:$0xff]
        %v323 = vld [vmem:[#allocation2 + $0x2c8] sm:$0xff]
        %v324 = vld [vmem:[#allocation2 + $0x2d0] sm:$0xff]
        %v325 = vld [vmem:[#allocation2 + $0x2d8] sm:$0xff]
        %v326 = vld [vmem:[#allocation2 + $0x2e0] sm:$0xff]
        %v327 = vld [vmem:[#allocation2 + $0x2e8] sm:$0xff]
        %v328 = vld [vmem:[#allocation2 + $0x2f0] sm:$0xff]
        %v329 = vld [vmem:[#allocation2 + $0x2f8] sm:$0xff]
        %v330 = vld [vmem:[#allocation2 + $0x300] sm:$0xff]
        %v331 = vld [vmem:[#allocation2 + $0x308] sm:$0xff]
        %v332 = vld [vmem:[#allocation2 + $0x310] sm:$0xff]
        %v333 = vld [vmem:[#allocation2 + $0x318] sm:$0xff]
        %v334 = vld [vmem:[#allocation2 + $0x320] sm:$0xff]
        %v335 = vld [vmem:[#allocation2 + $0x328] sm:$0xff]
        %v336 = vld [vmem:[#allocation2 + $0x330] sm:$0xff]
        %v337 = vld [vmem:[#allocation2 + $0x338] sm:$0xff]
        %v338 = vld [vmem:[#allocation2 + $0x340] sm:$0xff]
        %v339 = vld [vmem:[#allocation2 + $0x348] sm:$0xff]
        %v340 = vld [vmem:[#allocation2 + $0x350] sm:$0xff]
        %v341 = vld [vmem:[#allocation2 + $0x358] sm:$0xff]
        %v342 = vld [vmem:[#allocation2 + $0x360] sm:$0xff]
        %v343 = vld [vmem:[#allocation2 + $0x368] sm:$0xff]
        %v344 = vld [vmem:[#allocation2 + $0x370] sm:$0xff]
        %v345 = vld [vmem:[#allocation2 + $0x378] sm:$0xff]
        %v346 = vld [vmem:[#allocation2 + $0x380] sm:$0xff]
        %v347 = vld [vmem:[#allocation2 + $0x388] sm:$0xff]
        %v348 = vld [vmem:[#allocation2 + $0x390] sm:$0xff]
        %v349 = vld [vmem:[#allocation2 + $0x398] sm:$0xff]
        %v350 = vld [vmem:[#allocation2 + $0x3a0] sm:$0xff]
        %v351 = vld [vmem:[#allocation2 + $0x3a8] sm:$0xff]
        %v352 = vld [vmem:[#allocation2 + $0x3b0] sm:$0xff]
        %v353 = vld [vmem:[#allocation2 + $0x3b8] sm:$0xff]
        %v354 = vld [vmem:[#allocation2 + $0x3c0] sm:$0xff]
        %v355 = vld [vmem:[#allocation2 + $0x3c8] sm:$0xff]
        %v356 = vld [vmem:[#allocation2 + $0x3d0] sm:$0xff]
        %v357 = vld [vmem:[#allocation2 + $0x3d8] sm:$0xff]
        %v358 = vld [vmem:[#allocation2 + $0x3e0] sm:$0xff]
        %v359 = vld [vmem:[#allocation2 + $0x3e8] sm:$0xff]
        %v360 = vld [vmem:[#allocation2 + $0x3f0] sm:$0xff]
        %v361 = vld [vmem:[#allocation2 + $0x3f8] sm:$0xff]
        %v362 = vld [vmem:[#allocation2 + $0x400] sm:$0xff]
        %v363 = vld [vmem:[#allocation2 + $0x408] sm:$0xff]
        %v364 = vld [vmem:[#allocation2 + $0x410] sm:$0xff]
        %v365 = vld [vmem:[#allocation2 + $0x418] sm:$0xff]
        %v366 = vld [vmem:[#allocation2 + $0x420] sm:$0xff]
        %v367 = vld [vmem:[#allocation2 + $0x428] sm:$0xff]
        %v368 = vld [vmem:[#allocation2 + $0x430] sm:$0xff]
        %v369 = vld [vmem:[#allocation2 + $0x438] sm:$0xff]
        %v370 = vld [vmem:[#allocation2 + $0x440] sm:$0xff]
        %v371 = vld [vmem:[#allocation2 + $0x448] sm:$0xff]
        %v372 = vld [vmem:[#allocation2 + $0x450] sm:$0xff]
        %v373 = vld [vmem:[#allocation2 + $0x458] sm:$0xff]
        %v374 = vld [vmem:[#allocation2 + $0x460] sm:$0xff]
        %v375 = vld [vmem:[#allocation2 + $0x468] sm:$0xff]
        %v376 = vld [vmem:[#allocation2 + $0x470] sm:$0xff]
        %v377 = vld [vmem:[#allocation2 + $0x478] sm:$0xff]
        %v378 = vld [vmem:[#allocation2 + $0x480] sm:$0xff]
        %v379 = vld [vmem:[#allocation2 + $0x488] sm:$0xff]
        %v380 = vld [vmem:[#allocation2 + $0x490] sm:$0xff]
        %v381 = vld [vmem:[#allocation2 + $0x498] sm:$0xff]
        %v382 = vld [vmem:[#allocation2 + $0x4a0] sm:$0xff]
        %v383 = vld [vmem:[#allocation2 + $0x4a8] sm:$0xff]
        %v384 = vld [vmem:[#allocation2 + $0x4b0] sm:$0xff]
        %v385 = vld [vmem:[#allocation2 + $0x4b8] sm:$0xff]
        %v386 = vld [vmem:[#allocation2 + $0x4c0] sm:$0xff]
        %v387 = vld [vmem:[#allocation2 + $0x4c8] sm:$0xff]
        %v388 = vld [vmem:[#allocation2 + $0x4d0] sm:$0xff]
        %v389 = vld [vmem:[#allocation2 + $0x4d8] sm:$0xff]
        %v390 = vld [vmem:[#allocation2 + $0x4e0] sm:$0xff]
        %v391 = vld [vmem:[#allocation2 + $0x4e8] sm:$0xff]
        %v392 = vld [vmem:[#allocation2 + $0x4f0] sm:$0xff]
        %v393 = vld [vmem:[#allocation2 + $0x4f8] sm:$0xff]
        %v394 = vld [vmem:[#allocation2 + $0x500] sm:$0xff]
        %v395 = vld [vmem:[#allocation2 + $0x508] sm:$0xff]
        %v396 = vld [vmem:[#allocation2 + $0x510] sm:$0xff]
        %v397 = vld [vmem:[#allocation2 + $0x518] sm:$0xff]
        %v398 = vld [vmem:[#allocation2 + $0x520] sm:$0xff]
        %v399 = vld [vmem:[#allocation2 + $0x528] sm:$0xff]
        %v400 = vld [vmem:[#allocation2 + $0x530] sm:$0xff]
        %v401 = vld [vmem:[#allocation2 + $0x538] sm:$0xff]
        %v402 = vld [vmem:[#allocation2 + $0x540] sm:$0xff]
        %v403 = vld [vmem:[#allocation2 + $0x548] sm:$0xff]
        %v404 = vld [vmem:[#allocation2 + $0x550] sm:$0xff]
        %v405 = vld [vmem:[#allocation2 + $0x558] sm:$0xff]
        %v406 = vld [vmem:[#allocation2 + $0x560] sm:$0xff]
        %v407 = vld [vmem:[#allocation2 + $0x568] sm:$0xff]
        %v408 = vld [vmem:[#allocation2 + $0x570] sm:$0xff]
        %v409 = vld [vmem:[#allocation2 + $0x578] sm:$0xff]
        %v410 = vld [vmem:[#allocation2 + $0x580] sm:$0xff]
        %v411 = vld [vmem:[#allocation2 + $0x588] sm:$0xff]
        %v412 = vld [vmem:[#allocation2 + $0x590] sm:$0xff]
        %v413 = vld [vmem:[#allocation2 + $0x598] sm:$0xff]
        %v414 = vld [vmem:[#allocation2 + $0x5a0] sm:$0xff]
        %v415 = vld [vmem:[#allocation2 + $0x5a8] sm:$0xff]
        %v416 = vld [vmem:[#allocation2 + $0x5b0] sm:$0xff]
        %v417 = vld [vmem:[#allocation2 + $0x5b8] sm:$0xff]
        %v418 = vld [vmem:[#allocation2 + $0x5c0] sm:$0xff]
        %v419 = vld [vmem:[#allocation2 + $0x5c8] sm:$0xff]
        %v420 = vld [vmem:[#allocation2 + $0x5d0] sm:$0xff]
        %v421 = vld [vmem:[#allocation2 + $0x5d8] sm:$0xff]
        %v422 = vld [vmem:[#allocation2 + $0x5e0] sm:$0xff]
        %v423 = vld [vmem:[#allocation2 + $0x5e8] sm:$0xff]
        %v424 = vld [vmem:[#allocation2 + $0x5f0] sm:$0xff]
        %v425 = vld [vmem:[#allocation2 + $0x5f8] sm:$0xff]
        %v426 = vld [vmem:[#allocation2 + $0x600] sm:$0xff]
        %v427 = vld [vmem:[#allocation2 + $0x608] sm:$0xff]
        %v428 = vld [vmem:[#allocation2 + $0x610] sm:$0xff]
        %v429 = vld [vmem:[#allocation2 + $0x618] sm:$0xff]
        %v430 = vld [vmem:[#allocation2 + $0x620] sm:$0xff]
        %v431 = vld [vmem:[#allocation2 + $0x628] sm:$0xff]
        %v432 = vld [vmem:[#allocation2 + $0x630] sm:$0xff]
        %v433 = vld [vmem:[#allocation2 + $0x638] sm:$0xff]
        %v434 = vld [vmem:[#allocation2 + $0x640] sm:$0xff]
        %v435 = vld [vmem:[#allocation2 + $0x648] sm:$0xff]
        %v436 = vld [vmem:[#allocation2 + $0x650] sm:$0xff]
        %v437 = vld [vmem:[#allocation2 + $0x658] sm:$0xff]
        %v438 = vld [vmem:[#allocation2 + $0x660] sm:$0xff]
        %v439 = vld [vmem:[#allocation2 + $0x668] sm:$0xff]
        %v440 = vld [vmem:[#allocation2 + $0x670] sm:$0xff]
        %v441 = vld [vmem:[#allocation2 + $0x678] sm:$0xff]
        %v442 = vld [vmem:[#allocation2 + $0x680] sm:$0xff]
        %v443 = vld [vmem:[#allocation2 + $0x688] sm:$0xff]
        %v444 = vld [vmem:[#allocation2 + $0x690] sm:$0xff]
        %v445 = vld [vmem:[#allocation2 + $0x698] sm:$0xff]
        %v446 = vld [vmem:[#allocation2 + $0x6a0] sm:$0xff]
        %v447 = vld [vmem:[#allocation2 + $0x6a8] sm:$0xff]
        %v448 = vld [vmem:[#allocation2 + $0x6b0] sm:$0xff]
        %v449 = vld [vmem:[#allocation2 + $0x6b8] sm:$0xff]
        %v450 = vld [vmem:[#allocation2 + $0x6c0] sm:$0xff]
        %v451 = vld [vmem:[#allocation2 + $0x6c8] sm:$0xff]
        %v452 = vld [vmem:[#allocation2 + $0x6d0] sm:$0xff]
        %v453 = vld [vmem:[#allocation2 + $0x6d8] sm:$0xff]
        %v454 = vld [vmem:[#allocation2 + $0x6e0] sm:$0xff]
        %v455 = vld [vmem:[#allocation2 + $0x6e8] sm:$0xff]
        %v456 = vld [vmem:[#allocation2 + $0x6f0] sm:$0xff]
        %v457 = vld [vmem:[#allocation2 + $0x6f8] sm:$0xff]
        %v458 = vld [vmem:[#allocation2 + $0x700] sm:$0xff]
        %v459 = vld [vmem:[#allocation2 + $0x708] sm:$0xff]
        %v460 = vld [vmem:[#allocation2 + $0x710] sm:$0xff]
        %v461 = vld [vmem:[#allocation2 + $0x718] sm:$0xff]
        %v462 = vld [vmem:[#allocation2 + $0x720] sm:$0xff]
        %v463 = vld [vmem:[#allocation2 + $0x728] sm:$0xff]
        %v464 = vld [vmem:[#allocation2 + $0x730] sm:$0xff]
        %v465 = vld [vmem:[#allocation2 + $0x738] sm:$0xff]
        %v466 = vld [vmem:[#allocation2 + $0x740] sm:$0xff]
        %v467 = vld [vmem:[#allocation2 + $0x748] sm:$0xff]
        %v468 = vld [vmem:[#allocation2 + $0x750] sm:$0xff]
        %v469 = vld [vmem:[#allocation2 + $0x758] sm:$0xff]
        %v470 = vld [vmem:[#allocation2 + $0x760] sm:$0xff]
        %v471 = vld [vmem:[#allocation2 + $0x768] sm:$0xff]
        %v472 = vld [vmem:[#allocation2 + $0x770] sm:$0xff]
        %v473 = vld [vmem:[#allocation2 + $0x778] sm:$0xff]
        %v474 = vld [vmem:[#allocation2 + $0x780] sm:$0xff]
        %v475 = vld [vmem:[#allocation2 + $0x788] sm:$0xff]
        %v476 = vld [vmem:[#allocation2 + $0x790] sm:$0xff]
        %v477 = vld [vmem:[#allocation2 + $0x798] sm:$0xff]
        %v478 = vld [vmem:[#allocation2 + $0x7a0] sm:$0xff]
        %v479 = vld [vmem:[#allocation2 + $0x7a8] sm:$0xff]
        %v480 = vld [vmem:[#allocation2 + $0x7b0] sm:$0xff]
        %v481 = vld [vmem:[#allocation2 + $0x7b8] sm:$0xff]
        %v482 = vld [vmem:[#allocation2 + $0x7c0] sm:$0xff]
        %v483 = vld [vmem:[#allocation2 + $0x7c8] sm:$0xff]
        %v484 = vld [vmem:[#allocation2 + $0x7d0] sm:$0xff]
        %v485 = vld [vmem:[#allocation2 + $0x7d8] sm:$0xff]
        %v486 = vld [vmem:[#allocation2 + $0x7e0] sm:$0xff]
        %v487 = vld [vmem:[#allocation2 + $0x7e8] sm:$0xff]
        %v488 = vld [vmem:[#allocation2 + $0x7f0] sm:$0xff]
        %v489 = vld [vmem:[#allocation2 + $0x7f8] sm:$0xff]
        %v491 = vcombine.high %v233, %v233
        %v493 = vunpack.c.l.s4 1983009808
        %v494 = vunpack.c.0.s8 %v493
        %v495 = vlaneseq
        %v496 = vshrl.u32 %v495, 7
        %v497 = vsub.s32 %v494, %v496
        %v498 = vrot.slane %v233, %v497
        %v500 = vunpack.c.l.s4 1983009808
        %v501 = vunpack.c.0.s8 %v500
        %v502 = vlaneseq
        %v503 = vshrl.u32 %v502, 7
        %v504 = vsub.s32 %v501, %v503
        %v505 = vrot.slane %v491, %v504
        %v506 = vcombine.high %v498, %v498
        %v507 = vcombine.high %v505, %v505
        %v512 = vand.u32 %v235, 4294901760
        %513 = vmatprep.subr.mxu0 %v512
        %v514 = vand.u32 %v234, 4294901760
        %515 = vmatpush1.msra.mxu0 %v514
        %v516 = vand.u32 %v239, 4294901760
        %517 = vmatprep.subr.mxu0 %v516
        %v518 = vand.u32 %v238, 4294901760
        %519 = vmatpush1.msra.mxu0 %v518
        %v520 = vand.u32 %v243, 4294901760
        %521 = vmatprep.subr.mxu0 %v520
        %v522 = vand.u32 %v242, 4294901760
        %523 = vmatpush1.msra.mxu0 %v522
        %v524 = vand.u32 %v247, 4294901760
        %525 = vmatprep.subr.mxu0 %v524
        %v526 = vand.u32 %v246, 4294901760
        %527 = vmatpush1.msra.mxu0 %v526
        %v528 = vand.u32 %v251, 4294901760
        %529 = vmatprep.subr.mxu0 %v528
        %v530 = vand.u32 %v250, 4294901760
        %531 = vmatpush1.msra.mxu0 %v530
        %v532 = vand.u32 %v255, 4294901760
        %533 = vmatprep.subr.mxu0 %v532
        %v534 = vand.u32 %v254, 4294901760
        %535 = vmatpush1.msra.mxu0 %v534
        %v536 = vand.u32 %v259, 4294901760
        %537 = vmatprep.subr.mxu0 %v536
        %v538 = vand.u32 %v258, 4294901760
        %539 = vmatpush1.msra.mxu0 %v538
        %v540 = vand.u32 %v263, 4294901760
        %541 = vmatprep.subr.mxu0 %v540
        %v542 = vand.u32 %v262, 4294901760
        %543 = vmatpush1.msra.mxu0 %v542
        %v544 = vand.u32 %v267, 4294901760
        %545 = vmatprep.subr.mxu0 %v544
        %v546 = vand.u32 %v266, 4294901760
        %547 = vmatpush1.msra.mxu0 %v546
        %v548 = vand.u32 %v271, 4294901760
        %549 = vmatprep.subr.mxu0 %v548
        %v550 = vand.u32 %v270, 4294901760
        %551 = vmatpush1.msra.mxu0 %v550
        %v552 = vand.u32 %v275, 4294901760
        %553 = vmatprep.subr.mxu0 %v552
        %v554 = vand.u32 %v274, 4294901760
        %555 = vmatpush1.msra.mxu0 %v554
        %v556 = vand.u32 %v279, 4294901760
        %557 = vmatprep.subr.mxu0 %v556
        %v558 = vand.u32 %v278, 4294901760
        %559 = vmatpush1.msra.mxu0 %v558
        %v560 = vand.u32 %v283, 4294901760
        %561 = vmatprep.subr.mxu0 %v560
        %v562 = vand.u32 %v282, 4294901760
        %563 = vmatpush1.msra.mxu0 %v562
        %v564 = vand.u32 %v287, 4294901760
        %565 = vmatprep.subr.mxu0 %v564
        %v566 = vand.u32 %v286, 4294901760
        %567 = vmatpush1.msra.mxu0 %v566
        %v568 = vand.u32 %v291, 4294901760
        %569 = vmatprep.subr.mxu0 %v568
        %v570 = vand.u32 %v290, 4294901760
        %571 = vmatpush1.msra.mxu0 %v570
        %v572 = vand.u32 %v295, 4294901760
        %573 = vmatprep.subr.mxu0 %v572
        %v574 = vand.u32 %v294, 4294901760
        %575 = vmatpush1.msra.mxu0 %v574
        %v576 = vand.u32 %v299, 4294901760
        %577 = vmatprep.subr.mxu0 %v576
        %v578 = vand.u32 %v298, 4294901760
        %579 = vmatpush1.msra.mxu0 %v578
        %v580 = vand.u32 %v303, 4294901760
        %581 = vmatprep.subr.mxu0 %v580
        %v582 = vand.u32 %v302, 4294901760
        %583 = vmatpush1.msra.mxu0 %v582
        %v584 = vand.u32 %v307, 4294901760
        %585 = vmatprep.subr.mxu0 %v584
        %v586 = vand.u32 %v306, 4294901760
        %587 = vmatpush1.msra.mxu0 %v586
        %v588 = vand.u32 %v311, 4294901760
        %589 = vmatprep.subr.mxu0 %v588
        %v590 = vand.u32 %v310, 4294901760
        %591 = vmatpush1.msra.mxu0 %v590
        %v592 = vand.u32 %v315, 4294901760
        %593 = vmatprep.subr.mxu0 %v592
        %v594 = vand.u32 %v314, 4294901760
        %595 = vmatpush1.msra.mxu0 %v594
        %v596 = vand.u32 %v319, 4294901760
        %597 = vmatprep.subr.mxu0 %v596
        %v598 = vand.u32 %v318, 4294901760
        %599 = vmatpush1.msra.mxu0 %v598
        %v600 = vand.u32 %v323, 4294901760
        %601 = vmatprep.subr.mxu0 %v600
        %v602 = vand.u32 %v322, 4294901760
        %603 = vmatpush1.msra.mxu0 %v602
        %v604 = vand.u32 %v327, 4294901760
        %605 = vmatprep.subr.mxu0 %v604
        %v606 = vand.u32 %v326, 4294901760
        %607 = vmatpush1.msra.mxu0 %v606
        %v608 = vand.u32 %v331, 4294901760
        %609 = vmatprep.subr.mxu0 %v608
        %v610 = vand.u32 %v330, 4294901760
        %611 = vmatpush1.msra.mxu0 %v610
        %v612 = vand.u32 %v335, 4294901760
        %613 = vmatprep.subr.mxu0 %v612
        %v614 = vand.u32 %v334, 4294901760
        %615 = vmatpush1.msra.mxu0 %v614
        %v616 = vand.u32 %v339, 4294901760
        %617 = vmatprep.subr.mxu0 %v616
        %v618 = vand.u32 %v338, 4294901760
        %619 = vmatpush1.msra.mxu0 %v618
        %v620 = vand.u32 %v343, 4294901760
        %621 = vmatprep.subr.mxu0 %v620
        %v622 = vand.u32 %v342, 4294901760
        %623 = vmatpush1.msra.mxu0 %v622
        %v624 = vand.u32 %v347, 4294901760
        %625 = vmatprep.subr.mxu0 %v624
        %v626 = vand.u32 %v346, 4294901760
        %627 = vmatpush1.msra.mxu0 %v626
        %v628 = vand.u32 %v351, 4294901760
        %629 = vmatprep.subr.mxu0 %v628
        %v630 = vand.u32 %v350, 4294901760
        %631 = vmatpush1.msra.mxu0 %v630
        %v632 = vand.u32 %v355, 4294901760
        %633 = vmatprep.subr.mxu0 %v632
        %v634 = vand.u32 %v354, 4294901760
        %635 = vmatpush1.msra.mxu0 %v634
        %v636 = vand.u32 %v359, 4294901760
        %637 = vmatprep.subr.mxu0 %v636
        %v638 = vand.u32 %v358, 4294901760
        %639 = vmatpush1.msra.mxu0 %v638
        %v640 = vand.u32 %v506, 4294901760
        %v641 = vsub.f32 %v506, %v640
        %v642 = vand.u32 %v641, 4294901760
        %v643 = vsub.f32 %v641, %v642
        %v644 = vand.u32 %v643, 4294901760
        %645 = vmatprep.mubr.f32.mxu0 %v644
        %v646 = vand.u32 %v498, 4294901760
        %v647 = vsub.f32 %v498, %v646
        %v648 = vand.u32 %v647, 4294901760
        %v649 = vsub.f32 %v647, %v648
        %v650 = vand.u32 %v649, 4294901760
        %651 = vmatmul.mubr.f32.gmra.mrb[0].mxu0 %v650
        %v652 = vpop.f32.mrb[0].mxu0
        %v653 = vadd.f32 0.0, %v652
        %v654 = vpop.f32.mrb[0].mxu0
        %v655 = vadd.f32 0.0, %v654
        %656 = vdwg.mxu0
        %v657 = vand.u32 %v235, 4294901760
        %v658 = vsub.f32 %v235, %v657
        %v659 = vand.u32 %v658, 4294901760
        %v660 = vsub.f32 %v658, %v659
        %v661 = vand.u32 %v660, 4294901760
        %662 = vmatprep.subr.mxu0 %v661
        %v663 = vand.u32 %v234, 4294901760
        %v664 = vsub.f32 %v234, %v663
        %v665 = vand.u32 %v664, 4294901760
        %v666 = vsub.f32 %v664, %v665
        %v667 = vand.u32 %v666, 4294901760
        %668 = vmatpush1.msra.mxu0 %v667
        %v669 = vand.u32 %v239, 4294901760
        %v670 = vsub.f32 %v239, %v669
        %v671 = vand.u32 %v670, 4294901760
        %v672 = vsub.f32 %v670, %v671
        %v673 = vand.u32 %v672, 4294901760
        %674 = vmatprep.subr.mxu0 %v673
        %v675 = vand.u32 %v238, 4294901760
        %v676 = vsub.f32 %v238, %v675
        %v677 = vand.u32 %v676, 4294901760
        %v678 = vsub.f32 %v676, %v677
        %v679 = vand.u32 %v678, 4294901760
        %680 = vmatpush1.msra.mxu0 %v679
        %v681 = vand.u32 %v243, 4294901760
        %v682 = vsub.f32 %v243, %v681
        %v683 = vand.u32 %v682, 4294901760
        %v684 = vsub.f32 %v682, %v683
        %v685 = vand.u32 %v684, 4294901760
        %686 = vmatprep.subr.mxu0 %v685
        %v687 = vand.u32 %v242, 4294901760
        %v688 = vsub.f32 %v242, %v687
        %v689 = vand.u32 %v688, 4294901760
        %v690 = vsub.f32 %v688, %v689
        %v691 = vand.u32 %v690, 4294901760
        %692 = vmatpush1.msra.mxu0 %v691
        %v693 = vand.u32 %v247, 4294901760
        %v694 = vsub.f32 %v247, %v693
        %v695 = vand.u32 %v694, 4294901760
        %v696 = vsub.f32 %v694, %v695
        %v697 = vand.u32 %v696, 4294901760
        %698 = vmatprep.subr.mxu0 %v697
        %v699 = vand.u32 %v246, 4294901760
        %v700 = vsub.f32 %v246, %v699
        %v701 = vand.u32 %v700, 4294901760
        %v702 = vsub.f32 %v700, %v701
        %v703 = vand.u32 %v702, 4294901760
        %704 = vmatpush1.msra.mxu0 %v703
        %v705 = vand.u32 %v251, 4294901760
        %v706 = vsub.f32 %v251, %v705
        %v707 = vand.u32 %v706, 4294901760
        %v708 = vsub.f32 %v706, %v707
        %v709 = vand.u32 %v708, 4294901760
        %710 = vmatprep.subr.mxu0 %v709
        %v711 = vand.u32 %v250, 4294901760
        %v712 = vsub.f32 %v250, %v711
        %v713 = vand.u32 %v712, 4294901760
        %v714 = vsub.f32 %v712, %v713
        %v715 = vand.u32 %v714, 4294901760
        %716 = vmatpush1.msra.mxu0 %v715
        %v717 = vand.u32 %v255, 4294901760
        %v718 = vsub.f32 %v255, %v717
        %v719 = vand.u32 %v718, 4294901760
        %v720 = vsub.f32 %v718, %v719
        %v721 = vand.u32 %v720, 4294901760
        %722 = vmatprep.subr.mxu0 %v721
        %v723 = vand.u32 %v254, 4294901760
        %v724 = vsub.f32 %v254, %v723
        %v725 = vand.u32 %v724, 4294901760
        %v726 = vsub.f32 %v724, %v725
        %v727 = vand.u32 %v726, 4294901760
        %728 = vmatpush1.msra.mxu0 %v727
        %v729 = vand.u32 %v259, 4294901760
        %v730 = vsub.f32 %v259, %v729
        %v731 = vand.u32 %v730, 4294901760
        %v732 = vsub.f32 %v730, %v731
        %v733 = vand.u32 %v732, 4294901760
        %734 = vmatprep.subr.mxu0 %v733
        %v735 = vand.u32 %v258, 4294901760
        %v736 = vsub.f32 %v258, %v735
        %v737 = vand.u32 %v736, 4294901760
        %v738 = vsub.f32 %v736, %v737
        %v739 = vand.u32 %v738, 4294901760
        %740 = vmatpush1.msra.mxu0 %v739
        %v741 = vand.u32 %v263, 4294901760
        %v742 = vsub.f32 %v263, %v741
        %v743 = vand.u32 %v742, 4294901760
        %v744 = vsub.f32 %v742, %v743
        %v745 = vand.u32 %v744, 4294901760
        %746 = vmatprep.subr.mxu0 %v745
        %v747 = vand.u32 %v262, 4294901760
        %v748 = vsub.f32 %v262, %v747
        %v749 = vand.u32 %v748, 4294901760
        %v750 = vsub.f32 %v748, %v749
        %v751 = vand.u32 %v750, 4294901760
        %752 = vmatpush1.msra.mxu0 %v751
        %v753 = vand.u32 %v267, 4294901760
        %v754 = vsub.f32 %v267, %v753
        %v755 = vand.u32 %v754, 4294901760
        %v756 = vsub.f32 %v754, %v755
        %v757 = vand.u32 %v756, 4294901760
        %758 = vmatprep.subr.mxu0 %v757
        %v759 = vand.u32 %v266, 4294901760
        %v760 = vsub.f32 %v266, %v759
        %v761 = vand.u32 %v760, 4294901760
        %v762 = vsub.f32 %v760, %v761
        %v763 = vand.u32 %v762, 4294901760
        %764 = vmatpush1.msra.mxu0 %v763
        %v765 = vand.u32 %v271, 4294901760
        %v766 = vsub.f32 %v271, %v765
        %v767 = vand.u32 %v766, 4294901760
        %v768 = vsub.f32 %v766, %v767
        %v769 = vand.u32 %v768, 4294901760
        %770 = vmatprep.subr.mxu0 %v769
        %v771 = vand.u32 %v270, 4294901760
        %v772 = vsub.f32 %v270, %v771
        %v773 = vand.u32 %v772, 4294901760
        %v774 = vsub.f32 %v772, %v773
        %v775 = vand.u32 %v774, 4294901760
        %776 = vmatpush1.msra.mxu0 %v775
        %v777 = vand.u32 %v275, 4294901760
        %v778 = vsub.f32 %v275, %v777
        %v779 = vand.u32 %v778, 4294901760
        %v780 = vsub.f32 %v778, %v779
        %v781 = vand.u32 %v780, 4294901760
        %782 = vmatprep.subr.mxu0 %v781
        %v783 = vand.u32 %v274, 4294901760
        %v784 = vsub.f32 %v274, %v783
        %v785 = vand.u32 %v784, 4294901760
        %v786 = vsub.f32 %v784, %v785
        %v787 = vand.u32 %v786, 4294901760
        %788 = vmatpush1.msra.mxu0 %v787
        %v789 = vand.u32 %v279, 4294901760
        %v790 = vsub.f32 %v279, %v789
        %v791 = vand.u32 %v790, 4294901760
        %v792 = vsub.f32 %v790, %v791
        %v793 = vand.u32 %v792, 4294901760
        %794 = vmatprep.subr.mxu0 %v793
        %v795 = vand.u32 %v278, 4294901760
        %v796 = vsub.f32 %v278, %v795
        %v797 = vand.u32 %v796, 4294901760
        %v798 = vsub.f32 %v796, %v797
        %v799 = vand.u32 %v798, 4294901760
        %800 = vmatpush1.msra.mxu0 %v799
        %v801 = vand.u32 %v283, 4294901760
        %v802 = vsub.f32 %v283, %v801
        %v803 = vand.u32 %v802, 4294901760
        %v804 = vsub.f32 %v802, %v803
        %v805 = vand.u32 %v804, 4294901760
        %806 = vmatprep.subr.mxu0 %v805
        %v807 = vand.u32 %v282, 4294901760
        %v808 = vsub.f32 %v282, %v807
        %v809 = vand.u32 %v808, 4294901760
        %v810 = vsub.f32 %v808, %v809
        %v811 = vand.u32 %v810, 4294901760
        %812 = vmatpush1.msra.mxu0 %v811
        %v813 = vand.u32 %v287, 4294901760
        %v814 = vsub.f32 %v287, %v813
        %v815 = vand.u32 %v814, 4294901760
        %v816 = vsub.f32 %v814, %v815
        %v817 = vand.u32 %v816, 4294901760
        %818 = vmatprep.subr.mxu0 %v817
        %v819 = vand.u32 %v286, 4294901760
        %v820 = vsub.f32 %v286, %v819
        %v821 = vand.u32 %v820, 4294901760
        %v822 = vsub.f32 %v820, %v821
        %v823 = vand.u32 %v822, 4294901760
        %824 = vmatpush1.msra.mxu0 %v823
        %v825 = vand.u32 %v291, 4294901760
        %v826 = vsub.f32 %v291, %v825
        %v827 = vand.u32 %v826, 4294901760
        %v828 = vsub.f32 %v826, %v827
        %v829 = vand.u32 %v828, 4294901760
        %830 = vmatprep.subr.mxu0 %v829
        %v831 = vand.u32 %v290, 4294901760
        %v832 = vsub.f32 %v290, %v831
        %v833 = vand.u32 %v832, 4294901760
        %v834 = vsub.f32 %v832, %v833
        %v835 = vand.u32 %v834, 4294901760
        %836 = vmatpush1.msra.mxu0 %v835
        %v837 = vand.u32 %v295, 4294901760
        %v838 = vsub.f32 %v295, %v837
        %v839 = vand.u32 %v838, 4294901760
        %v840 = vsub.f32 %v838, %v839
        %v841 = vand.u32 %v840, 4294901760
        %842 = vmatprep.subr.mxu0 %v841
        %v843 = vand.u32 %v294, 4294901760
        %v844 = vsub.f32 %v294, %v843
        %v845 = vand.u32 %v844, 4294901760
        %v846 = vsub.f32 %v844, %v845
        %v847 = vand.u32 %v846, 4294901760
        %848 = vmatpush1.msra.mxu0 %v847
        %v849 = vand.u32 %v299, 4294901760
        %v850 = vsub.f32 %v299, %v849
        %v851 = vand.u32 %v850, 4294901760
        %v852 = vsub.f32 %v850, %v851
        %v853 = vand.u32 %v852, 4294901760
        %854 = vmatprep.subr.mxu0 %v853
        %v855 = vand.u32 %v298, 4294901760
        %v856 = vsub.f32 %v298, %v855
        %v857 = vand.u32 %v856, 4294901760
        %v858 = vsub.f32 %v856, %v857
        %v859 = vand.u32 %v858, 4294901760
        %860 = vmatpush1.msra.mxu0 %v859
        %v861 = vand.u32 %v303, 4294901760
        %v862 = vsub.f32 %v303, %v861
        %v863 = vand.u32 %v862, 4294901760
        %v864 = vsub.f32 %v862, %v863
        %v865 = vand.u32 %v864, 4294901760
        %866 = vmatprep.subr.mxu0 %v865
        %v867 = vand.u32 %v302, 4294901760
        %v868 = vsub.f32 %v302, %v867
        %v869 = vand.u32 %v868, 4294901760
        %v870 = vsub.f32 %v868, %v869
        %v871 = vand.u32 %v870, 4294901760
        %872 = vmatpush1.msra.mxu0 %v871
        %v873 = vand.u32 %v307, 4294901760
        %v874 = vsub.f32 %v307, %v873
        %v875 = vand.u32 %v874, 4294901760
        %v876 = vsub.f32 %v874, %v875
        %v877 = vand.u32 %v876, 4294901760
        %878 = vmatprep.subr.mxu0 %v877
        %v879 = vand.u32 %v306, 4294901760
        %v880 = vsub.f32 %v306, %v879
        %v881 = vand.u32 %v880, 4294901760
        %v882 = vsub.f32 %v880, %v881
        %v883 = vand.u32 %v882, 4294901760
        %884 = vmatpush1.msra.mxu0 %v883
        %v885 = vand.u32 %v311, 4294901760
        %v886 = vsub.f32 %v311, %v885
        %v887 = vand.u32 %v886, 4294901760
        %v888 = vsub.f32 %v886, %v887
        %v889 = vand.u32 %v888, 4294901760
        %890 = vmatprep.subr.mxu0 %v889
        %v891 = vand.u32 %v310, 4294901760
        %v892 = vsub.f32 %v310, %v891
        %v893 = vand.u32 %v892, 4294901760
        %v894 = vsub.f32 %v892, %v893
        %v895 = vand.u32 %v894, 4294901760
        %896 = vmatpush1.msra.mxu0 %v895
        %v897 = vand.u32 %v315, 4294901760
        %v898 = vsub.f32 %v315, %v897
        %v899 = vand.u32 %v898, 4294901760
        %v900 = vsub.f32 %v898, %v899
        %v901 = vand.u32 %v900, 4294901760
        %902 = vmatprep.subr.mxu0 %v901
        %v903 = vand.u32 %v314, 4294901760
        %v904 = vsub.f32 %v314, %v903
        %v905 = vand.u32 %v904, 4294901760
        %v906 = vsub.f32 %v904, %v905
        %v907 = vand.u32 %v906, 4294901760
        %908 = vmatpush1.msra.mxu0 %v907
        %v909 = vand.u32 %v319, 4294901760
        %v910 = vsub.f32 %v319, %v909
        %v911 = vand.u32 %v910, 4294901760
        %v912 = vsub.f32 %v910, %v911
        %v913 = vand.u32 %v912, 4294901760
        %914 = vmatprep.subr.mxu0 %v913
        %v915 = vand.u32 %v318, 4294901760
        %v916 = vsub.f32 %v318, %v915
        %v917 = vand.u32 %v916, 4294901760
        %v918 = vsub.f32 %v916, %v917
        %v919 = vand.u32 %v918, 4294901760
        %920 = vmatpush1.msra.mxu0 %v919
        %v921 = vand.u32 %v323, 4294901760
        %v922 = vsub.f32 %v323, %v921
        %v923 = vand.u32 %v922, 4294901760
        %v924 = vsub.f32 %v922, %v923
        %v925 = vand.u32 %v924, 4294901760
        %926 = vmatprep.subr.mxu0 %v925
        %v927 = vand.u32 %v322, 4294901760
        %v928 = vsub.f32 %v322, %v927
        %v929 = vand.u32 %v928, 4294901760
        %v930 = vsub.f32 %v928, %v929
        %v931 = vand.u32 %v930, 4294901760
        %932 = vmatpush1.msra.mxu0 %v931
        %v933 = vand.u32 %v327, 4294901760
        %v934 = vsub.f32 %v327, %v933
        %v935 = vand.u32 %v934, 4294901760
        %v936 = vsub.f32 %v934, %v935
        %v937 = vand.u32 %v936, 4294901760
        %938 = vmatprep.subr.mxu0 %v937
        %v939 = vand.u32 %v326, 4294901760
        %v940 = vsub.f32 %v326, %v939
        %v941 = vand.u32 %v940, 4294901760
        %v942 = vsub.f32 %v940, %v941
        %v943 = vand.u32 %v942, 4294901760
        %944 = vmatpush1.msra.mxu0 %v943
        %v945 = vand.u32 %v331, 4294901760
        %v946 = vsub.f32 %v331, %v945
        %v947 = vand.u32 %v946, 4294901760
        %v948 = vsub.f32 %v946, %v947
        %v949 = vand.u32 %v948, 4294901760
        %950 = vmatprep.subr.mxu0 %v949
        %v951 = vand.u32 %v330, 4294901760
        %v952 = vsub.f32 %v330, %v951
        %v953 = vand.u32 %v952, 4294901760
        %v954 = vsub.f32 %v952, %v953
        %v955 = vand.u32 %v954, 4294901760
        %956 = vmatpush1.msra.mxu0 %v955
        %v957 = vand.u32 %v335, 4294901760
        %v958 = vsub.f32 %v335, %v957
        %v959 = vand.u32 %v958, 4294901760
        %v960 = vsub.f32 %v958, %v959
        %v961 = vand.u32 %v960, 4294901760
        %962 = vmatprep.subr.mxu0 %v961
        %v963 = vand.u32 %v334, 4294901760
        %v964 = vsub.f32 %v334, %v963
        %v965 = vand.u32 %v964, 4294901760
        %v966 = vsub.f32 %v964, %v965
        %v967 = vand.u32 %v966, 4294901760
        %968 = vmatpush1.msra.mxu0 %v967
        %v969 = vand.u32 %v339, 4294901760
        %v970 = vsub.f32 %v339, %v969
        %v971 = vand.u32 %v970, 4294901760
        %v972 = vsub.f32 %v970, %v971
        %v973 = vand.u32 %v972, 4294901760
        %974 = vmatprep.subr.mxu0 %v973
        %v975 = vand.u32 %v338, 4294901760
        %v976 = vsub.f32 %v338, %v975
        %v977 = vand.u32 %v976, 4294901760
        %v978 = vsub.f32 %v976, %v977
        %v979 = vand.u32 %v978, 4294901760
        %980 = vmatpush1.msra.mxu0 %v979
        %v981 = vand.u32 %v343, 4294901760
        %v982 = vsub.f32 %v343, %v981
        %v983 = vand.u32 %v982, 4294901760
        %v984 = vsub.f32 %v982, %v983
        %v985 = vand.u32 %v984, 4294901760
        %986 = vmatprep.subr.mxu0 %v985
        %v987 = vand.u32 %v342, 4294901760
        %v988 = vsub.f32 %v342, %v987
        %v989 = vand.u32 %v988, 4294901760
        %v990 = vsub.f32 %v988, %v989
        %v991 = vand.u32 %v990, 4294901760
        %992 = vmatpush1.msra.mxu0 %v991
        %v993 = vand.u32 %v347, 4294901760
        %v994 = vsub.f32 %v347, %v993
        %v995 = vand.u32 %v994, 4294901760
        %v996 = vsub.f32 %v994, %v995
        %v997 = vand.u32 %v996, 4294901760
        %998 = vmatprep.subr.mxu0 %v997
        %v999 = vand.u32 %v346, 4294901760
        %v1000 = vsub.f32 %v346, %v999
        %v1001 = vand.u32 %v1000, 4294901760
        %v1002 = vsub.f32 %v1000, %v1001
        %v1003 = vand.u32 %v1002, 4294901760
        %1004 = vmatpush1.msra.mxu0 %v1003
        %v1005 = vand.u32 %v351, 4294901760
        %v1006 = vsub.f32 %v351, %v1005
        %v1007 = vand.u32 %v1006, 4294901760
        %v1008 = vsub.f32 %v1006, %v1007
        %v1009 = vand.u32 %v1008, 4294901760
        %1010 = vmatprep.subr.mxu0 %v1009
        %v1011 = vand.u32 %v350, 4294901760
        %v1012 = vsub.f32 %v350, %v1011
        %v1013 = vand.u32 %v1012, 4294901760
        %v1014 = vsub.f32 %v1012, %v1013
        %v1015 = vand.u32 %v1014, 4294901760
        %1016 = vmatpush1.msra.mxu0 %v1015
        %v1017 = vand.u32 %v355, 4294901760
        %v1018 = vsub.f32 %v355, %v1017
        %v1019 = vand.u32 %v1018, 4294901760
        %v1020 = vsub.f32 %v1018, %v1019
        %v1021 = vand.u32 %v1020, 4294901760
        %1022 = vmatprep.subr.mxu0 %v1021
        %v1023 = vand.u32 %v354, 4294901760
        %v1024 = vsub.f32 %v354, %v1023
        %v1025 = vand.u32 %v1024, 4294901760
        %v1026 = vsub.f32 %v1024, %v1025
        %v1027 = vand.u32 %v1026, 4294901760
        %1028 = vmatpush1.msra.mxu0 %v1027
        %v1029 = vand.u32 %v359, 4294901760
        %v1030 = vsub.f32 %v359, %v1029
        %v1031 = vand.u32 %v1030, 4294901760
        %v1032 = vsub.f32 %v1030, %v1031
        %v1033 = vand.u32 %v1032, 4294901760
        %1034 = vmatprep.subr.mxu0 %v1033
        %v1035 = vand.u32 %v358, 4294901760
        %v1036 = vsub.f32 %v358, %v1035
        %v1037 = vand.u32 %v1036, 4294901760
        %v1038 = vsub.f32 %v1036, %v1037
        %v1039 = vand.u32 %v1038, 4294901760
        %1040 = vmatpush1.msra.mxu0 %v1039
        %v1041 = vand.u32 %v506, 4294901760
        %1042 = vmatprep.mubr.f32.mxu0 %v1041
        %v1043 = vand.u32 %v498, 4294901760
        %1044 = vmatmul.mubr.f32.gmra.mrb[0].mxu0 %v1043
        %v1045 = vpop.f32.mrb[0].mxu0
        %v1046 = vadd.f32 %v653, %v1045
        %v1047 = vpop.f32.mrb[0].mxu0
        %v1048 = vadd.f32 %v655, %v1047
        %1049 = vdwg.mxu0
        %v1050 = vand.u32 %v235, 4294901760
        %v1051 = vsub.f32 %v235, %v1050
        %1052 = vmatprep.subr.mxu0 %v1051
        %v1053 = vand.u32 %v234, 4294901760
        %v1054 = vsub.f32 %v234, %v1053
        %1055 = vmatpush1.msra.mxu0 %v1054
        %v1056 = vand.u32 %v239, 4294901760
        %v1057 = vsub.f32 %v239, %v1056
        %1058 = vmatprep.subr.mxu0 %v1057
        %v1059 = vand.u32 %v238, 4294901760
        %v1060 = vsub.f32 %v238, %v1059
        %1061 = vmatpush1.msra.mxu0 %v1060
        %v1062 = vand.u32 %v243, 4294901760
        %v1063 = vsub.f32 %v243, %v1062
        %1064 = vmatprep.subr.mxu0 %v1063
        %v1065 = vand.u32 %v242, 4294901760
        %v1066 = vsub.f32 %v242, %v1065
        %1067 = vmatpush1.msra.mxu0 %v1066
        %v1068 = vand.u32 %v247, 4294901760
        %v1069 = vsub.f32 %v247, %v1068
        %1070 = vmatprep.subr.mxu0 %v1069
        %v1071 = vand.u32 %v246, 4294901760
        %v1072 = vsub.f32 %v246, %v1071
        %1073 = vmatpush1.msra.mxu0 %v1072
        %v1074 = vand.u32 %v251, 4294901760
        %v1075 = vsub.f32 %v251, %v1074
        %1076 = vmatprep.subr.mxu0 %v1075
        %v1077 = vand.u32 %v250, 4294901760
        %v1078 = vsub.f32 %v250, %v1077
        %1079 = vmatpush1.msra.mxu0 %v1078
        %v1080 = vand.u32 %v255, 4294901760
        %v1081 = vsub.f32 %v255, %v1080
        %1082 = vmatprep.subr.mxu0 %v1081
        %v1083 = vand.u32 %v254, 4294901760
        %v1084 = vsub.f32 %v254, %v1083
        %1085 = vmatpush1.msra.mxu0 %v1084
        %v1086 = vand.u32 %v259, 4294901760
        %v1087 = vsub.f32 %v259, %v1086
        %1088 = vmatprep.subr.mxu0 %v1087
        %v1089 = vand.u32 %v258, 4294901760
        %v1090 = vsub.f32 %v258, %v1089
        %1091 = vmatpush1.msra.mxu0 %v1090
        %v1092 = vand.u32 %v263, 4294901760
        %v1093 = vsub.f32 %v263, %v1092
        %1094 = vmatprep.subr.mxu0 %v1093
        %v1095 = vand.u32 %v262, 4294901760
        %v1096 = vsub.f32 %v262, %v1095
        %1097 = vmatpush1.msra.mxu0 %v1096
        %v1098 = vand.u32 %v267, 4294901760
        %v1099 = vsub.f32 %v267, %v1098
        %1100 = vmatprep.subr.mxu0 %v1099
        %v1101 = vand.u32 %v266, 4294901760
        %v1102 = vsub.f32 %v266, %v1101
        %1103 = vmatpush1.msra.mxu0 %v1102
        %v1104 = vand.u32 %v271, 4294901760
        %v1105 = vsub.f32 %v271, %v1104
        %1106 = vmatprep.subr.mxu0 %v1105
        %v1107 = vand.u32 %v270, 4294901760
        %v1108 = vsub.f32 %v270, %v1107
        %1109 = vmatpush1.msra.mxu0 %v1108
        %v1110 = vand.u32 %v275, 4294901760
        %v1111 = vsub.f32 %v275, %v1110
        %1112 = vmatprep.subr.mxu0 %v1111
        %v1113 = vand.u32 %v274, 4294901760
        %v1114 = vsub.f32 %v274, %v1113
        %1115 = vmatpush1.msra.mxu0 %v1114
        %v1116 = vand.u32 %v279, 4294901760
        %v1117 = vsub.f32 %v279, %v1116
        %1118 = vmatprep.subr.mxu0 %v1117
        %v1119 = vand.u32 %v278, 4294901760
        %v1120 = vsub.f32 %v278, %v1119
        %1121 = vmatpush1.msra.mxu0 %v1120
        %v1122 = vand.u32 %v283, 4294901760
        %v1123 = vsub.f32 %v283, %v1122
        %1124 = vmatprep.subr.mxu0 %v1123
        %v1125 = vand.u32 %v282, 4294901760
        %v1126 = vsub.f32 %v282, %v1125
        %1127 = vmatpush1.msra.mxu0 %v1126
        %v1128 = vand.u32 %v287, 4294901760
        %v1129 = vsub.f32 %v287, %v1128
        %1130 = vmatprep.subr.mxu0 %v1129
        %v1131 = vand.u32 %v286, 4294901760
        %v1132 = vsub.f32 %v286, %v1131
        %1133 = vmatpush1.msra.mxu0 %v1132
        %v1134 = vand.u32 %v291, 4294901760
        %v1135 = vsub.f32 %v291, %v1134
        %1136 = vmatprep.subr.mxu0 %v1135
        %v1137 = vand.u32 %v290, 4294901760
        %v1138 = vsub.f32 %v290, %v1137
        %1139 = vmatpush1.msra.mxu0 %v1138
        %v1140 = vand.u32 %v295, 4294901760
        %v1141 = vsub.f32 %v295, %v1140
        %1142 = vmatprep.subr.mxu0 %v1141
        %v1143 = vand.u32 %v294, 4294901760
        %v1144 = vsub.f32 %v294, %v1143
        %1145 = vmatpush1.msra.mxu0 %v1144
        %v1146 = vand.u32 %v299, 4294901760
        %v1147 = vsub.f32 %v299, %v1146
        %1148 = vmatprep.subr.mxu0 %v1147
        %v1149 = vand.u32 %v298, 4294901760
        %v1150 = vsub.f32 %v298, %v1149
        %1151 = vmatpush1.msra.mxu0 %v1150
        %v1152 = vand.u32 %v303, 4294901760
        %v1153 = vsub.f32 %v303, %v1152
        %1154 = vmatprep.subr.mxu0 %v1153
        %v1155 = vand.u32 %v302, 4294901760
        %v1156 = vsub.f32 %v302, %v1155
        %1157 = vmatpush1.msra.mxu0 %v1156
        %v1158 = vand.u32 %v307, 4294901760
        %v1159 = vsub.f32 %v307, %v1158
        %1160 = vmatprep.subr.mxu0 %v1159
        %v1161 = vand.u32 %v306, 4294901760
        %v1162 = vsub.f32 %v306, %v1161
        %1163 = vmatpush1.msra.mxu0 %v1162
        %v1164 = vand.u32 %v311, 4294901760
        %v1165 = vsub.f32 %v311, %v1164
        %1166 = vmatprep.subr.mxu0 %v1165
        %v1167 = vand.u32 %v310, 4294901760
        %v1168 = vsub.f32 %v310, %v1167
        %1169 = vmatpush1.msra.mxu0 %v1168
        %v1170 = vand.u32 %v315, 4294901760
        %v1171 = vsub.f32 %v315, %v1170
        %1172 = vmatprep.subr.mxu0 %v1171
        %v1173 = vand.u32 %v314, 4294901760
        %v1174 = vsub.f32 %v314, %v1173
        %1175 = vmatpush1.msra.mxu0 %v1174
        %v1176 = vand.u32 %v319, 4294901760
        %v1177 = vsub.f32 %v319, %v1176
        %1178 = vmatprep.subr.mxu0 %v1177
        %v1179 = vand.u32 %v318, 4294901760
        %v1180 = vsub.f32 %v318, %v1179
        %1181 = vmatpush1.msra.mxu0 %v1180
        %v1182 = vand.u32 %v323, 4294901760
        %v1183 = vsub.f32 %v323, %v1182
        %1184 = vmatprep.subr.mxu0 %v1183
        %v1185 = vand.u32 %v322, 4294901760
        %v1186 = vsub.f32 %v322, %v1185
        %1187 = vmatpush1.msra.mxu0 %v1186
        %v1188 = vand.u32 %v327, 4294901760
        %v1189 = vsub.f32 %v327, %v1188
        %1190 = vmatprep.subr.mxu0 %v1189
        %v1191 = vand.u32 %v326, 4294901760
        %v1192 = vsub.f32 %v326, %v1191
        %1193 = vmatpush1.msra.mxu0 %v1192
        %v1194 = vand.u32 %v331, 4294901760
        %v1195 = vsub.f32 %v331, %v1194
        %1196 = vmatprep.subr.mxu0 %v1195
        %v1197 = vand.u32 %v330, 4294901760
        %v1198 = vsub.f32 %v330, %v1197
        %1199 = vmatpush1.msra.mxu0 %v1198
        %v1200 = vand.u32 %v335, 4294901760
        %v1201 = vsub.f32 %v335, %v1200
        %1202 = vmatprep.subr.mxu0 %v1201
        %v1203 = vand.u32 %v334, 4294901760
        %v1204 = vsub.f32 %v334, %v1203
        %1205 = vmatpush1.msra.mxu0 %v1204
        %v1206 = vand.u32 %v339, 4294901760
        %v1207 = vsub.f32 %v339, %v1206
        %1208 = vmatprep.subr.mxu0 %v1207
        %v1209 = vand.u32 %v338, 4294901760
        %v1210 = vsub.f32 %v338, %v1209
        %1211 = vmatpush1.msra.mxu0 %v1210
        %v1212 = vand.u32 %v343, 4294901760
        %v1213 = vsub.f32 %v343, %v1212
        %1214 = vmatprep.subr.mxu0 %v1213
        %v1215 = vand.u32 %v342, 4294901760
        %v1216 = vsub.f32 %v342, %v1215
        %1217 = vmatpush1.msra.mxu0 %v1216
        %v1218 = vand.u32 %v347, 4294901760
        %v1219 = vsub.f32 %v347, %v1218
        %1220 = vmatprep.subr.mxu0 %v1219
        %v1221 = vand.u32 %v346, 4294901760
        %v1222 = vsub.f32 %v346, %v1221
        %1223 = vmatpush1.msra.mxu0 %v1222
        %v1224 = vand.u32 %v351, 4294901760
        %v1225 = vsub.f32 %v351, %v1224
        %1226 = vmatprep.subr.mxu0 %v1225
        %v1227 = vand.u32 %v350, 4294901760
        %v1228 = vsub.f32 %v350, %v1227
        %1229 = vmatpush1.msra.mxu0 %v1228
        %v1230 = vand.u32 %v355, 4294901760
        %v1231 = vsub.f32 %v355, %v1230
        %1232 = vmatprep.subr.mxu0 %v1231
        %v1233 = vand.u32 %v354, 4294901760
        %v1234 = vsub.f32 %v354, %v1233
        %1235 = vmatpush1.msra.mxu0 %v1234
        %v1236 = vand.u32 %v359, 4294901760
        %v1237 = vsub.f32 %v359, %v1236
        %1238 = vmatprep.subr.mxu0 %v1237
        %v1239 = vand.u32 %v358, 4294901760
        %v1240 = vsub.f32 %v358, %v1239
        %1241 = vmatpush1.msra.mxu0 %v1240
        %v1242 = vand.u32 %v506, 4294901760
        %v1243 = vsub.f32 %v506, %v1242
        %1244 = vmatprep.mubr.f32.mxu0 %v1243
        %v1245 = vand.u32 %v498, 4294901760
        %v1246 = vsub.f32 %v498, %v1245
        %1247 = vmatmul.mubr.f32.gmra.mrb[0].mxu0 %v1246
        %v1248 = vpop.f32.mrb[0].mxu0
        %v1249 = vadd.f32 %v1046, %v1248
        %v1250 = vpop.f32.mrb[0].mxu0
        %v1251 = vadd.f32 %v1048, %v1250
        %1252 = vdwg.mxu0
        %v1253 = vand.u32 %v235, 4294901760
        %1254 = vmatprep.subr.mxu0 %v1253
        %v1255 = vand.u32 %v234, 4294901760
        %1256 = vmatpush1.msra.mxu0 %v1255
        %v1257 = vand.u32 %v239, 4294901760
        %1258 = vmatprep.subr.mxu0 %v1257
        %v1259 = vand.u32 %v238, 4294901760
        %1260 = vmatpush1.msra.mxu0 %v1259
        %v1261 = vand.u32 %v243, 4294901760
        %1262 = vmatprep.subr.mxu0 %v1261
        %v1263 = vand.u32 %v242, 4294901760
        %1264 = vmatpush1.msra.mxu0 %v1263
        %v1265 = vand.u32 %v247, 4294901760
        %1266 = vmatprep.subr.mxu0 %v1265
        %v1267 = vand.u32 %v246, 4294901760
        %1268 = vmatpush1.msra.mxu0 %v1267
        %v1269 = vand.u32 %v251, 4294901760
        %1270 = vmatprep.subr.mxu0 %v1269
        %v1271 = vand.u32 %v250, 4294901760
        %1272 = vmatpush1.msra.mxu0 %v1271
        %v1273 = vand.u32 %v255, 4294901760
        %1274 = vmatprep.subr.mxu0 %v1273
        %v1275 = vand.u32 %v254, 4294901760
        %1276 = vmatpush1.msra.mxu0 %v1275
        %v1277 = vand.u32 %v259, 4294901760
        %1278 = vmatprep.subr.mxu0 %v1277
        %v1279 = vand.u32 %v258, 4294901760
        %1280 = vmatpush1.msra.mxu0 %v1279
        %v1281 = vand.u32 %v263, 4294901760
        %1282 = vmatprep.subr.mxu0 %v1281
        %v1283 = vand.u32 %v262, 4294901760
        %1284 = vmatpush1.msra.mxu0 %v1283
        %v1285 = vand.u32 %v267, 4294901760
        %1286 = vmatprep.subr.mxu0 %v1285
        %v1287 = vand.u32 %v266, 4294901760
        %1288 = vmatpush1.msra.mxu0 %v1287
        %v1289 = vand.u32 %v271, 4294901760
        %1290 = vmatprep.subr.mxu0 %v1289
        %v1291 = vand.u32 %v270, 4294901760
        %1292 = vmatpush1.msra.mxu0 %v1291
        %v1293 = vand.u32 %v275, 4294901760
        %1294 = vmatprep.subr.mxu0 %v1293
        %v1295 = vand.u32 %v274, 4294901760
        %1296 = vmatpush1.msra.mxu0 %v1295
        %v1297 = vand.u32 %v279, 4294901760
        %1298 = vmatprep.subr.mxu0 %v1297
        %v1299 = vand.u32 %v278, 4294901760
        %1300 = vmatpush1.msra.mxu0 %v1299
        %v1301 = vand.u32 %v283, 4294901760
        %1302 = vmatprep.subr.mxu0 %v1301
        %v1303 = vand.u32 %v282, 4294901760
        %1304 = vmatpush1.msra.mxu0 %v1303
        %v1305 = vand.u32 %v287, 4294901760
        %1306 = vmatprep.subr.mxu0 %v1305
        %v1307 = vand.u32 %v286, 4294901760
        %1308 = vmatpush1.msra.mxu0 %v1307
        %v1309 = vand.u32 %v291, 4294901760
        %1310 = vmatprep.subr.mxu0 %v1309
        %v1311 = vand.u32 %v290, 4294901760
        %1312 = vmatpush1.msra.mxu0 %v1311
        %v1313 = vand.u32 %v295, 4294901760
        %1314 = vmatprep.subr.mxu0 %v1313
        %v1315 = vand.u32 %v294, 4294901760
        %1316 = vmatpush1.msra.mxu0 %v1315
        %v1317 = vand.u32 %v299, 4294901760
        %1318 = vmatprep.subr.mxu0 %v1317
        %v1319 = vand.u32 %v298, 4294901760
        %1320 = vmatpush1.msra.mxu0 %v1319
        %v1321 = vand.u32 %v303, 4294901760
        %1322 = vmatprep.subr.mxu0 %v1321
        %v1323 = vand.u32 %v302, 4294901760
        %1324 = vmatpush1.msra.mxu0 %v1323
        %v1325 = vand.u32 %v307, 4294901760
        %1326 = vmatprep.subr.mxu0 %v1325
        %v1327 = vand.u32 %v306, 4294901760
        %1328 = vmatpush1.msra.mxu0 %v1327
        %v1329 = vand.u32 %v311, 4294901760
        %1330 = vmatprep.subr.mxu0 %v1329
        %v1331 = vand.u32 %v310, 4294901760
        %1332 = vmatpush1.msra.mxu0 %v1331
        %v1333 = vand.u32 %v315, 4294901760
        %1334 = vmatprep.subr.mxu0 %v1333
        %v1335 = vand.u32 %v314, 4294901760
        %1336 = vmatpush1.msra.mxu0 %v1335
        %v1337 = vand.u32 %v319, 4294901760
        %1338 = vmatprep.subr.mxu0 %v1337
        %v1339 = vand.u32 %v318, 4294901760
        %1340 = vmatpush1.msra.mxu0 %v1339
        %v1341 = vand.u32 %v323, 4294901760
        %1342 = vmatprep.subr.mxu0 %v1341
        %v1343 = vand.u32 %v322, 4294901760
        %1344 = vmatpush1.msra.mxu0 %v1343
        %v1345 = vand.u32 %v327, 4294901760
        %1346 = vmatprep.subr.mxu0 %v1345
        %v1347 = vand.u32 %v326, 4294901760
        %1348 = vmatpush1.msra.mxu0 %v1347
        %v1349 = vand.u32 %v331, 4294901760
        %1350 = vmatprep.subr.mxu0 %v1349
        %v1351 = vand.u32 %v330, 4294901760
        %1352 = vmatpush1.msra.mxu0 %v1351
        %v1353 = vand.u32 %v335, 4294901760
        %1354 = vmatprep.subr.mxu0 %v1353
        %v1355 = vand.u32 %v334, 4294901760
        %1356 = vmatpush1.msra.mxu0 %v1355
        %v1357 = vand.u32 %v339, 4294901760
        %1358 = vmatprep.subr.mxu0 %v1357
        %v1359 = vand.u32 %v338, 4294901760
        %1360 = vmatpush1.msra.mxu0 %v1359
        %v1361 = vand.u32 %v343, 4294901760
        %1362 = vmatprep.subr.mxu0 %v1361
        %v1363 = vand.u32 %v342, 4294901760
        %1364 = vmatpush1.msra.mxu0 %v1363
        %v1365 = vand.u32 %v347, 4294901760
        %1366 = vmatprep.subr.mxu0 %v1365
        %v1367 = vand.u32 %v346, 4294901760
        %1368 = vmatpush1.msra.mxu0 %v1367
        %v1369 = vand.u32 %v351, 4294901760
        %1370 = vmatprep.subr.mxu0 %v1369
        %v1371 = vand.u32 %v350, 4294901760
        %1372 = vmatpush1.msra.mxu0 %v1371
        %v1373 = vand.u32 %v355, 4294901760
        %1374 = vmatprep.subr.mxu0 %v1373
        %v1375 = vand.u32 %v354, 4294901760
        %1376 = vmatpush1.msra.mxu0 %v1375
        %v1377 = vand.u32 %v359, 4294901760
        %1378 = vmatprep.subr.mxu0 %v1377
        %v1379 = vand.u32 %v358, 4294901760
        %1380 = vmatpush1.msra.mxu0 %v1379
        %v1381 = vand.u32 %v506, 4294901760
        %v1382 = vsub.f32 %v506, %v1381
        %v1383 = vand.u32 %v1382, 4294901760
        %1384 = vmatprep.mubr.f32.mxu0 %v1383
        %v1385 = vand.u32 %v498, 4294901760
        %v1386 = vsub.f32 %v498, %v1385
        %v1387 = vand.u32 %v1386, 4294901760
        %1388 = vmatmul.mubr.f32.gmra.mrb[0].mxu0 %v1387
        %v1389 = vpop.f32.mrb[0].mxu0
        %v1390 = vadd.f32 %v1249, %v1389
        %v1391 = vpop.f32.mrb[0].mxu0
        %v1392 = vadd.f32 %v1251, %v1391
        %1393 = vdwg.mxu0
        %v1394 = vand.u32 %v235, 4294901760
        %v1395 = vsub.f32 %v235, %v1394
        %v1396 = vand.u32 %v1395, 4294901760
        %1397 = vmatprep.subr.mxu0 %v1396
        %v1398 = vand.u32 %v234, 4294901760
        %v1399 = vsub.f32 %v234, %v1398
        %v1400 = vand.u32 %v1399, 4294901760
        %1401 = vmatpush1.msra.mxu0 %v1400
        %v1402 = vand.u32 %v239, 4294901760
        %v1403 = vsub.f32 %v239, %v1402
        %v1404 = vand.u32 %v1403, 4294901760
        %1405 = vmatprep.subr.mxu0 %v1404
        %v1406 = vand.u32 %v238, 4294901760
        %v1407 = vsub.f32 %v238, %v1406
        %v1408 = vand.u32 %v1407, 4294901760
        %1409 = vmatpush1.msra.mxu0 %v1408
        %v1410 = vand.u32 %v243, 4294901760
        %v1411 = vsub.f32 %v243, %v1410
        %v1412 = vand.u32 %v1411, 4294901760
        %1413 = vmatprep.subr.mxu0 %v1412
        %v1414 = vand.u32 %v242, 4294901760
        %v1415 = vsub.f32 %v242, %v1414
        %v1416 = vand.u32 %v1415, 4294901760
        %1417 = vmatpush1.msra.mxu0 %v1416
        %v1418 = vand.u32 %v247, 4294901760
        %v1419 = vsub.f32 %v247, %v1418
        %v1420 = vand.u32 %v1419, 4294901760
        %1421 = vmatprep.subr.mxu0 %v1420
        %v1422 = vand.u32 %v246, 4294901760
        %v1423 = vsub.f32 %v246, %v1422
        %v1424 = vand.u32 %v1423, 4294901760
        %1425 = vmatpush1.msra.mxu0 %v1424
        %v1426 = vand.u32 %v251, 4294901760
        %v1427 = vsub.f32 %v251, %v1426
        %v1428 = vand.u32 %v1427, 4294901760
        %1429 = vmatprep.subr.mxu0 %v1428
        %v1430 = vand.u32 %v250, 4294901760
        %v1431 = vsub.f32 %v250, %v1430
        %v1432 = vand.u32 %v1431, 4294901760
        %1433 = vmatpush1.msra.mxu0 %v1432
        %v1434 = vand.u32 %v255, 4294901760
        %v1435 = vsub.f32 %v255, %v1434
        %v1436 = vand.u32 %v1435, 4294901760
        %1437 = vmatprep.subr.mxu0 %v1436
        %v1438 = vand.u32 %v254, 4294901760
        %v1439 = vsub.f32 %v254, %v1438
        %v1440 = vand.u32 %v1439, 4294901760
        %1441 = vmatpush1.msra.mxu0 %v1440
        %v1442 = vand.u32 %v259, 4294901760
        %v1443 = vsub.f32 %v259, %v1442
        %v1444 = vand.u32 %v1443, 4294901760
        %1445 = vmatprep.subr.mxu0 %v1444
        %v1446 = vand.u32 %v258, 4294901760
        %v1447 = vsub.f32 %v258, %v1446
        %v1448 = vand.u32 %v1447, 4294901760
        %1449 = vmatpush1.msra.mxu0 %v1448
        %v1450 = vand.u32 %v263, 4294901760
        %v1451 = vsub.f32 %v263, %v1450
        %v1452 = vand.u32 %v1451, 4294901760
        %1453 = vmatprep.subr.mxu0 %v1452
        %v1454 = vand.u32 %v262, 4294901760
        %v1455 = vsub.f32 %v262, %v1454
        %v1456 = vand.u32 %v1455, 4294901760
        %1457 = vmatpush1.msra.mxu0 %v1456
        %v1458 = vand.u32 %v267, 4294901760
        %v1459 = vsub.f32 %v267, %v1458
        %v1460 = vand.u32 %v1459, 4294901760
        %1461 = vmatprep.subr.mxu0 %v1460
        %v1462 = vand.u32 %v266, 4294901760
        %v1463 = vsub.f32 %v266, %v1462
        %v1464 = vand.u32 %v1463, 4294901760
        %1465 = vmatpush1.msra.mxu0 %v1464
        %v1466 = vand.u32 %v271, 4294901760
        %v1467 = vsub.f32 %v271, %v1466
        %v1468 = vand.u32 %v1467, 4294901760
        %1469 = vmatprep.subr.mxu0 %v1468
        %v1470 = vand.u32 %v270, 4294901760
        %v1471 = vsub.f32 %v270, %v1470
        %v1472 = vand.u32 %v1471, 4294901760
        %1473 = vmatpush1.msra.mxu0 %v1472
        %v1474 = vand.u32 %v275, 4294901760
        %v1475 = vsub.f32 %v275, %v1474
        %v1476 = vand.u32 %v1475, 4294901760
        %1477 = vmatprep.subr.mxu0 %v1476
        %v1478 = vand.u32 %v274, 4294901760
        %v1479 = vsub.f32 %v274, %v1478
        %v1480 = vand.u32 %v1479, 4294901760
        %1481 = vmatpush1.msra.mxu0 %v1480
        %v1482 = vand.u32 %v279, 4294901760
        %v1483 = vsub.f32 %v279, %v1482
        %v1484 = vand.u32 %v1483, 4294901760
        %1485 = vmatprep.subr.mxu0 %v1484
        %v1486 = vand.u32 %v278, 4294901760
        %v1487 = vsub.f32 %v278, %v1486
        %v1488 = vand.u32 %v1487, 4294901760
        %1489 = vmatpush1.msra.mxu0 %v1488
        %v1490 = vand.u32 %v283, 4294901760
        %v1491 = vsub.f32 %v283, %v1490
        %v1492 = vand.u32 %v1491, 4294901760
        %1493 = vmatprep.subr.mxu0 %v1492
        %v1494 = vand.u32 %v282, 4294901760
        %v1495 = vsub.f32 %v282, %v1494
        %v1496 = vand.u32 %v1495, 4294901760
        %1497 = vmatpush1.msra.mxu0 %v1496
        %v1498 = vand.u32 %v287, 4294901760
        %v1499 = vsub.f32 %v287, %v1498
        %v1500 = vand.u32 %v1499, 4294901760
        %1501 = vmatprep.subr.mxu0 %v1500
        %v1502 = vand.u32 %v286, 4294901760
        %v1503 = vsub.f32 %v286, %v1502
        %v1504 = vand.u32 %v1503, 4294901760
        %1505 = vmatpush1.msra.mxu0 %v1504
        %v1506 = vand.u32 %v291, 4294901760
        %v1507 = vsub.f32 %v291, %v1506
        %v1508 = vand.u32 %v1507, 4294901760
        %1509 = vmatprep.subr.mxu0 %v1508
        %v1510 = vand.u32 %v290, 4294901760
        %v1511 = vsub.f32 %v290, %v1510
        %v1512 = vand.u32 %v1511, 4294901760
        %1513 = vmatpush1.msra.mxu0 %v1512
        %v1514 = vand.u32 %v295, 4294901760
        %v1515 = vsub.f32 %v295, %v1514
        %v1516 = vand.u32 %v1515, 4294901760
        %1517 = vmatprep.subr.mxu0 %v1516
        %v1518 = vand.u32 %v294, 4294901760
        %v1519 = vsub.f32 %v294, %v1518
        %v1520 = vand.u32 %v1519, 4294901760
        %1521 = vmatpush1.msra.mxu0 %v1520
        %v1522 = vand.u32 %v299, 4294901760
        %v1523 = vsub.f32 %v299, %v1522
        %v1524 = vand.u32 %v1523, 4294901760
        %1525 = vmatprep.subr.mxu0 %v1524
        %v1526 = vand.u32 %v298, 4294901760
        %v1527 = vsub.f32 %v298, %v1526
        %v1528 = vand.u32 %v1527, 4294901760
        %1529 = vmatpush1.msra.mxu0 %v1528
        %v1530 = vand.u32 %v303, 4294901760
        %v1531 = vsub.f32 %v303, %v1530
        %v1532 = vand.u32 %v1531, 4294901760
        %1533 = vmatprep.subr.mxu0 %v1532
        %v1534 = vand.u32 %v302, 4294901760
        %v1535 = vsub.f32 %v302, %v1534
        %v1536 = vand.u32 %v1535, 4294901760
        %1537 = vmatpush1.msra.mxu0 %v1536
        %v1538 = vand.u32 %v307, 4294901760
        %v1539 = vsub.f32 %v307, %v1538
        %v1540 = vand.u32 %v1539, 4294901760
        %1541 = vmatprep.subr.mxu0 %v1540
        %v1542 = vand.u32 %v306, 4294901760
        %v1543 = vsub.f32 %v306, %v1542
        %v1544 = vand.u32 %v1543, 4294901760
        %1545 = vmatpush1.msra.mxu0 %v1544
        %v1546 = vand.u32 %v311, 4294901760
        %v1547 = vsub.f32 %v311, %v1546
        %v1548 = vand.u32 %v1547, 4294901760
        %1549 = vmatprep.subr.mxu0 %v1548
        %v1550 = vand.u32 %v310, 4294901760
        %v1551 = vsub.f32 %v310, %v1550
        %v1552 = vand.u32 %v1551, 4294901760
        %1553 = vmatpush1.msra.mxu0 %v1552
        %v1554 = vand.u32 %v315, 4294901760
        %v1555 = vsub.f32 %v315, %v1554
        %v1556 = vand.u32 %v1555, 4294901760
        %1557 = vmatprep.subr.mxu0 %v1556
        %v1558 = vand.u32 %v314, 4294901760
        %v1559 = vsub.f32 %v314, %v1558
        %v1560 = vand.u32 %v1559, 4294901760
        %1561 = vmatpush1.msra.mxu0 %v1560
        %v1562 = vand.u32 %v319, 4294901760
        %v1563 = vsub.f32 %v319, %v1562
        %v1564 = vand.u32 %v1563, 4294901760
        %1565 = vmatprep.subr.mxu0 %v1564
        %v1566 = vand.u32 %v318, 4294901760
        %v1567 = vsub.f32 %v318, %v1566
        %v1568 = vand.u32 %v1567, 4294901760
        %1569 = vmatpush1.msra.mxu0 %v1568
        %v1570 = vand.u32 %v323, 4294901760
        %v1571 = vsub.f32 %v323, %v1570
        %v1572 = vand.u32 %v1571, 4294901760
        %1573 = vmatprep.subr.mxu0 %v1572
        %v1574 = vand.u32 %v322, 4294901760
        %v1575 = vsub.f32 %v322, %v1574
        %v1576 = vand.u32 %v1575, 4294901760
        %1577 = vmatpush1.msra.mxu0 %v1576
        %v1578 = vand.u32 %v327, 4294901760
        %v1579 = vsub.f32 %v327, %v1578
        %v1580 = vand.u32 %v1579, 4294901760
        %1581 = vmatprep.subr.mxu0 %v1580
        %v1582 = vand.u32 %v326, 4294901760
        %v1583 = vsub.f32 %v326, %v1582
        %v1584 = vand.u32 %v1583, 4294901760
        %1585 = vmatpush1.msra.mxu0 %v1584
        %v1586 = vand.u32 %v331, 4294901760
        %v1587 = vsub.f32 %v331, %v1586
        %v1588 = vand.u32 %v1587, 4294901760
        %1589 = vmatprep.subr.mxu0 %v1588
        %v1590 = vand.u32 %v330, 4294901760
        %v1591 = vsub.f32 %v330, %v1590
        %v1592 = vand.u32 %v1591, 4294901760
        %1593 = vmatpush1.msra.mxu0 %v1592
        %v1594 = vand.u32 %v335, 4294901760
        %v1595 = vsub.f32 %v335, %v1594
        %v1596 = vand.u32 %v1595, 4294901760
        %1597 = vmatprep.subr.mxu0 %v1596
        %v1598 = vand.u32 %v334, 4294901760
        %v1599 = vsub.f32 %v334, %v1598
        %v1600 = vand.u32 %v1599, 4294901760
        %1601 = vmatpush1.msra.mxu0 %v1600
        %v1602 = vand.u32 %v339, 4294901760
        %v1603 = vsub.f32 %v339, %v1602
        %v1604 = vand.u32 %v1603, 4294901760
        %1605 = vmatprep.subr.mxu0 %v1604
        %v1606 = vand.u32 %v338, 4294901760
        %v1607 = vsub.f32 %v338, %v1606
        %v1608 = vand.u32 %v1607, 4294901760
        %1609 = vmatpush1.msra.mxu0 %v1608
        %v1610 = vand.u32 %v343, 4294901760
        %v1611 = vsub.f32 %v343, %v1610
        %v1612 = vand.u32 %v1611, 4294901760
        %1613 = vmatprep.subr.mxu0 %v1612
        %v1614 = vand.u32 %v342, 4294901760
        %v1615 = vsub.f32 %v342, %v1614
        %v1616 = vand.u32 %v1615, 4294901760
        %1617 = vmatpush1.msra.mxu0 %v1616
        %v1618 = vand.u32 %v347, 4294901760
        %v1619 = vsub.f32 %v347, %v1618
        %v1620 = vand.u32 %v1619, 4294901760
        %1621 = vmatprep.subr.mxu0 %v1620
        %v1622 = vand.u32 %v346, 4294901760
        %v1623 = vsub.f32 %v346, %v1622
        %v1624 = vand.u32 %v1623, 4294901760
        %1625 = vmatpush1.msra.mxu0 %v1624
        %v1626 = vand.u32 %v351, 4294901760
        %v1627 = vsub.f32 %v351, %v1626
        %v1628 = vand.u32 %v1627, 4294901760
        %1629 = vmatprep.subr.mxu0 %v1628
        %v1630 = vand.u32 %v350, 4294901760
        %v1631 = vsub.f32 %v350, %v1630
        %v1632 = vand.u32 %v1631, 4294901760
        %1633 = vmatpush1.msra.mxu0 %v1632
        %v1634 = vand.u32 %v355, 4294901760
        %v1635 = vsub.f32 %v355, %v1634
        %v1636 = vand.u32 %v1635, 4294901760
        %1637 = vmatprep.subr.mxu0 %v1636
        %v1638 = vand.u32 %v354, 4294901760
        %v1639 = vsub.f32 %v354, %v1638
        %v1640 = vand.u32 %v1639, 4294901760
        %1641 = vmatpush1.msra.mxu0 %v1640
        %v1642 = vand.u32 %v359, 4294901760
        %v1643 = vsub.f32 %v359, %v1642
        %v1644 = vand.u32 %v1643, 4294901760
        %1645 = vmatprep.subr.mxu0 %v1644
        %v1646 = vand.u32 %v358, 4294901760
        %v1647 = vsub.f32 %v358, %v1646
        %v1648 = vand.u32 %v1647, 4294901760
        %1649 = vmatpush1.msra.mxu0 %v1648
        %v1650 = vand.u32 %v506, 4294901760
        %1651 = vmatprep.mubr.f32.mxu0 %v1650
        %v1652 = vand.u32 %v498, 4294901760
        %1653 = vmatmul.mubr.f32.gmra.mrb[0].mxu0 %v1652
        %v1654 = vpop.f32.mrb[0].mxu0
        %v1655 = vadd.f32 %v1390, %v1654
        %v1656 = vpop.f32.mrb[0].mxu0
        %v1657 = vadd.f32 %v1392, %v1656
        %1658 = vdwg.mxu0
        %v1659 = vand.u32 %v235, 4294901760
        %1660 = vmatprep.subr.mxu0 %v1659
        %v1661 = vand.u32 %v234, 4294901760
        %1662 = vmatpush1.msra.mxu0 %v1661
        %v1663 = vand.u32 %v239, 4294901760
        %1664 = vmatprep.subr.mxu0 %v1663
        %v1665 = vand.u32 %v238, 4294901760
        %1666 = vmatpush1.msra.mxu0 %v1665
        %v1667 = vand.u32 %v243, 4294901760
        %1668 = vmatprep.subr.mxu0 %v1667
        %v1669 = vand.u32 %v242, 4294901760
        %1670 = vmatpush1.msra.mxu0 %v1669
        %v1671 = vand.u32 %v247, 4294901760
        %1672 = vmatprep.subr.mxu0 %v1671
        %v1673 = vand.u32 %v246, 4294901760
        %1674 = vmatpush1.msra.mxu0 %v1673
        %v1675 = vand.u32 %v251, 4294901760
        %1676 = vmatprep.subr.mxu0 %v1675
        %v1677 = vand.u32 %v250, 4294901760
        %1678 = vmatpush1.msra.mxu0 %v1677
        %v1679 = vand.u32 %v255, 4294901760
        %1680 = vmatprep.subr.mxu0 %v1679
        %v1681 = vand.u32 %v254, 4294901760
        %1682 = vmatpush1.msra.mxu0 %v1681
        %v1683 = vand.u32 %v259, 4294901760
        %1684 = vmatprep.subr.mxu0 %v1683
        %v1685 = vand.u32 %v258, 4294901760
        %1686 = vmatpush1.msra.mxu0 %v1685
        %v1687 = vand.u32 %v263, 4294901760
        %1688 = vmatprep.subr.mxu0 %v1687
        %v1689 = vand.u32 %v262, 4294901760
        %1690 = vmatpush1.msra.mxu0 %v1689
        %v1691 = vand.u32 %v267, 4294901760
        %1692 = vmatprep.subr.mxu0 %v1691
        %v1693 = vand.u32 %v266, 4294901760
        %1694 = vmatpush1.msra.mxu0 %v1693
        %v1695 = vand.u32 %v271, 4294901760
        %1696 = vmatprep.subr.mxu0 %v1695
        %v1697 = vand.u32 %v270, 4294901760
        %1698 = vmatpush1.msra.mxu0 %v1697
        %v1699 = vand.u32 %v275, 4294901760
        %1700 = vmatprep.subr.mxu0 %v1699
        %v1701 = vand.u32 %v274, 4294901760
        %1702 = vmatpush1.msra.mxu0 %v1701
        %v1703 = vand.u32 %v279, 4294901760
        %1704 = vmatprep.subr.mxu0 %v1703
        %v1705 = vand.u32 %v278, 4294901760
        %1706 = vmatpush1.msra.mxu0 %v1705
        %v1707 = vand.u32 %v283, 4294901760
        %1708 = vmatprep.subr.mxu0 %v1707
        %v1709 = vand.u32 %v282, 4294901760
        %1710 = vmatpush1.msra.mxu0 %v1709
        %v1711 = vand.u32 %v287, 4294901760
        %1712 = vmatprep.subr.mxu0 %v1711
        %v1713 = vand.u32 %v286, 4294901760
        %1714 = vmatpush1.msra.mxu0 %v1713
        %v1715 = vand.u32 %v291, 4294901760
        %1716 = vmatprep.subr.mxu0 %v1715
        %v1717 = vand.u32 %v290, 4294901760
        %1718 = vmatpush1.msra.mxu0 %v1717
        %v1719 = vand.u32 %v295, 4294901760
        %1720 = vmatprep.subr.mxu0 %v1719
        %v1721 = vand.u32 %v294, 4294901760
        %1722 = vmatpush1.msra.mxu0 %v1721
        %v1723 = vand.u32 %v299, 4294901760
        %1724 = vmatprep.subr.mxu0 %v1723
        %v1725 = vand.u32 %v298, 4294901760
        %1726 = vmatpush1.msra.mxu0 %v1725
        %v1727 = vand.u32 %v303, 4294901760
        %1728 = vmatprep.subr.mxu0 %v1727
        %v1729 = vand.u32 %v302, 4294901760
        %1730 = vmatpush1.msra.mxu0 %v1729
        %v1731 = vand.u32 %v307, 4294901760
        %1732 = vmatprep.subr.mxu0 %v1731
        %v1733 = vand.u32 %v306, 4294901760
        %1734 = vmatpush1.msra.mxu0 %v1733
        %v1735 = vand.u32 %v311, 4294901760
        %1736 = vmatprep.subr.mxu0 %v1735
        %v1737 = vand.u32 %v310, 4294901760
        %1738 = vmatpush1.msra.mxu0 %v1737
        %v1739 = vand.u32 %v315, 4294901760
        %1740 = vmatprep.subr.mxu0 %v1739
        %v1741 = vand.u32 %v314, 4294901760
        %1742 = vmatpush1.msra.mxu0 %v1741
        %v1743 = vand.u32 %v319, 4294901760
        %1744 = vmatprep.subr.mxu0 %v1743
        %v1745 = vand.u32 %v318, 4294901760
        %1746 = vmatpush1.msra.mxu0 %v1745
        %v1747 = vand.u32 %v323, 4294901760
        %1748 = vmatprep.subr.mxu0 %v1747
        %v1749 = vand.u32 %v322, 4294901760
        %1750 = vmatpush1.msra.mxu0 %v1749
        %v1751 = vand.u32 %v327, 4294901760
        %1752 = vmatprep.subr.mxu0 %v1751
        %v1753 = vand.u32 %v326, 4294901760
        %1754 = vmatpush1.msra.mxu0 %v1753
        %v1755 = vand.u32 %v331, 4294901760
        %1756 = vmatprep.subr.mxu0 %v1755
        %v1757 = vand.u32 %v330, 4294901760
        %1758 = vmatpush1.msra.mxu0 %v1757
        %v1759 = vand.u32 %v335, 4294901760
        %1760 = vmatprep.subr.mxu0 %v1759
        %v1761 = vand.u32 %v334, 4294901760
        %1762 = vmatpush1.msra.mxu0 %v1761
        %v1763 = vand.u32 %v339, 4294901760
        %1764 = vmatprep.subr.mxu0 %v1763
        %v1765 = vand.u32 %v338, 4294901760
        %1766 = vmatpush1.msra.mxu0 %v1765
        %v1767 = vand.u32 %v343, 4294901760
        %1768 = vmatprep.subr.mxu0 %v1767
        %v1769 = vand.u32 %v342, 4294901760
        %1770 = vmatpush1.msra.mxu0 %v1769
        %v1771 = vand.u32 %v347, 4294901760
        %1772 = vmatprep.subr.mxu0 %v1771
        %v1773 = vand.u32 %v346, 4294901760
        %1774 = vmatpush1.msra.mxu0 %v1773
        %v1775 = vand.u32 %v351, 4294901760
        %1776 = vmatprep.subr.mxu0 %v1775
        %v1777 = vand.u32 %v350, 4294901760
        %1778 = vmatpush1.msra.mxu0 %v1777
        %v1779 = vand.u32 %v355, 4294901760
        %1780 = vmatprep.subr.mxu0 %v1779
        %v1781 = vand.u32 %v354, 4294901760
        %1782 = vmatpush1.msra.mxu0 %v1781
        %v1783 = vand.u32 %v359, 4294901760
        %1784 = vmatprep.subr.mxu0 %v1783
        %v1785 = vand.u32 %v358, 4294901760
        %1786 = vmatpush1.msra.mxu0 %v1785
        %v1787 = vand.u32 %v506, 4294901760
        %1788 = vmatprep.mubr.f32.mxu0 %v1787
        %v1789 = vand.u32 %v498, 4294901760
        %1790 = vmatmul.mubr.f32.gmra.mrb[0].mxu0 %v1789
        %v1791 = vpop.f32.mrb[0].mxu0
        %v1792 = vadd.f32 %v1655, %v1791
        %v1793 = vpop.f32.mrb[0].mxu0
        %v1794 = vadd.f32 %v1657, %v1793
        %1795 = vdwg.mxu0
        %v1796 = vand.u32 %v363, 4294901760
        %1797 = vmatprep.subr.mxu0 %v1796
        %v1798 = vand.u32 %v362, 4294901760
        %1799 = vmatpush1.msra.mxu0 %v1798
        %v1800 = vand.u32 %v367, 4294901760
        %1801 = vmatprep.subr.mxu0 %v1800
        %v1802 = vand.u32 %v366, 4294901760
        %1803 = vmatpush1.msra.mxu0 %v1802
        %v1804 = vand.u32 %v371, 4294901760
        %1805 = vmatprep.subr.mxu0 %v1804
        %v1806 = vand.u32 %v370, 4294901760
        %1807 = vmatpush1.msra.mxu0 %v1806
        %v1808 = vand.u32 %v375, 4294901760
        %1809 = vmatprep.subr.mxu0 %v1808
        %v1810 = vand.u32 %v374, 4294901760
        %1811 = vmatpush1.msra.mxu0 %v1810
        %v1812 = vand.u32 %v379, 4294901760
        %1813 = vmatprep.subr.mxu0 %v1812
        %v1814 = vand.u32 %v378, 4294901760
        %1815 = vmatpush1.msra.mxu0 %v1814
        %v1816 = vand.u32 %v383, 4294901760
        %1817 = vmatprep.subr.mxu0 %v1816
        %v1818 = vand.u32 %v382, 4294901760
        %1819 = vmatpush1.msra.mxu0 %v1818
        %v1820 = vand.u32 %v387, 4294901760
        %1821 = vmatprep.subr.mxu0 %v1820
        %v1822 = vand.u32 %v386, 4294901760
        %1823 = vmatpush1.msra.mxu0 %v1822
        %v1824 = vand.u32 %v391, 4294901760
        %1825 = vmatprep.subr.mxu0 %v1824
        %v1826 = vand.u32 %v390, 4294901760
        %1827 = vmatpush1.msra.mxu0 %v1826
        %v1828 = vand.u32 %v395, 4294901760
        %1829 = vmatprep.subr.mxu0 %v1828
        %v1830 = vand.u32 %v394, 4294901760
        %1831 = vmatpush1.msra.mxu0 %v1830
        %v1832 = vand.u32 %v399, 4294901760
        %1833 = vmatprep.subr.mxu0 %v1832
        %v1834 = vand.u32 %v398, 4294901760
        %1835 = vmatpush1.msra.mxu0 %v1834
        %v1836 = vand.u32 %v403, 4294901760
        %1837 = vmatprep.subr.mxu0 %v1836
        %v1838 = vand.u32 %v402, 4294901760
        %1839 = vmatpush1.msra.mxu0 %v1838
        %v1840 = vand.u32 %v407, 4294901760
        %1841 = vmatprep.subr.mxu0 %v1840
        %v1842 = vand.u32 %v406, 4294901760
        %1843 = vmatpush1.msra.mxu0 %v1842
        %v1844 = vand.u32 %v411, 4294901760
        %1845 = vmatprep.subr.mxu0 %v1844
        %v1846 = vand.u32 %v410, 4294901760
        %1847 = vmatpush1.msra.mxu0 %v1846
        %v1848 = vand.u32 %v415, 4294901760
        %1849 = vmatprep.subr.mxu0 %v1848
        %v1850 = vand.u32 %v414, 4294901760
        %1851 = vmatpush1.msra.mxu0 %v1850
        %v1852 = vand.u32 %v419, 4294901760
        %1853 = vmatprep.subr.mxu0 %v1852
        %v1854 = vand.u32 %v418, 4294901760
        %1855 = vmatpush1.msra.mxu0 %v1854
        %v1856 = vand.u32 %v423, 4294901760
        %1857 = vmatprep.subr.mxu0 %v1856
        %v1858 = vand.u32 %v422, 4294901760
        %1859 = vmatpush1.msra.mxu0 %v1858
        %v1860 = vand.u32 %v427, 4294901760
        %1861 = vmatprep.subr.mxu0 %v1860
        %v1862 = vand.u32 %v426, 4294901760
        %1863 = vmatpush1.msra.mxu0 %v1862
        %v1864 = vand.u32 %v431, 4294901760
        %1865 = vmatprep.subr.mxu0 %v1864
        %v1866 = vand.u32 %v430, 4294901760
        %1867 = vmatpush1.msra.mxu0 %v1866
        %v1868 = vand.u32 %v435, 4294901760
        %1869 = vmatprep.subr.mxu0 %v1868
        %v1870 = vand.u32 %v434, 4294901760
        %1871 = vmatpush1.msra.mxu0 %v1870
        %v1872 = vand.u32 %v439, 4294901760
        %1873 = vmatprep.subr.mxu0 %v1872
        %v1874 = vand.u32 %v438, 4294901760
        %1875 = vmatpush1.msra.mxu0 %v1874
        %v1876 = vand.u32 %v443, 4294901760
        %1877 = vmatprep.subr.mxu0 %v1876
        %v1878 = vand.u32 %v442, 4294901760
        %1879 = vmatpush1.msra.mxu0 %v1878
        %v1880 = vand.u32 %v447, 4294901760
        %1881 = vmatprep.subr.mxu0 %v1880
        %v1882 = vand.u32 %v446, 4294901760
        %1883 = vmatpush1.msra.mxu0 %v1882
        %v1884 = vand.u32 %v451, 4294901760
        %1885 = vmatprep.subr.mxu0 %v1884
        %v1886 = vand.u32 %v450, 4294901760
        %1887 = vmatpush1.msra.mxu0 %v1886
        %v1888 = vand.u32 %v455, 4294901760
        %1889 = vmatprep.subr.mxu0 %v1888
        %v1890 = vand.u32 %v454, 4294901760
        %1891 = vmatpush1.msra.mxu0 %v1890
        %v1892 = vand.u32 %v459, 4294901760
        %1893 = vmatprep.subr.mxu0 %v1892
        %v1894 = vand.u32 %v458, 4294901760
        %1895 = vmatpush1.msra.mxu0 %v1894
        %v1896 = vand.u32 %v463, 4294901760
        %1897 = vmatprep.subr.mxu0 %v1896
        %v1898 = vand.u32 %v462, 4294901760
        %1899 = vmatpush1.msra.mxu0 %v1898
        %v1900 = vand.u32 %v467, 4294901760
        %1901 = vmatprep.subr.mxu0 %v1900
        %v1902 = vand.u32 %v466, 4294901760
        %1903 = vmatpush1.msra.mxu0 %v1902
        %v1904 = vand.u32 %v471, 4294901760
        %1905 = vmatprep.subr.mxu0 %v1904
        %v1906 = vand.u32 %v470, 4294901760
        %1907 = vmatpush1.msra.mxu0 %v1906
        %v1908 = vand.u32 %v475, 4294901760
        %1909 = vmatprep.subr.mxu0 %v1908
        %v1910 = vand.u32 %v474, 4294901760
        %1911 = vmatpush1.msra.mxu0 %v1910
        %v1912 = vand.u32 %v479, 4294901760
        %1913 = vmatprep.subr.mxu0 %v1912
        %v1914 = vand.u32 %v478, 4294901760
        %1915 = vmatpush1.msra.mxu0 %v1914
        %v1916 = vand.u32 %v483, 4294901760
        %1917 = vmatprep.subr.mxu0 %v1916
        %v1918 = vand.u32 %v482, 4294901760
        %1919 = vmatpush1.msra.mxu0 %v1918
        %v1920 = vand.u32 %v487, 4294901760
        %1921 = vmatprep.subr.mxu0 %v1920
        %v1922 = vand.u32 %v486, 4294901760
        %1923 = vmatpush1.msra.mxu0 %v1922
        %v1924 = vand.u32 %v507, 4294901760
        %v1925 = vsub.f32 %v507, %v1924
        %v1926 = vand.u32 %v1925, 4294901760
        %v1927 = vsub.f32 %v1925, %v1926
        %v1928 = vand.u32 %v1927, 4294901760
        %1929 = vmatprep.mubr.f32.mxu0 %v1928
        %v1930 = vand.u32 %v505, 4294901760
        %v1931 = vsub.f32 %v505, %v1930
        %v1932 = vand.u32 %v1931, 4294901760
        %v1933 = vsub.f32 %v1931, %v1932
        %v1934 = vand.u32 %v1933, 4294901760
        %1935 = vmatmul.mubr.f32.gmra.mrb[0].mxu0 %v1934
        %v1936 = vpop.f32.mrb[0].mxu0
        %v1937 = vadd.f32 %v1792, %v1936
        %v1938 = vpop.f32.mrb[0].mxu0
        %v1939 = vadd.f32 %v1794, %v1938
        %1940 = vdwg.mxu0
        %v1941 = vand.u32 %v363, 4294901760
        %v1942 = vsub.f32 %v363, %v1941
        %v1943 = vand.u32 %v1942, 4294901760
        %v1944 = vsub.f32 %v1942, %v1943
        %v1945 = vand.u32 %v1944, 4294901760
        %1946 = vmatprep.subr.mxu0 %v1945
        %v1947 = vand.u32 %v362, 4294901760
        %v1948 = vsub.f32 %v362, %v1947
        %v1949 = vand.u32 %v1948, 4294901760
        %v1950 = vsub.f32 %v1948, %v1949
        %v1951 = vand.u32 %v1950, 4294901760
        %1952 = vmatpush1.msra.mxu0 %v1951
        %v1953 = vand.u32 %v367, 4294901760
        %v1954 = vsub.f32 %v367, %v1953
        %v1955 = vand.u32 %v1954, 4294901760
        %v1956 = vsub.f32 %v1954, %v1955
        %v1957 = vand.u32 %v1956, 4294901760
        %1958 = vmatprep.subr.mxu0 %v1957
        %v1959 = vand.u32 %v366, 4294901760
        %v1960 = vsub.f32 %v366, %v1959
        %v1961 = vand.u32 %v1960, 4294901760
        %v1962 = vsub.f32 %v1960, %v1961
        %v1963 = vand.u32 %v1962, 4294901760
        %1964 = vmatpush1.msra.mxu0 %v1963
        %v1965 = vand.u32 %v371, 4294901760
        %v1966 = vsub.f32 %v371, %v1965
        %v1967 = vand.u32 %v1966, 4294901760
        %v1968 = vsub.f32 %v1966, %v1967
        %v1969 = vand.u32 %v1968, 4294901760
        %1970 = vmatprep.subr.mxu0 %v1969
        %v1971 = vand.u32 %v370, 4294901760
        %v1972 = vsub.f32 %v370, %v1971
        %v1973 = vand.u32 %v1972, 4294901760
        %v1974 = vsub.f32 %v1972, %v1973
        %v1975 = vand.u32 %v1974, 4294901760
        %1976 = vmatpush1.msra.mxu0 %v1975
        %v1977 = vand.u32 %v375, 4294901760
        %v1978 = vsub.f32 %v375, %v1977
        %v1979 = vand.u32 %v1978, 4294901760
        %v1980 = vsub.f32 %v1978, %v1979
        %v1981 = vand.u32 %v1980, 4294901760
        %1982 = vmatprep.subr.mxu0 %v1981
        %v1983 = vand.u32 %v374, 4294901760
        %v1984 = vsub.f32 %v374, %v1983
        %v1985 = vand.u32 %v1984, 4294901760
        %v1986 = vsub.f32 %v1984, %v1985
        %v1987 = vand.u32 %v1986, 4294901760
        %1988 = vmatpush1.msra.mxu0 %v1987
        %v1989 = vand.u32 %v379, 4294901760
        %v1990 = vsub.f32 %v379, %v1989
        %v1991 = vand.u32 %v1990, 4294901760
        %v1992 = vsub.f32 %v1990, %v1991
        %v1993 = vand.u32 %v1992, 4294901760
        %1994 = vmatprep.subr.mxu0 %v1993
        %v1995 = vand.u32 %v378, 4294901760
        %v1996 = vsub.f32 %v378, %v1995
        %v1997 = vand.u32 %v1996, 4294901760
        %v1998 = vsub.f32 %v1996, %v1997
        %v1999 = vand.u32 %v1998, 4294901760
        %2000 = vmatpush1.msra.mxu0 %v1999
        %v2001 = vand.u32 %v383, 4294901760
        %v2002 = vsub.f32 %v383, %v2001
        %v2003 = vand.u32 %v2002, 4294901760
        %v2004 = vsub.f32 %v2002, %v2003
        %v2005 = vand.u32 %v2004, 4294901760
        %2006 = vmatprep.subr.mxu0 %v2005
        %v2007 = vand.u32 %v382, 4294901760
        %v2008 = vsub.f32 %v382, %v2007
        %v2009 = vand.u32 %v2008, 4294901760
        %v2010 = vsub.f32 %v2008, %v2009
        %v2011 = vand.u32 %v2010, 4294901760
        %2012 = vmatpush1.msra.mxu0 %v2011
        %v2013 = vand.u32 %v387, 4294901760
        %v2014 = vsub.f32 %v387, %v2013
        %v2015 = vand.u32 %v2014, 4294901760
        %v2016 = vsub.f32 %v2014, %v2015
        %v2017 = vand.u32 %v2016, 4294901760
        %2018 = vmatprep.subr.mxu0 %v2017
        %v2019 = vand.u32 %v386, 4294901760
        %v2020 = vsub.f32 %v386, %v2019
        %v2021 = vand.u32 %v2020, 4294901760
        %v2022 = vsub.f32 %v2020, %v2021
        %v2023 = vand.u32 %v2022, 4294901760
        %2024 = vmatpush1.msra.mxu0 %v2023
        %v2025 = vand.u32 %v391, 4294901760
        %v2026 = vsub.f32 %v391, %v2025
        %v2027 = vand.u32 %v2026, 4294901760
        %v2028 = vsub.f32 %v2026, %v2027
        %v2029 = vand.u32 %v2028, 4294901760
        %2030 = vmatprep.subr.mxu0 %v2029
        %v2031 = vand.u32 %v390, 4294901760
        %v2032 = vsub.f32 %v390, %v2031
        %v2033 = vand.u32 %v2032, 4294901760
        %v2034 = vsub.f32 %v2032, %v2033
        %v2035 = vand.u32 %v2034, 4294901760
        %2036 = vmatpush1.msra.mxu0 %v2035
        %v2037 = vand.u32 %v395, 4294901760
        %v2038 = vsub.f32 %v395, %v2037
        %v2039 = vand.u32 %v2038, 4294901760
        %v2040 = vsub.f32 %v2038, %v2039
        %v2041 = vand.u32 %v2040, 4294901760
        %2042 = vmatprep.subr.mxu0 %v2041
        %v2043 = vand.u32 %v394, 4294901760
        %v2044 = vsub.f32 %v394, %v2043
        %v2045 = vand.u32 %v2044, 4294901760
        %v2046 = vsub.f32 %v2044, %v2045
        %v2047 = vand.u32 %v2046, 4294901760
        %2048 = vmatpush1.msra.mxu0 %v2047
        %v2049 = vand.u32 %v399, 4294901760
        %v2050 = vsub.f32 %v399, %v2049
        %v2051 = vand.u32 %v2050, 4294901760
        %v2052 = vsub.f32 %v2050, %v2051
        %v2053 = vand.u32 %v2052, 4294901760
        %2054 = vmatprep.subr.mxu0 %v2053
        %v2055 = vand.u32 %v398, 4294901760
        %v2056 = vsub.f32 %v398, %v2055
        %v2057 = vand.u32 %v2056, 4294901760
        %v2058 = vsub.f32 %v2056, %v2057
        %v2059 = vand.u32 %v2058, 4294901760
        %2060 = vmatpush1.msra.mxu0 %v2059
        %v2061 = vand.u32 %v403, 4294901760
        %v2062 = vsub.f32 %v403, %v2061
        %v2063 = vand.u32 %v2062, 4294901760
        %v2064 = vsub.f32 %v2062, %v2063
        %v2065 = vand.u32 %v2064, 4294901760
        %2066 = vmatprep.subr.mxu0 %v2065
        %v2067 = vand.u32 %v402, 4294901760
        %v2068 = vsub.f32 %v402, %v2067
        %v2069 = vand.u32 %v2068, 4294901760
        %v2070 = vsub.f32 %v2068, %v2069
        %v2071 = vand.u32 %v2070, 4294901760
        %2072 = vmatpush1.msra.mxu0 %v2071
        %v2073 = vand.u32 %v407, 4294901760
        %v2074 = vsub.f32 %v407, %v2073
        %v2075 = vand.u32 %v2074, 4294901760
        %v2076 = vsub.f32 %v2074, %v2075
        %v2077 = vand.u32 %v2076, 4294901760
        %2078 = vmatprep.subr.mxu0 %v2077
        %v2079 = vand.u32 %v406, 4294901760
        %v2080 = vsub.f32 %v406, %v2079
        %v2081 = vand.u32 %v2080, 4294901760
        %v2082 = vsub.f32 %v2080, %v2081
        %v2083 = vand.u32 %v2082, 4294901760
        %2084 = vmatpush1.msra.mxu0 %v2083
        %v2085 = vand.u32 %v411, 4294901760
        %v2086 = vsub.f32 %v411, %v2085
        %v2087 = vand.u32 %v2086, 4294901760
        %v2088 = vsub.f32 %v2086, %v2087
        %v2089 = vand.u32 %v2088, 4294901760
        %2090 = vmatprep.subr.mxu0 %v2089
        %v2091 = vand.u32 %v410, 4294901760
        %v2092 = vsub.f32 %v410, %v2091
        %v2093 = vand.u32 %v2092, 4294901760
        %v2094 = vsub.f32 %v2092, %v2093
        %v2095 = vand.u32 %v2094, 4294901760
        %2096 = vmatpush1.msra.mxu0 %v2095
        %v2097 = vand.u32 %v415, 4294901760
        %v2098 = vsub.f32 %v415, %v2097
        %v2099 = vand.u32 %v2098, 4294901760
        %v2100 = vsub.f32 %v2098, %v2099
        %v2101 = vand.u32 %v2100, 4294901760
        %2102 = vmatprep.subr.mxu0 %v2101
        %v2103 = vand.u32 %v414, 4294901760
        %v2104 = vsub.f32 %v414, %v2103
        %v2105 = vand.u32 %v2104, 4294901760
        %v2106 = vsub.f32 %v2104, %v2105
        %v2107 = vand.u32 %v2106, 4294901760
        %2108 = vmatpush1.msra.mxu0 %v2107
        %v2109 = vand.u32 %v419, 4294901760
        %v2110 = vsub.f32 %v419, %v2109
        %v2111 = vand.u32 %v2110, 4294901760
        %v2112 = vsub.f32 %v2110, %v2111
        %v2113 = vand.u32 %v2112, 4294901760
        %2114 = vmatprep.subr.mxu0 %v2113
        %v2115 = vand.u32 %v418, 4294901760
        %v2116 = vsub.f32 %v418, %v2115
        %v2117 = vand.u32 %v2116, 4294901760
        %v2118 = vsub.f32 %v2116, %v2117
        %v2119 = vand.u32 %v2118, 4294901760
        %2120 = vmatpush1.msra.mxu0 %v2119
        %v2121 = vand.u32 %v423, 4294901760
        %v2122 = vsub.f32 %v423, %v2121
        %v2123 = vand.u32 %v2122, 4294901760
        %v2124 = vsub.f32 %v2122, %v2123
        %v2125 = vand.u32 %v2124, 4294901760
        %2126 = vmatprep.subr.mxu0 %v2125
        %v2127 = vand.u32 %v422, 4294901760
        %v2128 = vsub.f32 %v422, %v2127
        %v2129 = vand.u32 %v2128, 4294901760
        %v2130 = vsub.f32 %v2128, %v2129
        %v2131 = vand.u32 %v2130, 4294901760
        %2132 = vmatpush1.msra.mxu0 %v2131
        %v2133 = vand.u32 %v427, 4294901760
        %v2134 = vsub.f32 %v427, %v2133
        %v2135 = vand.u32 %v2134, 4294901760
        %v2136 = vsub.f32 %v2134, %v2135
        %v2137 = vand.u32 %v2136, 4294901760
        %2138 = vmatprep.subr.mxu0 %v2137
        %v2139 = vand.u32 %v426, 4294901760
        %v2140 = vsub.f32 %v426, %v2139
        %v2141 = vand.u32 %v2140, 4294901760
        %v2142 = vsub.f32 %v2140, %v2141
        %v2143 = vand.u32 %v2142, 4294901760
        %2144 = vmatpush1.msra.mxu0 %v2143
        %v2145 = vand.u32 %v431, 4294901760
        %v2146 = vsub.f32 %v431, %v2145
        %v2147 = vand.u32 %v2146, 4294901760
        %v2148 = vsub.f32 %v2146, %v2147
        %v2149 = vand.u32 %v2148, 4294901760
        %2150 = vmatprep.subr.mxu0 %v2149
        %v2151 = vand.u32 %v430, 4294901760
        %v2152 = vsub.f32 %v430, %v2151
        %v2153 = vand.u32 %v2152, 4294901760
        %v2154 = vsub.f32 %v2152, %v2153
        %v2155 = vand.u32 %v2154, 4294901760
        %2156 = vmatpush1.msra.mxu0 %v2155
        %v2157 = vand.u32 %v435, 4294901760
        %v2158 = vsub.f32 %v435, %v2157
        %v2159 = vand.u32 %v2158, 4294901760
        %v2160 = vsub.f32 %v2158, %v2159
        %v2161 = vand.u32 %v2160, 4294901760
        %2162 = vmatprep.subr.mxu0 %v2161
        %v2163 = vand.u32 %v434, 4294901760
        %v2164 = vsub.f32 %v434, %v2163
        %v2165 = vand.u32 %v2164, 4294901760
        %v2166 = vsub.f32 %v2164, %v2165
        %v2167 = vand.u32 %v2166, 4294901760
        %2168 = vmatpush1.msra.mxu0 %v2167
        %v2169 = vand.u32 %v439, 4294901760
        %v2170 = vsub.f32 %v439, %v2169
        %v2171 = vand.u32 %v2170, 4294901760
        %v2172 = vsub.f32 %v2170, %v2171
        %v2173 = vand.u32 %v2172, 4294901760
        %2174 = vmatprep.subr.mxu0 %v2173
        %v2175 = vand.u32 %v438, 4294901760
        %v2176 = vsub.f32 %v438, %v2175
        %v2177 = vand.u32 %v2176, 4294901760
        %v2178 = vsub.f32 %v2176, %v2177
        %v2179 = vand.u32 %v2178, 4294901760
        %2180 = vmatpush1.msra.mxu0 %v2179
        %v2181 = vand.u32 %v443, 4294901760
        %v2182 = vsub.f32 %v443, %v2181
        %v2183 = vand.u32 %v2182, 4294901760
        %v2184 = vsub.f32 %v2182, %v2183
        %v2185 = vand.u32 %v2184, 4294901760
        %2186 = vmatprep.subr.mxu0 %v2185
        %v2187 = vand.u32 %v442, 4294901760
        %v2188 = vsub.f32 %v442, %v2187
        %v2189 = vand.u32 %v2188, 4294901760
        %v2190 = vsub.f32 %v2188, %v2189
        %v2191 = vand.u32 %v2190, 4294901760
        %2192 = vmatpush1.msra.mxu0 %v2191
        %v2193 = vand.u32 %v447, 4294901760
        %v2194 = vsub.f32 %v447, %v2193
        %v2195 = vand.u32 %v2194, 4294901760
        %v2196 = vsub.f32 %v2194, %v2195
        %v2197 = vand.u32 %v2196, 4294901760
        %2198 = vmatprep.subr.mxu0 %v2197
        %v2199 = vand.u32 %v446, 4294901760
        %v2200 = vsub.f32 %v446, %v2199
        %v2201 = vand.u32 %v2200, 4294901760
        %v2202 = vsub.f32 %v2200, %v2201
        %v2203 = vand.u32 %v2202, 4294901760
        %2204 = vmatpush1.msra.mxu0 %v2203
        %v2205 = vand.u32 %v451, 4294901760
        %v2206 = vsub.f32 %v451, %v2205
        %v2207 = vand.u32 %v2206, 4294901760
        %v2208 = vsub.f32 %v2206, %v2207
        %v2209 = vand.u32 %v2208, 4294901760
        %2210 = vmatprep.subr.mxu0 %v2209
        %v2211 = vand.u32 %v450, 4294901760
        %v2212 = vsub.f32 %v450, %v2211
        %v2213 = vand.u32 %v2212, 4294901760
        %v2214 = vsub.f32 %v2212, %v2213
        %v2215 = vand.u32 %v2214, 4294901760
        %2216 = vmatpush1.msra.mxu0 %v2215
        %v2217 = vand.u32 %v455, 4294901760
        %v2218 = vsub.f32 %v455, %v2217
        %v2219 = vand.u32 %v2218, 4294901760
        %v2220 = vsub.f32 %v2218, %v2219
        %v2221 = vand.u32 %v2220, 4294901760
        %2222 = vmatprep.subr.mxu0 %v2221
        %v2223 = vand.u32 %v454, 4294901760
        %v2224 = vsub.f32 %v454, %v2223
        %v2225 = vand.u32 %v2224, 4294901760
        %v2226 = vsub.f32 %v2224, %v2225
        %v2227 = vand.u32 %v2226, 4294901760
        %2228 = vmatpush1.msra.mxu0 %v2227
        %v2229 = vand.u32 %v459, 4294901760
        %v2230 = vsub.f32 %v459, %v2229
        %v2231 = vand.u32 %v2230, 4294901760
        %v2232 = vsub.f32 %v2230, %v2231
        %v2233 = vand.u32 %v2232, 4294901760
        %2234 = vmatprep.subr.mxu0 %v2233
        %v2235 = vand.u32 %v458, 4294901760
        %v2236 = vsub.f32 %v458, %v2235
        %v2237 = vand.u32 %v2236, 4294901760
        %v2238 = vsub.f32 %v2236, %v2237
        %v2239 = vand.u32 %v2238, 4294901760
        %2240 = vmatpush1.msra.mxu0 %v2239
        %v2241 = vand.u32 %v463, 4294901760
        %v2242 = vsub.f32 %v463, %v2241
        %v2243 = vand.u32 %v2242, 4294901760
        %v2244 = vsub.f32 %v2242, %v2243
        %v2245 = vand.u32 %v2244, 4294901760
        %2246 = vmatprep.subr.mxu0 %v2245
        %v2247 = vand.u32 %v462, 4294901760
        %v2248 = vsub.f32 %v462, %v2247
        %v2249 = vand.u32 %v2248, 4294901760
        %v2250 = vsub.f32 %v2248, %v2249
        %v2251 = vand.u32 %v2250, 4294901760
        %2252 = vmatpush1.msra.mxu0 %v2251
        %v2253 = vand.u32 %v467, 4294901760
        %v2254 = vsub.f32 %v467, %v2253
        %v2255 = vand.u32 %v2254, 4294901760
        %v2256 = vsub.f32 %v2254, %v2255
        %v2257 = vand.u32 %v2256, 4294901760
        %2258 = vmatprep.subr.mxu0 %v2257
        %v2259 = vand.u32 %v466, 4294901760
        %v2260 = vsub.f32 %v466, %v2259
        %v2261 = vand.u32 %v2260, 4294901760
        %v2262 = vsub.f32 %v2260, %v2261
        %v2263 = vand.u32 %v2262, 4294901760
        %2264 = vmatpush1.msra.mxu0 %v2263
        %v2265 = vand.u32 %v471, 4294901760
        %v2266 = vsub.f32 %v471, %v2265
        %v2267 = vand.u32 %v2266, 4294901760
        %v2268 = vsub.f32 %v2266, %v2267
        %v2269 = vand.u32 %v2268, 4294901760
        %2270 = vmatprep.subr.mxu0 %v2269
        %v2271 = vand.u32 %v470, 4294901760
        %v2272 = vsub.f32 %v470, %v2271
        %v2273 = vand.u32 %v2272, 4294901760
        %v2274 = vsub.f32 %v2272, %v2273
        %v2275 = vand.u32 %v2274, 4294901760
        %2276 = vmatpush1.msra.mxu0 %v2275
        %v2277 = vand.u32 %v475, 4294901760
        %v2278 = vsub.f32 %v475, %v2277
        %v2279 = vand.u32 %v2278, 4294901760
        %v2280 = vsub.f32 %v2278, %v2279
        %v2281 = vand.u32 %v2280, 4294901760
        %2282 = vmatprep.subr.mxu0 %v2281
        %v2283 = vand.u32 %v474, 4294901760
        %v2284 = vsub.f32 %v474, %v2283
        %v2285 = vand.u32 %v2284, 4294901760
        %v2286 = vsub.f32 %v2284, %v2285
        %v2287 = vand.u32 %v2286, 4294901760
        %2288 = vmatpush1.msra.mxu0 %v2287
        %v2289 = vand.u32 %v479, 4294901760
        %v2290 = vsub.f32 %v479, %v2289
        %v2291 = vand.u32 %v2290, 4294901760
        %v2292 = vsub.f32 %v2290, %v2291
        %v2293 = vand.u32 %v2292, 4294901760
        %2294 = vmatprep.subr.mxu0 %v2293
        %v2295 = vand.u32 %v478, 4294901760
        %v2296 = vsub.f32 %v478, %v2295
        %v2297 = vand.u32 %v2296, 4294901760
        %v2298 = vsub.f32 %v2296, %v2297
        %v2299 = vand.u32 %v2298, 4294901760
        %2300 = vmatpush1.msra.mxu0 %v2299
        %v2301 = vand.u32 %v483, 4294901760
        %v2302 = vsub.f32 %v483, %v2301
        %v2303 = vand.u32 %v2302, 4294901760
        %v2304 = vsub.f32 %v2302, %v2303
        %v2305 = vand.u32 %v2304, 4294901760
        %2306 = vmatprep.subr.mxu0 %v2305
        %v2307 = vand.u32 %v482, 4294901760
        %v2308 = vsub.f32 %v482, %v2307
        %v2309 = vand.u32 %v2308, 4294901760
        %v2310 = vsub.f32 %v2308, %v2309
        %v2311 = vand.u32 %v2310, 4294901760
        %2312 = vmatpush1.msra.mxu0 %v2311
        %v2313 = vand.u32 %v487, 4294901760
        %v2314 = vsub.f32 %v487, %v2313
        %v2315 = vand.u32 %v2314, 4294901760
        %v2316 = vsub.f32 %v2314, %v2315
        %v2317 = vand.u32 %v2316, 4294901760
        %2318 = vmatprep.subr.mxu0 %v2317
        %v2319 = vand.u32 %v486, 4294901760
        %v2320 = vsub.f32 %v486, %v2319
        %v2321 = vand.u32 %v2320, 4294901760
        %v2322 = vsub.f32 %v2320, %v2321
        %v2323 = vand.u32 %v2322, 4294901760
        %2324 = vmatpush1.msra.mxu0 %v2323
        %v2325 = vand.u32 %v507, 4294901760
        %2326 = vmatprep.mubr.f32.mxu0 %v2325
        %v2327 = vand.u32 %v505, 4294901760
        %2328 = vmatmul.mubr.f32.gmra.mrb[0].mxu0 %v2327
        %v2329 = vpop.f32.mrb[0].mxu0
        %v2330 = vadd.f32 %v1937, %v2329
        %v2331 = vpop.f32.mrb[0].mxu0
        %v2332 = vadd.f32 %v1939, %v2331
        %2333 = vdwg.mxu0
        %v2334 = vand.u32 %v363, 4294901760
        %v2335 = vsub.f32 %v363, %v2334
        %2336 = vmatprep.subr.mxu0 %v2335
        %v2337 = vand.u32 %v362, 4294901760
        %v2338 = vsub.f32 %v362, %v2337
        %2339 = vmatpush1.msra.mxu0 %v2338
        %v2340 = vand.u32 %v367, 4294901760
        %v2341 = vsub.f32 %v367, %v2340
        %2342 = vmatprep.subr.mxu0 %v2341
        %v2343 = vand.u32 %v366, 4294901760
        %v2344 = vsub.f32 %v366, %v2343
        %2345 = vmatpush1.msra.mxu0 %v2344
        %v2346 = vand.u32 %v371, 4294901760
        %v2347 = vsub.f32 %v371, %v2346
        %2348 = vmatprep.subr.mxu0 %v2347
        %v2349 = vand.u32 %v370, 4294901760
        %v2350 = vsub.f32 %v370, %v2349
        %2351 = vmatpush1.msra.mxu0 %v2350
        %v2352 = vand.u32 %v375, 4294901760
        %v2353 = vsub.f32 %v375, %v2352
        %2354 = vmatprep.subr.mxu0 %v2353
        %v2355 = vand.u32 %v374, 4294901760
        %v2356 = vsub.f32 %v374, %v2355
        %2357 = vmatpush1.msra.mxu0 %v2356
        %v2358 = vand.u32 %v379, 4294901760
        %v2359 = vsub.f32 %v379, %v2358
        %2360 = vmatprep.subr.mxu0 %v2359
        %v2361 = vand.u32 %v378, 4294901760
        %v2362 = vsub.f32 %v378, %v2361
        %2363 = vmatpush1.msra.mxu0 %v2362
        %v2364 = vand.u32 %v383, 4294901760
        %v2365 = vsub.f32 %v383, %v2364
        %2366 = vmatprep.subr.mxu0 %v2365
        %v2367 = vand.u32 %v382, 4294901760
        %v2368 = vsub.f32 %v382, %v2367
        %2369 = vmatpush1.msra.mxu0 %v2368
        %v2370 = vand.u32 %v387, 4294901760
        %v2371 = vsub.f32 %v387, %v2370
        %2372 = vmatprep.subr.mxu0 %v2371
        %v2373 = vand.u32 %v386, 4294901760
        %v2374 = vsub.f32 %v386, %v2373
        %2375 = vmatpush1.msra.mxu0 %v2374
        %v2376 = vand.u32 %v391, 4294901760
        %v2377 = vsub.f32 %v391, %v2376
        %2378 = vmatprep.subr.mxu0 %v2377
        %v2379 = vand.u32 %v390, 4294901760
        %v2380 = vsub.f32 %v390, %v2379
        %2381 = vmatpush1.msra.mxu0 %v2380
        %v2382 = vand.u32 %v395, 4294901760
        %v2383 = vsub.f32 %v395, %v2382
        %2384 = vmatprep.subr.mxu0 %v2383
        %v2385 = vand.u32 %v394, 4294901760
        %v2386 = vsub.f32 %v394, %v2385
        %2387 = vmatpush1.msra.mxu0 %v2386
        %v2388 = vand.u32 %v399, 4294901760
        %v2389 = vsub.f32 %v399, %v2388
        %2390 = vmatprep.subr.mxu0 %v2389
        %v2391 = vand.u32 %v398, 4294901760
        %v2392 = vsub.f32 %v398, %v2391
        %2393 = vmatpush1.msra.mxu0 %v2392
        %v2394 = vand.u32 %v403, 4294901760
        %v2395 = vsub.f32 %v403, %v2394
        %2396 = vmatprep.subr.mxu0 %v2395
        %v2397 = vand.u32 %v402, 4294901760
        %v2398 = vsub.f32 %v402, %v2397
        %2399 = vmatpush1.msra.mxu0 %v2398
        %v2400 = vand.u32 %v407, 4294901760
        %v2401 = vsub.f32 %v407, %v2400
        %2402 = vmatprep.subr.mxu0 %v2401
        %v2403 = vand.u32 %v406, 4294901760
        %v2404 = vsub.f32 %v406, %v2403
        %2405 = vmatpush1.msra.mxu0 %v2404
        %v2406 = vand.u32 %v411, 4294901760
        %v2407 = vsub.f32 %v411, %v2406
        %2408 = vmatprep.subr.mxu0 %v2407
        %v2409 = vand.u32 %v410, 4294901760
        %v2410 = vsub.f32 %v410, %v2409
        %2411 = vmatpush1.msra.mxu0 %v2410
        %v2412 = vand.u32 %v415, 4294901760
        %v2413 = vsub.f32 %v415, %v2412
        %2414 = vmatprep.subr.mxu0 %v2413
        %v2415 = vand.u32 %v414, 4294901760
        %v2416 = vsub.f32 %v414, %v2415
        %2417 = vmatpush1.msra.mxu0 %v2416
        %v2418 = vand.u32 %v419, 4294901760
        %v2419 = vsub.f32 %v419, %v2418
        %2420 = vmatprep.subr.mxu0 %v2419
        %v2421 = vand.u32 %v418, 4294901760
        %v2422 = vsub.f32 %v418, %v2421
        %2423 = vmatpush1.msra.mxu0 %v2422
        %v2424 = vand.u32 %v423, 4294901760
        %v2425 = vsub.f32 %v423, %v2424
        %2426 = vmatprep.subr.mxu0 %v2425
        %v2427 = vand.u32 %v422, 4294901760
        %v2428 = vsub.f32 %v422, %v2427
        %2429 = vmatpush1.msra.mxu0 %v2428
        %v2430 = vand.u32 %v427, 4294901760
        %v2431 = vsub.f32 %v427, %v2430
        %2432 = vmatprep.subr.mxu0 %v2431
        %v2433 = vand.u32 %v426, 4294901760
        %v2434 = vsub.f32 %v426, %v2433
        %2435 = vmatpush1.msra.mxu0 %v2434
        %v2436 = vand.u32 %v431, 4294901760
        %v2437 = vsub.f32 %v431, %v2436
        %2438 = vmatprep.subr.mxu0 %v2437
        %v2439 = vand.u32 %v430, 4294901760
        %v2440 = vsub.f32 %v430, %v2439
        %2441 = vmatpush1.msra.mxu0 %v2440
        %v2442 = vand.u32 %v435, 4294901760
        %v2443 = vsub.f32 %v435, %v2442
        %2444 = vmatprep.subr.mxu0 %v2443
        %v2445 = vand.u32 %v434, 4294901760
        %v2446 = vsub.f32 %v434, %v2445
        %2447 = vmatpush1.msra.mxu0 %v2446
        %v2448 = vand.u32 %v439, 4294901760
        %v2449 = vsub.f32 %v439, %v2448
        %2450 = vmatprep.subr.mxu0 %v2449
        %v2451 = vand.u32 %v438, 4294901760
        %v2452 = vsub.f32 %v438, %v2451
        %2453 = vmatpush1.msra.mxu0 %v2452
        %v2454 = vand.u32 %v443, 4294901760
        %v2455 = vsub.f32 %v443, %v2454
        %2456 = vmatprep.subr.mxu0 %v2455
        %v2457 = vand.u32 %v442, 4294901760
        %v2458 = vsub.f32 %v442, %v2457
        %2459 = vmatpush1.msra.mxu0 %v2458
        %v2460 = vand.u32 %v447, 4294901760
        %v2461 = vsub.f32 %v447, %v2460
        %2462 = vmatprep.subr.mxu0 %v2461
        %v2463 = vand.u32 %v446, 4294901760
        %v2464 = vsub.f32 %v446, %v2463
        %2465 = vmatpush1.msra.mxu0 %v2464
        %v2466 = vand.u32 %v451, 4294901760
        %v2467 = vsub.f32 %v451, %v2466
        %2468 = vmatprep.subr.mxu0 %v2467
        %v2469 = vand.u32 %v450, 4294901760
        %v2470 = vsub.f32 %v450, %v2469
        %2471 = vmatpush1.msra.mxu0 %v2470
        %v2472 = vand.u32 %v455, 4294901760
        %v2473 = vsub.f32 %v455, %v2472
        %2474 = vmatprep.subr.mxu0 %v2473
        %v2475 = vand.u32 %v454, 4294901760
        %v2476 = vsub.f32 %v454, %v2475
        %2477 = vmatpush1.msra.mxu0 %v2476
        %v2478 = vand.u32 %v459, 4294901760
        %v2479 = vsub.f32 %v459, %v2478
        %2480 = vmatprep.subr.mxu0 %v2479
        %v2481 = vand.u32 %v458, 4294901760
        %v2482 = vsub.f32 %v458, %v2481
        %2483 = vmatpush1.msra.mxu0 %v2482
        %v2484 = vand.u32 %v463, 4294901760
        %v2485 = vsub.f32 %v463, %v2484
        %2486 = vmatprep.subr.mxu0 %v2485
        %v2487 = vand.u32 %v462, 4294901760
        %v2488 = vsub.f32 %v462, %v2487
        %2489 = vmatpush1.msra.mxu0 %v2488
        %v2490 = vand.u32 %v467, 4294901760
        %v2491 = vsub.f32 %v467, %v2490
        %2492 = vmatprep.subr.mxu0 %v2491
        %v2493 = vand.u32 %v466, 4294901760
        %v2494 = vsub.f32 %v466, %v2493
        %2495 = vmatpush1.msra.mxu0 %v2494
        %v2496 = vand.u32 %v471, 4294901760
        %v2497 = vsub.f32 %v471, %v2496
        %2498 = vmatprep.subr.mxu0 %v2497
        %v2499 = vand.u32 %v470, 4294901760
        %v2500 = vsub.f32 %v470, %v2499
        %2501 = vmatpush1.msra.mxu0 %v2500
        %v2502 = vand.u32 %v475, 4294901760
        %v2503 = vsub.f32 %v475, %v2502
        %2504 = vmatprep.subr.mxu0 %v2503
        %v2505 = vand.u32 %v474, 4294901760
        %v2506 = vsub.f32 %v474, %v2505
        %2507 = vmatpush1.msra.mxu0 %v2506
        %v2508 = vand.u32 %v479, 4294901760
        %v2509 = vsub.f32 %v479, %v2508
        %2510 = vmatprep.subr.mxu0 %v2509
        %v2511 = vand.u32 %v478, 4294901760
        %v2512 = vsub.f32 %v478, %v2511
        %2513 = vmatpush1.msra.mxu0 %v2512
        %v2514 = vand.u32 %v483, 4294901760
        %v2515 = vsub.f32 %v483, %v2514
        %2516 = vmatprep.subr.mxu0 %v2515
        %v2517 = vand.u32 %v482, 4294901760
        %v2518 = vsub.f32 %v482, %v2517
        %2519 = vmatpush1.msra.mxu0 %v2518
        %v2520 = vand.u32 %v487, 4294901760
        %v2521 = vsub.f32 %v487, %v2520
        %2522 = vmatprep.subr.mxu0 %v2521
        %v2523 = vand.u32 %v486, 4294901760
        %v2524 = vsub.f32 %v486, %v2523
        %2525 = vmatpush1.msra.mxu0 %v2524
        %v2526 = vand.u32 %v507, 4294901760
        %v2527 = vsub.f32 %v507, %v2526
        %2528 = vmatprep.mubr.f32.mxu0 %v2527
        %v2529 = vand.u32 %v505, 4294901760
        %v2530 = vsub.f32 %v505, %v2529
        %2531 = vmatmul.mubr.f32.gmra.mrb[0].mxu0 %v2530
        %v2532 = vpop.f32.mrb[0].mxu0
        %v2533 = vadd.f32 %v2330, %v2532
        %v2534 = vpop.f32.mrb[0].mxu0
        %v2535 = vadd.f32 %v2332, %v2534
        %2536 = vdwg.mxu0
        %v2537 = vand.u32 %v363, 4294901760
        %2538 = vmatprep.subr.mxu0 %v2537
        %v2539 = vand.u32 %v362, 4294901760
        %2540 = vmatpush1.msra.mxu0 %v2539
        %v2541 = vand.u32 %v367, 4294901760
        %2542 = vmatprep.subr.mxu0 %v2541
        %v2543 = vand.u32 %v366, 4294901760
        %2544 = vmatpush1.msra.mxu0 %v2543
        %v2545 = vand.u32 %v371, 4294901760
        %2546 = vmatprep.subr.mxu0 %v2545
        %v2547 = vand.u32 %v370, 4294901760
        %2548 = vmatpush1.msra.mxu0 %v2547
        %v2549 = vand.u32 %v375, 4294901760
        %2550 = vmatprep.subr.mxu0 %v2549
        %v2551 = vand.u32 %v374, 4294901760
        %2552 = vmatpush1.msra.mxu0 %v2551
        %v2553 = vand.u32 %v379, 4294901760
        %2554 = vmatprep.subr.mxu0 %v2553
        %v2555 = vand.u32 %v378, 4294901760
        %2556 = vmatpush1.msra.mxu0 %v2555
        %v2557 = vand.u32 %v383, 4294901760
        %2558 = vmatprep.subr.mxu0 %v2557
        %v2559 = vand.u32 %v382, 4294901760
        %2560 = vmatpush1.msra.mxu0 %v2559
        %v2561 = vand.u32 %v387, 4294901760
        %2562 = vmatprep.subr.mxu0 %v2561
        %v2563 = vand.u32 %v386, 4294901760
        %2564 = vmatpush1.msra.mxu0 %v2563
        %v2565 = vand.u32 %v391, 4294901760
        %2566 = vmatprep.subr.mxu0 %v2565
        %v2567 = vand.u32 %v390, 4294901760
        %2568 = vmatpush1.msra.mxu0 %v2567
        %v2569 = vand.u32 %v395, 4294901760
        %2570 = vmatprep.subr.mxu0 %v2569
        %v2571 = vand.u32 %v394, 4294901760
        %2572 = vmatpush1.msra.mxu0 %v2571
        %v2573 = vand.u32 %v399, 4294901760
        %2574 = vmatprep.subr.mxu0 %v2573
        %v2575 = vand.u32 %v398, 4294901760
        %2576 = vmatpush1.msra.mxu0 %v2575
        %v2577 = vand.u32 %v403, 4294901760
        %2578 = vmatprep.subr.mxu0 %v2577
        %v2579 = vand.u32 %v402, 4294901760
        %2580 = vmatpush1.msra.mxu0 %v2579
        %v2581 = vand.u32 %v407, 4294901760
        %2582 = vmatprep.subr.mxu0 %v2581
        %v2583 = vand.u32 %v406, 4294901760
        %2584 = vmatpush1.msra.mxu0 %v2583
        %v2585 = vand.u32 %v411, 4294901760
        %2586 = vmatprep.subr.mxu0 %v2585
        %v2587 = vand.u32 %v410, 4294901760
        %2588 = vmatpush1.msra.mxu0 %v2587
        %v2589 = vand.u32 %v415, 4294901760
        %2590 = vmatprep.subr.mxu0 %v2589
        %v2591 = vand.u32 %v414, 4294901760
        %2592 = vmatpush1.msra.mxu0 %v2591
        %v2593 = vand.u32 %v419, 4294901760
        %2594 = vmatprep.subr.mxu0 %v2593
        %v2595 = vand.u32 %v418, 4294901760
        %2596 = vmatpush1.msra.mxu0 %v2595
        %v2597 = vand.u32 %v423, 4294901760
        %2598 = vmatprep.subr.mxu0 %v2597
        %v2599 = vand.u32 %v422, 4294901760
        %2600 = vmatpush1.msra.mxu0 %v2599
        %v2601 = vand.u32 %v427, 4294901760
        %2602 = vmatprep.subr.mxu0 %v2601
        %v2603 = vand.u32 %v426, 4294901760
        %2604 = vmatpush1.msra.mxu0 %v2603
        %v2605 = vand.u32 %v431, 4294901760
        %2606 = vmatprep.subr.mxu0 %v2605
        %v2607 = vand.u32 %v430, 4294901760
        %2608 = vmatpush1.msra.mxu0 %v2607
        %v2609 = vand.u32 %v435, 4294901760
        %2610 = vmatprep.subr.mxu0 %v2609
        %v2611 = vand.u32 %v434, 4294901760
        %2612 = vmatpush1.msra.mxu0 %v2611
        %v2613 = vand.u32 %v439, 4294901760
        %2614 = vmatprep.subr.mxu0 %v2613
        %v2615 = vand.u32 %v438, 4294901760
        %2616 = vmatpush1.msra.mxu0 %v2615
        %v2617 = vand.u32 %v443, 4294901760
        %2618 = vmatprep.subr.mxu0 %v2617
        %v2619 = vand.u32 %v442, 4294901760
        %2620 = vmatpush1.msra.mxu0 %v2619
        %v2621 = vand.u32 %v447, 4294901760
        %2622 = vmatprep.subr.mxu0 %v2621
        %v2623 = vand.u32 %v446, 4294901760
        %2624 = vmatpush1.msra.mxu0 %v2623
        %v2625 = vand.u32 %v451, 4294901760
        %2626 = vmatprep.subr.mxu0 %v2625
        %v2627 = vand.u32 %v450, 4294901760
        %2628 = vmatpush1.msra.mxu0 %v2627
        %v2629 = vand.u32 %v455, 4294901760
        %2630 = vmatprep.subr.mxu0 %v2629
        %v2631 = vand.u32 %v454, 4294901760
        %2632 = vmatpush1.msra.mxu0 %v2631
        %v2633 = vand.u32 %v459, 4294901760
        %2634 = vmatprep.subr.mxu0 %v2633
        %v2635 = vand.u32 %v458, 4294901760
        %2636 = vmatpush1.msra.mxu0 %v2635
        %v2637 = vand.u32 %v463, 4294901760
        %2638 = vmatprep.subr.mxu0 %v2637
        %v2639 = vand.u32 %v462, 4294901760
        %2640 = vmatpush1.msra.mxu0 %v2639
        %v2641 = vand.u32 %v467, 4294901760
        %2642 = vmatprep.subr.mxu0 %v2641
        %v2643 = vand.u32 %v466, 4294901760
        %2644 = vmatpush1.msra.mxu0 %v2643
        %v2645 = vand.u32 %v471, 4294901760
        %2646 = vmatprep.subr.mxu0 %v2645
        %v2647 = vand.u32 %v470, 4294901760
        %2648 = vmatpush1.msra.mxu0 %v2647
        %v2649 = vand.u32 %v475, 4294901760
        %2650 = vmatprep.subr.mxu0 %v2649
        %v2651 = vand.u32 %v474, 4294901760
        %2652 = vmatpush1.msra.mxu0 %v2651
        %v2653 = vand.u32 %v479, 4294901760
        %2654 = vmatprep.subr.mxu0 %v2653
        %v2655 = vand.u32 %v478, 4294901760
        %2656 = vmatpush1.msra.mxu0 %v2655
        %v2657 = vand.u32 %v483, 4294901760
        %2658 = vmatprep.subr.mxu0 %v2657
        %v2659 = vand.u32 %v482, 4294901760
        %2660 = vmatpush1.msra.mxu0 %v2659
        %v2661 = vand.u32 %v487, 4294901760
        %2662 = vmatprep.subr.mxu0 %v2661
        %v2663 = vand.u32 %v486, 4294901760
        %2664 = vmatpush1.msra.mxu0 %v2663
        %v2665 = vand.u32 %v507, 4294901760
        %v2666 = vsub.f32 %v507, %v2665
        %v2667 = vand.u32 %v2666, 4294901760
        %2668 = vmatprep.mubr.f32.mxu0 %v2667
        %v2669 = vand.u32 %v505, 4294901760
        %v2670 = vsub.f32 %v505, %v2669
        %v2671 = vand.u32 %v2670, 4294901760
        %2672 = vmatmul.mubr.f32.gmra.mrb[0].mxu0 %v2671
        %v2673 = vpop.f32.mrb[0].mxu0
        %v2674 = vadd.f32 %v2533, %v2673
        %v2675 = vpop.f32.mrb[0].mxu0
        %v2676 = vadd.f32 %v2535, %v2675
        %2677 = vdwg.mxu0
        %v2678 = vand.u32 %v363, 4294901760
        %v2679 = vsub.f32 %v363, %v2678
        %v2680 = vand.u32 %v2679, 4294901760
        %2681 = vmatprep.subr.mxu0 %v2680
        %v2682 = vand.u32 %v362, 4294901760
        %v2683 = vsub.f32 %v362, %v2682
        %v2684 = vand.u32 %v2683, 4294901760
        %2685 = vmatpush1.msra.mxu0 %v2684
        %v2686 = vand.u32 %v367, 4294901760
        %v2687 = vsub.f32 %v367, %v2686
        %v2688 = vand.u32 %v2687, 4294901760
        %2689 = vmatprep.subr.mxu0 %v2688
        %v2690 = vand.u32 %v366, 4294901760
        %v2691 = vsub.f32 %v366, %v2690
        %v2692 = vand.u32 %v2691, 4294901760
        %2693 = vmatpush1.msra.mxu0 %v2692
        %v2694 = vand.u32 %v371, 4294901760
        %v2695 = vsub.f32 %v371, %v2694
        %v2696 = vand.u32 %v2695, 4294901760
        %2697 = vmatprep.subr.mxu0 %v2696
        %v2698 = vand.u32 %v370, 4294901760
        %v2699 = vsub.f32 %v370, %v2698
        %v2700 = vand.u32 %v2699, 4294901760
        %2701 = vmatpush1.msra.mxu0 %v2700
        %v2702 = vand.u32 %v375, 4294901760
        %v2703 = vsub.f32 %v375, %v2702
        %v2704 = vand.u32 %v2703, 4294901760
        %2705 = vmatprep.subr.mxu0 %v2704
        %v2706 = vand.u32 %v374, 4294901760
        %v2707 = vsub.f32 %v374, %v2706
        %v2708 = vand.u32 %v2707, 4294901760
        %2709 = vmatpush1.msra.mxu0 %v2708
        %v2710 = vand.u32 %v379, 4294901760
        %v2711 = vsub.f32 %v379, %v2710
        %v2712 = vand.u32 %v2711, 4294901760
        %2713 = vmatprep.subr.mxu0 %v2712
        %v2714 = vand.u32 %v378, 4294901760
        %v2715 = vsub.f32 %v378, %v2714
        %v2716 = vand.u32 %v2715, 4294901760
        %2717 = vmatpush1.msra.mxu0 %v2716
        %v2718 = vand.u32 %v383, 4294901760
        %v2719 = vsub.f32 %v383, %v2718
        %v2720 = vand.u32 %v2719, 4294901760
        %2721 = vmatprep.subr.mxu0 %v2720
        %v2722 = vand.u32 %v382, 4294901760
        %v2723 = vsub.f32 %v382, %v2722
        %v2724 = vand.u32 %v2723, 4294901760
        %2725 = vmatpush1.msra.mxu0 %v2724
        %v2726 = vand.u32 %v387, 4294901760
        %v2727 = vsub.f32 %v387, %v2726
        %v2728 = vand.u32 %v2727, 4294901760
        %2729 = vmatprep.subr.mxu0 %v2728
        %v2730 = vand.u32 %v386, 4294901760
        %v2731 = vsub.f32 %v386, %v2730
        %v2732 = vand.u32 %v2731, 4294901760
        %2733 = vmatpush1.msra.mxu0 %v2732
        %v2734 = vand.u32 %v391, 4294901760
        %v2735 = vsub.f32 %v391, %v2734
        %v2736 = vand.u32 %v2735, 4294901760
        %2737 = vmatprep.subr.mxu0 %v2736
        %v2738 = vand.u32 %v390, 4294901760
        %v2739 = vsub.f32 %v390, %v2738
        %v2740 = vand.u32 %v2739, 4294901760
        %2741 = vmatpush1.msra.mxu0 %v2740
        %v2742 = vand.u32 %v395, 4294901760
        %v2743 = vsub.f32 %v395, %v2742
        %v2744 = vand.u32 %v2743, 4294901760
        %2745 = vmatprep.subr.mxu0 %v2744
        %v2746 = vand.u32 %v394, 4294901760
        %v2747 = vsub.f32 %v394, %v2746
        %v2748 = vand.u32 %v2747, 4294901760
        %2749 = vmatpush1.msra.mxu0 %v2748
        %v2750 = vand.u32 %v399, 4294901760
        %v2751 = vsub.f32 %v399, %v2750
        %v2752 = vand.u32 %v2751, 4294901760
        %2753 = vmatprep.subr.mxu0 %v2752
        %v2754 = vand.u32 %v398, 4294901760
        %v2755 = vsub.f32 %v398, %v2754
        %v2756 = vand.u32 %v2755, 4294901760
        %2757 = vmatpush1.msra.mxu0 %v2756
        %v2758 = vand.u32 %v403, 4294901760
        %v2759 = vsub.f32 %v403, %v2758
        %v2760 = vand.u32 %v2759, 4294901760
        %2761 = vmatprep.subr.mxu0 %v2760
        %v2762 = vand.u32 %v402, 4294901760
        %v2763 = vsub.f32 %v402, %v2762
        %v2764 = vand.u32 %v2763, 4294901760
        %2765 = vmatpush1.msra.mxu0 %v2764
        %v2766 = vand.u32 %v407, 4294901760
        %v2767 = vsub.f32 %v407, %v2766
        %v2768 = vand.u32 %v2767, 4294901760
        %2769 = vmatprep.subr.mxu0 %v2768
        %v2770 = vand.u32 %v406, 4294901760
        %v2771 = vsub.f32 %v406, %v2770
        %v2772 = vand.u32 %v2771, 4294901760
        %2773 = vmatpush1.msra.mxu0 %v2772
        %v2774 = vand.u32 %v411, 4294901760
        %v2775 = vsub.f32 %v411, %v2774
        %v2776 = vand.u32 %v2775, 4294901760
        %2777 = vmatprep.subr.mxu0 %v2776
        %v2778 = vand.u32 %v410, 4294901760
        %v2779 = vsub.f32 %v410, %v2778
        %v2780 = vand.u32 %v2779, 4294901760
        %2781 = vmatpush1.msra.mxu0 %v2780
        %v2782 = vand.u32 %v415, 4294901760
        %v2783 = vsub.f32 %v415, %v2782
        %v2784 = vand.u32 %v2783, 4294901760
        %2785 = vmatprep.subr.mxu0 %v2784
        %v2786 = vand.u32 %v414, 4294901760
        %v2787 = vsub.f32 %v414, %v2786
        %v2788 = vand.u32 %v2787, 4294901760
        %2789 = vmatpush1.msra.mxu0 %v2788
        %v2790 = vand.u32 %v419, 4294901760
        %v2791 = vsub.f32 %v419, %v2790
        %v2792 = vand.u32 %v2791, 4294901760
        %2793 = vmatprep.subr.mxu0 %v2792
        %v2794 = vand.u32 %v418, 4294901760
        %v2795 = vsub.f32 %v418, %v2794
        %v2796 = vand.u32 %v2795, 4294901760
        %2797 = vmatpush1.msra.mxu0 %v2796
        %v2798 = vand.u32 %v423, 4294901760
        %v2799 = vsub.f32 %v423, %v2798
        %v2800 = vand.u32 %v2799, 4294901760
        %2801 = vmatprep.subr.mxu0 %v2800
        %v2802 = vand.u32 %v422, 4294901760
        %v2803 = vsub.f32 %v422, %v2802
        %v2804 = vand.u32 %v2803, 4294901760
        %2805 = vmatpush1.msra.mxu0 %v2804
        %v2806 = vand.u32 %v427, 4294901760
        %v2807 = vsub.f32 %v427, %v2806
        %v2808 = vand.u32 %v2807, 4294901760
        %2809 = vmatprep.subr.mxu0 %v2808
        %v2810 = vand.u32 %v426, 4294901760
        %v2811 = vsub.f32 %v426, %v2810
        %v2812 = vand.u32 %v2811, 4294901760
        %2813 = vmatpush1.msra.mxu0 %v2812
        %v2814 = vand.u32 %v431, 4294901760
        %v2815 = vsub.f32 %v431, %v2814
        %v2816 = vand.u32 %v2815, 4294901760
        %2817 = vmatprep.subr.mxu0 %v2816
        %v2818 = vand.u32 %v430, 4294901760
        %v2819 = vsub.f32 %v430, %v2818
        %v2820 = vand.u32 %v2819, 4294901760
        %2821 = vmatpush1.msra.mxu0 %v2820
        %v2822 = vand.u32 %v435, 4294901760
        %v2823 = vsub.f32 %v435, %v2822
        %v2824 = vand.u32 %v2823, 4294901760
        %2825 = vmatprep.subr.mxu0 %v2824
        %v2826 = vand.u32 %v434, 4294901760
        %v2827 = vsub.f32 %v434, %v2826
        %v2828 = vand.u32 %v2827, 4294901760
        %2829 = vmatpush1.msra.mxu0 %v2828
        %v2830 = vand.u32 %v439, 4294901760
        %v2831 = vsub.f32 %v439, %v2830
        %v2832 = vand.u32 %v2831, 4294901760
        %2833 = vmatprep.subr.mxu0 %v2832
        %v2834 = vand.u32 %v438, 4294901760
        %v2835 = vsub.f32 %v438, %v2834
        %v2836 = vand.u32 %v2835, 4294901760
        %2837 = vmatpush1.msra.mxu0 %v2836
        %v2838 = vand.u32 %v443, 4294901760
        %v2839 = vsub.f32 %v443, %v2838
        %v2840 = vand.u32 %v2839, 4294901760
        %2841 = vmatprep.subr.mxu0 %v2840
        %v2842 = vand.u32 %v442, 4294901760
        %v2843 = vsub.f32 %v442, %v2842
        %v2844 = vand.u32 %v2843, 4294901760
        %2845 = vmatpush1.msra.mxu0 %v2844
        %v2846 = vand.u32 %v447, 4294901760
        %v2847 = vsub.f32 %v447, %v2846
        %v2848 = vand.u32 %v2847, 4294901760
        %2849 = vmatprep.subr.mxu0 %v2848
        %v2850 = vand.u32 %v446, 4294901760
        %v2851 = vsub.f32 %v446, %v2850
        %v2852 = vand.u32 %v2851, 4294901760
        %2853 = vmatpush1.msra.mxu0 %v2852
        %v2854 = vand.u32 %v451, 4294901760
        %v2855 = vsub.f32 %v451, %v2854
        %v2856 = vand.u32 %v2855, 4294901760
        %2857 = vmatprep.subr.mxu0 %v2856
        %v2858 = vand.u32 %v450, 4294901760
        %v2859 = vsub.f32 %v450, %v2858
        %v2860 = vand.u32 %v2859, 4294901760
        %2861 = vmatpush1.msra.mxu0 %v2860
        %v2862 = vand.u32 %v455, 4294901760
        %v2863 = vsub.f32 %v455, %v2862
        %v2864 = vand.u32 %v2863, 4294901760
        %2865 = vmatprep.subr.mxu0 %v2864
        %v2866 = vand.u32 %v454, 4294901760
        %v2867 = vsub.f32 %v454, %v2866
        %v2868 = vand.u32 %v2867, 4294901760
        %2869 = vmatpush1.msra.mxu0 %v2868
        %v2870 = vand.u32 %v459, 4294901760
        %v2871 = vsub.f32 %v459, %v2870
        %v2872 = vand.u32 %v2871, 4294901760
        %2873 = vmatprep.subr.mxu0 %v2872
        %v2874 = vand.u32 %v458, 4294901760
        %v2875 = vsub.f32 %v458, %v2874
        %v2876 = vand.u32 %v2875, 4294901760
        %2877 = vmatpush1.msra.mxu0 %v2876
        %v2878 = vand.u32 %v463, 4294901760
        %v2879 = vsub.f32 %v463, %v2878
        %v2880 = vand.u32 %v2879, 4294901760
        %2881 = vmatprep.subr.mxu0 %v2880
        %v2882 = vand.u32 %v462, 4294901760
        %v2883 = vsub.f32 %v462, %v2882
        %v2884 = vand.u32 %v2883, 4294901760
        %2885 = vmatpush1.msra.mxu0 %v2884
        %v2886 = vand.u32 %v467, 4294901760
        %v2887 = vsub.f32 %v467, %v2886
        %v2888 = vand.u32 %v2887, 4294901760
        %2889 = vmatprep.subr.mxu0 %v2888
        %v2890 = vand.u32 %v466, 4294901760
        %v2891 = vsub.f32 %v466, %v2890
        %v2892 = vand.u32 %v2891, 4294901760
        %2893 = vmatpush1.msra.mxu0 %v2892
        %v2894 = vand.u32 %v471, 4294901760
        %v2895 = vsub.f32 %v471, %v2894
        %v2896 = vand.u32 %v2895, 4294901760
        %2897 = vmatprep.subr.mxu0 %v2896
        %v2898 = vand.u32 %v470, 4294901760
        %v2899 = vsub.f32 %v470, %v2898
        %v2900 = vand.u32 %v2899, 4294901760
        %2901 = vmatpush1.msra.mxu0 %v2900
        %v2902 = vand.u32 %v475, 4294901760
        %v2903 = vsub.f32 %v475, %v2902
        %v2904 = vand.u32 %v2903, 4294901760
        %2905 = vmatprep.subr.mxu0 %v2904
        %v2906 = vand.u32 %v474, 4294901760
        %v2907 = vsub.f32 %v474, %v2906
        %v2908 = vand.u32 %v2907, 4294901760
        %2909 = vmatpush1.msra.mxu0 %v2908
        %v2910 = vand.u32 %v479, 4294901760
        %v2911 = vsub.f32 %v479, %v2910
        %v2912 = vand.u32 %v2911, 4294901760
        %2913 = vmatprep.subr.mxu0 %v2912
        %v2914 = vand.u32 %v478, 4294901760
        %v2915 = vsub.f32 %v478, %v2914
        %v2916 = vand.u32 %v2915, 4294901760
        %2917 = vmatpush1.msra.mxu0 %v2916
        %v2918 = vand.u32 %v483, 4294901760
        %v2919 = vsub.f32 %v483, %v2918
        %v2920 = vand.u32 %v2919, 4294901760
        %2921 = vmatprep.subr.mxu0 %v2920
        %v2922 = vand.u32 %v482, 4294901760
        %v2923 = vsub.f32 %v482, %v2922
        %v2924 = vand.u32 %v2923, 4294901760
        %2925 = vmatpush1.msra.mxu0 %v2924
        %v2926 = vand.u32 %v487, 4294901760
        %v2927 = vsub.f32 %v487, %v2926
        %v2928 = vand.u32 %v2927, 4294901760
        %2929 = vmatprep.subr.mxu0 %v2928
        %v2930 = vand.u32 %v486, 4294901760
        %v2931 = vsub.f32 %v486, %v2930
        %v2932 = vand.u32 %v2931, 4294901760
        %2933 = vmatpush1.msra.mxu0 %v2932
        %v2934 = vand.u32 %v507, 4294901760
        %2935 = vmatprep.mubr.f32.mxu0 %v2934
        %v2936 = vand.u32 %v505, 4294901760
        %2937 = vmatmul.mubr.f32.gmra.mrb[0].mxu0 %v2936
        %v2938 = vpop.f32.mrb[0].mxu0
        %v2939 = vadd.f32 %v2674, %v2938
        %v2940 = vpop.f32.mrb[0].mxu0
        %v2941 = vadd.f32 %v2676, %v2940
        %2942 = vdwg.mxu0
        %v2943 = vand.u32 %v363, 4294901760
        %2944 = vmatprep.subr.mxu0 %v2943
        %v2945 = vand.u32 %v362, 4294901760
        %2946 = vmatpush1.msra.mxu0 %v2945
        %v2947 = vand.u32 %v367, 4294901760
        %2948 = vmatprep.subr.mxu0 %v2947
        %v2949 = vand.u32 %v366, 4294901760
        %2950 = vmatpush1.msra.mxu0 %v2949
        %v2951 = vand.u32 %v371, 4294901760
        %2952 = vmatprep.subr.mxu0 %v2951
        %v2953 = vand.u32 %v370, 4294901760
        %2954 = vmatpush1.msra.mxu0 %v2953
        %v2955 = vand.u32 %v375, 4294901760
        %2956 = vmatprep.subr.mxu0 %v2955
        %v2957 = vand.u32 %v374, 4294901760
        %2958 = vmatpush1.msra.mxu0 %v2957
        %v2959 = vand.u32 %v379, 4294901760
        %2960 = vmatprep.subr.mxu0 %v2959
        %v2961 = vand.u32 %v378, 4294901760
        %2962 = vmatpush1.msra.mxu0 %v2961
        %v2963 = vand.u32 %v383, 4294901760
        %2964 = vmatprep.subr.mxu0 %v2963
        %v2965 = vand.u32 %v382, 4294901760
        %2966 = vmatpush1.msra.mxu0 %v2965
        %v2967 = vand.u32 %v387, 4294901760
        %2968 = vmatprep.subr.mxu0 %v2967
        %v2969 = vand.u32 %v386, 4294901760
        %2970 = vmatpush1.msra.mxu0 %v2969
        %v2971 = vand.u32 %v391, 4294901760
        %2972 = vmatprep.subr.mxu0 %v2971
        %v2973 = vand.u32 %v390, 4294901760
        %2974 = vmatpush1.msra.mxu0 %v2973
        %v2975 = vand.u32 %v395, 4294901760
        %2976 = vmatprep.subr.mxu0 %v2975
        %v2977 = vand.u32 %v394, 4294901760
        %2978 = vmatpush1.msra.mxu0 %v2977
        %v2979 = vand.u32 %v399, 4294901760
        %2980 = vmatprep.subr.mxu0 %v2979
        %v2981 = vand.u32 %v398, 4294901760
        %2982 = vmatpush1.msra.mxu0 %v2981
        %v2983 = vand.u32 %v403, 4294901760
        %2984 = vmatprep.subr.mxu0 %v2983
        %v2985 = vand.u32 %v402, 4294901760
        %2986 = vmatpush1.msra.mxu0 %v2985
        %v2987 = vand.u32 %v407, 4294901760
        %2988 = vmatprep.subr.mxu0 %v2987
        %v2989 = vand.u32 %v406, 4294901760
        %2990 = vmatpush1.msra.mxu0 %v2989
        %v2991 = vand.u32 %v411, 4294901760
        %2992 = vmatprep.subr.mxu0 %v2991
        %v2993 = vand.u32 %v410, 4294901760
        %2994 = vmatpush1.msra.mxu0 %v2993
        %v2995 = vand.u32 %v415, 4294901760
        %2996 = vmatprep.subr.mxu0 %v2995
        %v2997 = vand.u32 %v414, 4294901760
        %2998 = vmatpush1.msra.mxu0 %v2997
        %v2999 = vand.u32 %v419, 4294901760
        %3000 = vmatprep.subr.mxu0 %v2999
        %v3001 = vand.u32 %v418, 4294901760
        %3002 = vmatpush1.msra.mxu0 %v3001
        %v3003 = vand.u32 %v423, 4294901760
        %3004 = vmatprep.subr.mxu0 %v3003
        %v3005 = vand.u32 %v422, 4294901760
        %3006 = vmatpush1.msra.mxu0 %v3005
        %v3007 = vand.u32 %v427, 4294901760
        %3008 = vmatprep.subr.mxu0 %v3007
        %v3009 = vand.u32 %v426, 4294901760
        %3010 = vmatpush1.msra.mxu0 %v3009
        %v3011 = vand.u32 %v431, 4294901760
        %3012 = vmatprep.subr.mxu0 %v3011
        %v3013 = vand.u32 %v430, 4294901760
        %3014 = vmatpush1.msra.mxu0 %v3013
        %v3015 = vand.u32 %v435, 4294901760
        %3016 = vmatprep.subr.mxu0 %v3015
        %v3017 = vand.u32 %v434, 4294901760
        %3018 = vmatpush1.msra.mxu0 %v3017
        %v3019 = vand.u32 %v439, 4294901760
        %3020 = vmatprep.subr.mxu0 %v3019
        %v3021 = vand.u32 %v438, 4294901760
        %3022 = vmatpush1.msra.mxu0 %v3021
        %v3023 = vand.u32 %v443, 4294901760
        %3024 = vmatprep.subr.mxu0 %v3023
        %v3025 = vand.u32 %v442, 4294901760
        %3026 = vmatpush1.msra.mxu0 %v3025
        %v3027 = vand.u32 %v447, 4294901760
        %3028 = vmatprep.subr.mxu0 %v3027
        %v3029 = vand.u32 %v446, 4294901760
        %3030 = vmatpush1.msra.mxu0 %v3029
        %v3031 = vand.u32 %v451, 4294901760
        %3032 = vmatprep.subr.mxu0 %v3031
        %v3033 = vand.u32 %v450, 4294901760
        %3034 = vmatpush1.msra.mxu0 %v3033
        %v3035 = vand.u32 %v455, 4294901760
        %3036 = vmatprep.subr.mxu0 %v3035
        %v3037 = vand.u32 %v454, 4294901760
        %3038 = vmatpush1.msra.mxu0 %v3037
        %v3039 = vand.u32 %v459, 4294901760
        %3040 = vmatprep.subr.mxu0 %v3039
        %v3041 = vand.u32 %v458, 4294901760
        %3042 = vmatpush1.msra.mxu0 %v3041
        %v3043 = vand.u32 %v463, 4294901760
        %3044 = vmatprep.subr.mxu0 %v3043
        %v3045 = vand.u32 %v462, 4294901760
        %3046 = vmatpush1.msra.mxu0 %v3045
        %v3047 = vand.u32 %v467, 4294901760
        %3048 = vmatprep.subr.mxu0 %v3047
        %v3049 = vand.u32 %v466, 4294901760
        %3050 = vmatpush1.msra.mxu0 %v3049
        %v3051 = vand.u32 %v471, 4294901760
        %3052 = vmatprep.subr.mxu0 %v3051
        %v3053 = vand.u32 %v470, 4294901760
        %3054 = vmatpush1.msra.mxu0 %v3053
        %v3055 = vand.u32 %v475, 4294901760
        %3056 = vmatprep.subr.mxu0 %v3055
        %v3057 = vand.u32 %v474, 4294901760
        %3058 = vmatpush1.msra.mxu0 %v3057
        %v3059 = vand.u32 %v479, 4294901760
        %3060 = vmatprep.subr.mxu0 %v3059
        %v3061 = vand.u32 %v478, 4294901760
        %3062 = vmatpush1.msra.mxu0 %v3061
        %v3063 = vand.u32 %v483, 4294901760
        %3064 = vmatprep.subr.mxu0 %v3063
        %v3065 = vand.u32 %v482, 4294901760
        %3066 = vmatpush1.msra.mxu0 %v3065
        %v3067 = vand.u32 %v487, 4294901760
        %3068 = vmatprep.subr.mxu0 %v3067
        %v3069 = vand.u32 %v486, 4294901760
        %3070 = vmatpush1.msra.mxu0 %v3069
        %v3071 = vand.u32 %v507, 4294901760
        %3072 = vmatprep.mubr.f32.mxu0 %v3071
        %v3073 = vand.u32 %v505, 4294901760
        %3074 = vmatmul.mubr.f32.gmra.mrb[0].mxu0 %v3073
        %v3075 = vpop.f32.mrb[0].mxu0
        %v3076 = vadd.f32 %v2939, %v3075
        %v3077 = vpop.f32.mrb[0].mxu0
        %v3078 = vadd.f32 %v2941, %v3077
        %3079 = vdwg.mxu0
        %v3080 = vand.u32 %v237, 4294901760
        %3081 = vmatprep.subr.mxu0 %v3080
        %v3082 = vand.u32 %v236, 4294901760
        %3083 = vmatpush1.msra.mxu0 %v3082
        %v3084 = vand.u32 %v241, 4294901760
        %3085 = vmatprep.subr.mxu0 %v3084
        %v3086 = vand.u32 %v240, 4294901760
        %3087 = vmatpush1.msra.mxu0 %v3086
        %v3088 = vand.u32 %v245, 4294901760
        %3089 = vmatprep.subr.mxu0 %v3088
        %v3090 = vand.u32 %v244, 4294901760
        %3091 = vmatpush1.msra.mxu0 %v3090
        %v3092 = vand.u32 %v249, 4294901760
        %3093 = vmatprep.subr.mxu0 %v3092
        %v3094 = vand.u32 %v248, 4294901760
        %3095 = vmatpush1.msra.mxu0 %v3094
        %v3096 = vand.u32 %v253, 4294901760
        %3097 = vmatprep.subr.mxu0 %v3096
        %v3098 = vand.u32 %v252, 4294901760
        %3099 = vmatpush1.msra.mxu0 %v3098
        %v3100 = vand.u32 %v257, 4294901760
        %3101 = vmatprep.subr.mxu0 %v3100
        %v3102 = vand.u32 %v256, 4294901760
        %3103 = vmatpush1.msra.mxu0 %v3102
        %v3104 = vand.u32 %v261, 4294901760
        %3105 = vmatprep.subr.mxu0 %v3104
        %v3106 = vand.u32 %v260, 4294901760
        %3107 = vmatpush1.msra.mxu0 %v3106
        %v3108 = vand.u32 %v265, 4294901760
        %3109 = vmatprep.subr.mxu0 %v3108
        %v3110 = vand.u32 %v264, 4294901760
        %3111 = vmatpush1.msra.mxu0 %v3110
        %v3112 = vand.u32 %v269, 4294901760
        %3113 = vmatprep.subr.mxu0 %v3112
        %v3114 = vand.u32 %v268, 4294901760
        %3115 = vmatpush1.msra.mxu0 %v3114
        %v3116 = vand.u32 %v273, 4294901760
        %3117 = vmatprep.subr.mxu0 %v3116
        %v3118 = vand.u32 %v272, 4294901760
        %3119 = vmatpush1.msra.mxu0 %v3118
        %v3120 = vand.u32 %v277, 4294901760
        %3121 = vmatprep.subr.mxu0 %v3120
        %v3122 = vand.u32 %v276, 4294901760
        %3123 = vmatpush1.msra.mxu0 %v3122
        %v3124 = vand.u32 %v281, 4294901760
        %3125 = vmatprep.subr.mxu0 %v3124
        %v3126 = vand.u32 %v280, 4294901760
        %3127 = vmatpush1.msra.mxu0 %v3126
        %v3128 = vand.u32 %v285, 4294901760
        %3129 = vmatprep.subr.mxu0 %v3128
        %v3130 = vand.u32 %v284, 4294901760
        %3131 = vmatpush1.msra.mxu0 %v3130
        %v3132 = vand.u32 %v289, 4294901760
        %3133 = vmatprep.subr.mxu0 %v3132
        %v3134 = vand.u32 %v288, 4294901760
        %3135 = vmatpush1.msra.mxu0 %v3134
        %v3136 = vand.u32 %v293, 4294901760
        %3137 = vmatprep.subr.mxu0 %v3136
        %v3138 = vand.u32 %v292, 4294901760
        %3139 = vmatpush1.msra.mxu0 %v3138
        %v3140 = vand.u32 %v297, 4294901760
        %3141 = vmatprep.subr.mxu0 %v3140
        %v3142 = vand.u32 %v296, 4294901760
        %3143 = vmatpush1.msra.mxu0 %v3142
        %v3144 = vand.u32 %v301, 4294901760
        %3145 = vmatprep.subr.mxu0 %v3144
        %v3146 = vand.u32 %v300, 4294901760
        %3147 = vmatpush1.msra.mxu0 %v3146
        %v3148 = vand.u32 %v305, 4294901760
        %3149 = vmatprep.subr.mxu0 %v3148
        %v3150 = vand.u32 %v304, 4294901760
        %3151 = vmatpush1.msra.mxu0 %v3150
        %v3152 = vand.u32 %v309, 4294901760
        %3153 = vmatprep.subr.mxu0 %v3152
        %v3154 = vand.u32 %v308, 4294901760
        %3155 = vmatpush1.msra.mxu0 %v3154
        %v3156 = vand.u32 %v313, 4294901760
        %3157 = vmatprep.subr.mxu0 %v3156
        %v3158 = vand.u32 %v312, 4294901760
        %3159 = vmatpush1.msra.mxu0 %v3158
        %v3160 = vand.u32 %v317, 4294901760
        %3161 = vmatprep.subr.mxu0 %v3160
        %v3162 = vand.u32 %v316, 4294901760
        %3163 = vmatpush1.msra.mxu0 %v3162
        %v3164 = vand.u32 %v321, 4294901760
        %3165 = vmatprep.subr.mxu0 %v3164
        %v3166 = vand.u32 %v320, 4294901760
        %3167 = vmatpush1.msra.mxu0 %v3166
        %v3168 = vand.u32 %v325, 4294901760
        %3169 = vmatprep.subr.mxu0 %v3168
        %v3170 = vand.u32 %v324, 4294901760
        %3171 = vmatpush1.msra.mxu0 %v3170
        %v3172 = vand.u32 %v329, 4294901760
        %3173 = vmatprep.subr.mxu0 %v3172
        %v3174 = vand.u32 %v328, 4294901760
        %3175 = vmatpush1.msra.mxu0 %v3174
        %v3176 = vand.u32 %v333, 4294901760
        %3177 = vmatprep.subr.mxu0 %v3176
        %v3178 = vand.u32 %v332, 4294901760
        %3179 = vmatpush1.msra.mxu0 %v3178
        %v3180 = vand.u32 %v337, 4294901760
        %3181 = vmatprep.subr.mxu0 %v3180
        %v3182 = vand.u32 %v336, 4294901760
        %3183 = vmatpush1.msra.mxu0 %v3182
        %v3184 = vand.u32 %v341, 4294901760
        %3185 = vmatprep.subr.mxu0 %v3184
        %v3186 = vand.u32 %v340, 4294901760
        %3187 = vmatpush1.msra.mxu0 %v3186
        %v3188 = vand.u32 %v345, 4294901760
        %3189 = vmatprep.subr.mxu0 %v3188
        %v3190 = vand.u32 %v344, 4294901760
        %3191 = vmatpush1.msra.mxu0 %v3190
        %v3192 = vand.u32 %v349, 4294901760
        %3193 = vmatprep.subr.mxu0 %v3192
        %v3194 = vand.u32 %v348, 4294901760
        %3195 = vmatpush1.msra.mxu0 %v3194
        %v3196 = vand.u32 %v353, 4294901760
        %3197 = vmatprep.subr.mxu0 %v3196
        %v3198 = vand.u32 %v352, 4294901760
        %3199 = vmatpush1.msra.mxu0 %v3198
        %v3200 = vand.u32 %v357, 4294901760
        %3201 = vmatprep.subr.mxu0 %v3200
        %v3202 = vand.u32 %v356, 4294901760
        %3203 = vmatpush1.msra.mxu0 %v3202
        %v3204 = vand.u32 %v361, 4294901760
        %3205 = vmatprep.subr.mxu0 %v3204
        %v3206 = vand.u32 %v360, 4294901760
        %3207 = vmatpush1.msra.mxu0 %v3206
        %v3208 = vand.u32 %v506, 4294901760
        %v3209 = vsub.f32 %v506, %v3208
        %v3210 = vand.u32 %v3209, 4294901760
        %v3211 = vsub.f32 %v3209, %v3210
        %v3212 = vand.u32 %v3211, 4294901760
        %3213 = vmatprep.mubr.f32.mxu0 %v3212
        %v3214 = vand.u32 %v498, 4294901760
        %v3215 = vsub.f32 %v498, %v3214
        %v3216 = vand.u32 %v3215, 4294901760
        %v3217 = vsub.f32 %v3215, %v3216
        %v3218 = vand.u32 %v3217, 4294901760
        %3219 = vmatmul.mubr.f32.gmra.mrb[0].mxu0 %v3218
        %v3220 = vpop.f32.mrb[0].mxu0
        %v3221 = vadd.f32 0.0, %v3220
        %v3222 = vpop.f32.mrb[0].mxu0
        %v3223 = vadd.f32 0.0, %v3222
        %3224 = vdwg.mxu0
        %v3225 = vand.u32 %v237, 4294901760
        %v3226 = vsub.f32 %v237, %v3225
        %v3227 = vand.u32 %v3226, 4294901760
        %v3228 = vsub.f32 %v3226, %v3227
        %v3229 = vand.u32 %v3228, 4294901760
        %3230 = vmatprep.subr.mxu0 %v3229
        %v3231 = vand.u32 %v236, 4294901760
        %v3232 = vsub.f32 %v236, %v3231
        %v3233 = vand.u32 %v3232, 4294901760
        %v3234 = vsub.f32 %v3232, %v3233
        %v3235 = vand.u32 %v3234, 4294901760
        %3236 = vmatpush1.msra.mxu0 %v3235
        %v3237 = vand.u32 %v241, 4294901760
        %v3238 = vsub.f32 %v241, %v3237
        %v3239 = vand.u32 %v3238, 4294901760
        %v3240 = vsub.f32 %v3238, %v3239
        %v3241 = vand.u32 %v3240, 4294901760
        %3242 = vmatprep.subr.mxu0 %v3241
        %v3243 = vand.u32 %v240, 4294901760
        %v3244 = vsub.f32 %v240, %v3243
        %v3245 = vand.u32 %v3244, 4294901760
        %v3246 = vsub.f32 %v3244, %v3245
        %v3247 = vand.u32 %v3246, 4294901760
        %3248 = vmatpush1.msra.mxu0 %v3247
        %v3249 = vand.u32 %v245, 4294901760
        %v3250 = vsub.f32 %v245, %v3249
        %v3251 = vand.u32 %v3250, 4294901760
        %v3252 = vsub.f32 %v3250, %v3251
        %v3253 = vand.u32 %v3252, 4294901760
        %3254 = vmatprep.subr.mxu0 %v3253
        %v3255 = vand.u32 %v244, 4294901760
        %v3256 = vsub.f32 %v244, %v3255
        %v3257 = vand.u32 %v3256, 4294901760
        %v3258 = vsub.f32 %v3256, %v3257
        %v3259 = vand.u32 %v3258, 4294901760
        %3260 = vmatpush1.msra.mxu0 %v3259
        %v3261 = vand.u32 %v249, 4294901760
        %v3262 = vsub.f32 %v249, %v3261
        %v3263 = vand.u32 %v3262, 4294901760
        %v3264 = vsub.f32 %v3262, %v3263
        %v3265 = vand.u32 %v3264, 4294901760
        %3266 = vmatprep.subr.mxu0 %v3265
        %v3267 = vand.u32 %v248, 4294901760
        %v3268 = vsub.f32 %v248, %v3267
        %v3269 = vand.u32 %v3268, 4294901760
        %v3270 = vsub.f32 %v3268, %v3269
        %v3271 = vand.u32 %v3270, 4294901760
        %3272 = vmatpush1.msra.mxu0 %v3271
        %v3273 = vand.u32 %v253, 4294901760
        %v3274 = vsub.f32 %v253, %v3273
        %v3275 = vand.u32 %v3274, 4294901760
        %v3276 = vsub.f32 %v3274, %v3275
        %v3277 = vand.u32 %v3276, 4294901760
        %3278 = vmatprep.subr.mxu0 %v3277
        %v3279 = vand.u32 %v252, 4294901760
        %v3280 = vsub.f32 %v252, %v3279
        %v3281 = vand.u32 %v3280, 4294901760
        %v3282 = vsub.f32 %v3280, %v3281
        %v3283 = vand.u32 %v3282, 4294901760
        %3284 = vmatpush1.msra.mxu0 %v3283
        %v3285 = vand.u32 %v257, 4294901760
        %v3286 = vsub.f32 %v257, %v3285
        %v3287 = vand.u32 %v3286, 4294901760
        %v3288 = vsub.f32 %v3286, %v3287
        %v3289 = vand.u32 %v3288, 4294901760
        %3290 = vmatprep.subr.mxu0 %v3289
        %v3291 = vand.u32 %v256, 4294901760
        %v3292 = vsub.f32 %v256, %v3291
        %v3293 = vand.u32 %v3292, 4294901760
        %v3294 = vsub.f32 %v3292, %v3293
        %v3295 = vand.u32 %v3294, 4294901760
        %3296 = vmatpush1.msra.mxu0 %v3295
        %v3297 = vand.u32 %v261, 4294901760
        %v3298 = vsub.f32 %v261, %v3297
        %v3299 = vand.u32 %v3298, 4294901760
        %v3300 = vsub.f32 %v3298, %v3299
        %v3301 = vand.u32 %v3300, 4294901760
        %3302 = vmatprep.subr.mxu0 %v3301
        %v3303 = vand.u32 %v260, 4294901760
        %v3304 = vsub.f32 %v260, %v3303
        %v3305 = vand.u32 %v3304, 4294901760
        %v3306 = vsub.f32 %v3304, %v3305
        %v3307 = vand.u32 %v3306, 4294901760
        %3308 = vmatpush1.msra.mxu0 %v3307
        %v3309 = vand.u32 %v265, 4294901760
        %v3310 = vsub.f32 %v265, %v3309
        %v3311 = vand.u32 %v3310, 4294901760
        %v3312 = vsub.f32 %v3310, %v3311
        %v3313 = vand.u32 %v3312, 4294901760
        %3314 = vmatprep.subr.mxu0 %v3313
        %v3315 = vand.u32 %v264, 4294901760
        %v3316 = vsub.f32 %v264, %v3315
        %v3317 = vand.u32 %v3316, 4294901760
        %v3318 = vsub.f32 %v3316, %v3317
        %v3319 = vand.u32 %v3318, 4294901760
        %3320 = vmatpush1.msra.mxu0 %v3319
        %v3321 = vand.u32 %v269, 4294901760
        %v3322 = vsub.f32 %v269, %v3321
        %v3323 = vand.u32 %v3322, 4294901760
        %v3324 = vsub.f32 %v3322, %v3323
        %v3325 = vand.u32 %v3324, 4294901760
        %3326 = vmatprep.subr.mxu0 %v3325
        %v3327 = vand.u32 %v268, 4294901760
        %v3328 = vsub.f32 %v268, %v3327
        %v3329 = vand.u32 %v3328, 4294901760
        %v3330 = vsub.f32 %v3328, %v3329
        %v3331 = vand.u32 %v3330, 4294901760
        %3332 = vmatpush1.msra.mxu0 %v3331
        %v3333 = vand.u32 %v273, 4294901760
        %v3334 = vsub.f32 %v273, %v3333
        %v3335 = vand.u32 %v3334, 4294901760
        %v3336 = vsub.f32 %v3334, %v3335
        %v3337 = vand.u32 %v3336, 4294901760
        %3338 = vmatprep.subr.mxu0 %v3337
        %v3339 = vand.u32 %v272, 4294901760
        %v3340 = vsub.f32 %v272, %v3339
        %v3341 = vand.u32 %v3340, 4294901760
        %v3342 = vsub.f32 %v3340, %v3341
        %v3343 = vand.u32 %v3342, 4294901760
        %3344 = vmatpush1.msra.mxu0 %v3343
        %v3345 = vand.u32 %v277, 4294901760
        %v3346 = vsub.f32 %v277, %v3345
        %v3347 = vand.u32 %v3346, 4294901760
        %v3348 = vsub.f32 %v3346, %v3347
        %v3349 = vand.u32 %v3348, 4294901760
        %3350 = vmatprep.subr.mxu0 %v3349
        %v3351 = vand.u32 %v276, 4294901760
        %v3352 = vsub.f32 %v276, %v3351
        %v3353 = vand.u32 %v3352, 4294901760
        %v3354 = vsub.f32 %v3352, %v3353
        %v3355 = vand.u32 %v3354, 4294901760
        %3356 = vmatpush1.msra.mxu0 %v3355
        %v3357 = vand.u32 %v281, 4294901760
        %v3358 = vsub.f32 %v281, %v3357
        %v3359 = vand.u32 %v3358, 4294901760
        %v3360 = vsub.f32 %v3358, %v3359
        %v3361 = vand.u32 %v3360, 4294901760
        %3362 = vmatprep.subr.mxu0 %v3361
        %v3363 = vand.u32 %v280, 4294901760
        %v3364 = vsub.f32 %v280, %v3363
        %v3365 = vand.u32 %v3364, 4294901760
        %v3366 = vsub.f32 %v3364, %v3365
        %v3367 = vand.u32 %v3366, 4294901760
        %3368 = vmatpush1.msra.mxu0 %v3367
        %v3369 = vand.u32 %v285, 4294901760
        %v3370 = vsub.f32 %v285, %v3369
        %v3371 = vand.u32 %v3370, 4294901760
        %v3372 = vsub.f32 %v3370, %v3371
        %v3373 = vand.u32 %v3372, 4294901760
        %3374 = vmatprep.subr.mxu0 %v3373
        %v3375 = vand.u32 %v284, 4294901760
        %v3376 = vsub.f32 %v284, %v3375
        %v3377 = vand.u32 %v3376, 4294901760
        %v3378 = vsub.f32 %v3376, %v3377
        %v3379 = vand.u32 %v3378, 4294901760
        %3380 = vmatpush1.msra.mxu0 %v3379
        %v3381 = vand.u32 %v289, 4294901760
        %v3382 = vsub.f32 %v289, %v3381
        %v3383 = vand.u32 %v3382, 4294901760
        %v3384 = vsub.f32 %v3382, %v3383
        %v3385 = vand.u32 %v3384, 4294901760
        %3386 = vmatprep.subr.mxu0 %v3385
        %v3387 = vand.u32 %v288, 4294901760
        %v3388 = vsub.f32 %v288, %v3387
        %v3389 = vand.u32 %v3388, 4294901760
        %v3390 = vsub.f32 %v3388, %v3389
        %v3391 = vand.u32 %v3390, 4294901760
        %3392 = vmatpush1.msra.mxu0 %v3391
        %v3393 = vand.u32 %v293, 4294901760
        %v3394 = vsub.f32 %v293, %v3393
        %v3395 = vand.u32 %v3394, 4294901760
        %v3396 = vsub.f32 %v3394, %v3395
        %v3397 = vand.u32 %v3396, 4294901760
        %3398 = vmatprep.subr.mxu0 %v3397
        %v3399 = vand.u32 %v292, 4294901760
        %v3400 = vsub.f32 %v292, %v3399
        %v3401 = vand.u32 %v3400, 4294901760
        %v3402 = vsub.f32 %v3400, %v3401
        %v3403 = vand.u32 %v3402, 4294901760
        %3404 = vmatpush1.msra.mxu0 %v3403
        %v3405 = vand.u32 %v297, 4294901760
        %v3406 = vsub.f32 %v297, %v3405
        %v3407 = vand.u32 %v3406, 4294901760
        %v3408 = vsub.f32 %v3406, %v3407
        %v3409 = vand.u32 %v3408, 4294901760
        %3410 = vmatprep.subr.mxu0 %v3409
        %v3411 = vand.u32 %v296, 4294901760
        %v3412 = vsub.f32 %v296, %v3411
        %v3413 = vand.u32 %v3412, 4294901760
        %v3414 = vsub.f32 %v3412, %v3413
        %v3415 = vand.u32 %v3414, 4294901760
        %3416 = vmatpush1.msra.mxu0 %v3415
        %v3417 = vand.u32 %v301, 4294901760
        %v3418 = vsub.f32 %v301, %v3417
        %v3419 = vand.u32 %v3418, 4294901760
        %v3420 = vsub.f32 %v3418, %v3419
        %v3421 = vand.u32 %v3420, 4294901760
        %3422 = vmatprep.subr.mxu0 %v3421
        %v3423 = vand.u32 %v300, 4294901760
        %v3424 = vsub.f32 %v300, %v3423
        %v3425 = vand.u32 %v3424, 4294901760
        %v3426 = vsub.f32 %v3424, %v3425
        %v3427 = vand.u32 %v3426, 4294901760
        %3428 = vmatpush1.msra.mxu0 %v3427
        %v3429 = vand.u32 %v305, 4294901760
        %v3430 = vsub.f32 %v305, %v3429
        %v3431 = vand.u32 %v3430, 4294901760
        %v3432 = vsub.f32 %v3430, %v3431
        %v3433 = vand.u32 %v3432, 4294901760
        %3434 = vmatprep.subr.mxu0 %v3433
        %v3435 = vand.u32 %v304, 4294901760
        %v3436 = vsub.f32 %v304, %v3435
        %v3437 = vand.u32 %v3436, 4294901760
        %v3438 = vsub.f32 %v3436, %v3437
        %v3439 = vand.u32 %v3438, 4294901760
        %3440 = vmatpush1.msra.mxu0 %v3439
        %v3441 = vand.u32 %v309, 4294901760
        %v3442 = vsub.f32 %v309, %v3441
        %v3443 = vand.u32 %v3442, 4294901760
        %v3444 = vsub.f32 %v3442, %v3443
        %v3445 = vand.u32 %v3444, 4294901760
        %3446 = vmatprep.subr.mxu0 %v3445
        %v3447 = vand.u32 %v308, 4294901760
        %v3448 = vsub.f32 %v308, %v3447
        %v3449 = vand.u32 %v3448, 4294901760
        %v3450 = vsub.f32 %v3448, %v3449
        %v3451 = vand.u32 %v3450, 4294901760
        %3452 = vmatpush1.msra.mxu0 %v3451
        %v3453 = vand.u32 %v313, 4294901760
        %v3454 = vsub.f32 %v313, %v3453
        %v3455 = vand.u32 %v3454, 4294901760
        %v3456 = vsub.f32 %v3454, %v3455
        %v3457 = vand.u32 %v3456, 4294901760
        %3458 = vmatprep.subr.mxu0 %v3457
        %v3459 = vand.u32 %v312, 4294901760
        %v3460 = vsub.f32 %v312, %v3459
        %v3461 = vand.u32 %v3460, 4294901760
        %v3462 = vsub.f32 %v3460, %v3461
        %v3463 = vand.u32 %v3462, 4294901760
        %3464 = vmatpush1.msra.mxu0 %v3463
        %v3465 = vand.u32 %v317, 4294901760
        %v3466 = vsub.f32 %v317, %v3465
        %v3467 = vand.u32 %v3466, 4294901760
        %v3468 = vsub.f32 %v3466, %v3467
        %v3469 = vand.u32 %v3468, 4294901760
        %3470 = vmatprep.subr.mxu0 %v3469
        %v3471 = vand.u32 %v316, 4294901760
        %v3472 = vsub.f32 %v316, %v3471
        %v3473 = vand.u32 %v3472, 4294901760
        %v3474 = vsub.f32 %v3472, %v3473
        %v3475 = vand.u32 %v3474, 4294901760
        %3476 = vmatpush1.msra.mxu0 %v3475
        %v3477 = vand.u32 %v321, 4294901760
        %v3478 = vsub.f32 %v321, %v3477
        %v3479 = vand.u32 %v3478, 4294901760
        %v3480 = vsub.f32 %v3478, %v3479
        %v3481 = vand.u32 %v3480, 4294901760
        %3482 = vmatprep.subr.mxu0 %v3481
        %v3483 = vand.u32 %v320, 4294901760
        %v3484 = vsub.f32 %v320, %v3483
        %v3485 = vand.u32 %v3484, 4294901760
        %v3486 = vsub.f32 %v3484, %v3485
        %v3487 = vand.u32 %v3486, 4294901760
        %3488 = vmatpush1.msra.mxu0 %v3487
        %v3489 = vand.u32 %v325, 4294901760
        %v3490 = vsub.f32 %v325, %v3489
        %v3491 = vand.u32 %v3490, 4294901760
        %v3492 = vsub.f32 %v3490, %v3491
        %v3493 = vand.u32 %v3492, 4294901760
        %3494 = vmatprep.subr.mxu0 %v3493
        %v3495 = vand.u32 %v324, 4294901760
        %v3496 = vsub.f32 %v324, %v3495
        %v3497 = vand.u32 %v3496, 4294901760
        %v3498 = vsub.f32 %v3496, %v3497
        %v3499 = vand.u32 %v3498, 4294901760
        %3500 = vmatpush1.msra.mxu0 %v3499
        %v3501 = vand.u32 %v329, 4294901760
        %v3502 = vsub.f32 %v329, %v3501
        %v3503 = vand.u32 %v3502, 4294901760
        %v3504 = vsub.f32 %v3502, %v3503
        %v3505 = vand.u32 %v3504, 4294901760
        %3506 = vmatprep.subr.mxu0 %v3505
        %v3507 = vand.u32 %v328, 4294901760
        %v3508 = vsub.f32 %v328, %v3507
        %v3509 = vand.u32 %v3508, 4294901760
        %v3510 = vsub.f32 %v3508, %v3509
        %v3511 = vand.u32 %v3510, 4294901760
        %3512 = vmatpush1.msra.mxu0 %v3511
        %v3513 = vand.u32 %v333, 4294901760
        %v3514 = vsub.f32 %v333, %v3513
        %v3515 = vand.u32 %v3514, 4294901760
        %v3516 = vsub.f32 %v3514, %v3515
        %v3517 = vand.u32 %v3516, 4294901760
        %3518 = vmatprep.subr.mxu0 %v3517
        %v3519 = vand.u32 %v332, 4294901760
        %v3520 = vsub.f32 %v332, %v3519
        %v3521 = vand.u32 %v3520, 4294901760
        %v3522 = vsub.f32 %v3520, %v3521
        %v3523 = vand.u32 %v3522, 4294901760
        %3524 = vmatpush1.msra.mxu0 %v3523
        %v3525 = vand.u32 %v337, 4294901760
        %v3526 = vsub.f32 %v337, %v3525
        %v3527 = vand.u32 %v3526, 4294901760
        %v3528 = vsub.f32 %v3526, %v3527
        %v3529 = vand.u32 %v3528, 4294901760
        %3530 = vmatprep.subr.mxu0 %v3529
        %v3531 = vand.u32 %v336, 4294901760
        %v3532 = vsub.f32 %v336, %v3531
        %v3533 = vand.u32 %v3532, 4294901760
        %v3534 = vsub.f32 %v3532, %v3533
        %v3535 = vand.u32 %v3534, 4294901760
        %3536 = vmatpush1.msra.mxu0 %v3535
        %v3537 = vand.u32 %v341, 4294901760
        %v3538 = vsub.f32 %v341, %v3537
        %v3539 = vand.u32 %v3538, 4294901760
        %v3540 = vsub.f32 %v3538, %v3539
        %v3541 = vand.u32 %v3540, 4294901760
        %3542 = vmatprep.subr.mxu0 %v3541
        %v3543 = vand.u32 %v340, 4294901760
        %v3544 = vsub.f32 %v340, %v3543
        %v3545 = vand.u32 %v3544, 4294901760
        %v3546 = vsub.f32 %v3544, %v3545
        %v3547 = vand.u32 %v3546, 4294901760
        %3548 = vmatpush1.msra.mxu0 %v3547
        %v3549 = vand.u32 %v345, 4294901760
        %v3550 = vsub.f32 %v345, %v3549
        %v3551 = vand.u32 %v3550, 4294901760
        %v3552 = vsub.f32 %v3550, %v3551
        %v3553 = vand.u32 %v3552, 4294901760
        %3554 = vmatprep.subr.mxu0 %v3553
        %v3555 = vand.u32 %v344, 4294901760
        %v3556 = vsub.f32 %v344, %v3555
        %v3557 = vand.u32 %v3556, 4294901760
        %v3558 = vsub.f32 %v3556, %v3557
        %v3559 = vand.u32 %v3558, 4294901760
        %3560 = vmatpush1.msra.mxu0 %v3559
        %v3561 = vand.u32 %v349, 4294901760
        %v3562 = vsub.f32 %v349, %v3561
        %v3563 = vand.u32 %v3562, 4294901760
        %v3564 = vsub.f32 %v3562, %v3563
        %v3565 = vand.u32 %v3564, 4294901760
        %3566 = vmatprep.subr.mxu0 %v3565
        %v3567 = vand.u32 %v348, 4294901760
        %v3568 = vsub.f32 %v348, %v3567
        %v3569 = vand.u32 %v3568, 4294901760
        %v3570 = vsub.f32 %v3568, %v3569
        %v3571 = vand.u32 %v3570, 4294901760
        %3572 = vmatpush1.msra.mxu0 %v3571
        %v3573 = vand.u32 %v353, 4294901760
        %v3574 = vsub.f32 %v353, %v3573
        %v3575 = vand.u32 %v3574, 4294901760
        %v3576 = vsub.f32 %v3574, %v3575
        %v3577 = vand.u32 %v3576, 4294901760
        %3578 = vmatprep.subr.mxu0 %v3577
        %v3579 = vand.u32 %v352, 4294901760
        %v3580 = vsub.f32 %v352, %v3579
        %v3581 = vand.u32 %v3580, 4294901760
        %v3582 = vsub.f32 %v3580, %v3581
        %v3583 = vand.u32 %v3582, 4294901760
        %3584 = vmatpush1.msra.mxu0 %v3583
        %v3585 = vand.u32 %v357, 4294901760
        %v3586 = vsub.f32 %v357, %v3585
        %v3587 = vand.u32 %v3586, 4294901760
        %v3588 = vsub.f32 %v3586, %v3587
        %v3589 = vand.u32 %v3588, 4294901760
        %3590 = vmatprep.subr.mxu0 %v3589
        %v3591 = vand.u32 %v356, 4294901760
        %v3592 = vsub.f32 %v356, %v3591
        %v3593 = vand.u32 %v3592, 4294901760
        %v3594 = vsub.f32 %v3592, %v3593
        %v3595 = vand.u32 %v3594, 4294901760
        %3596 = vmatpush1.msra.mxu0 %v3595
        %v3597 = vand.u32 %v361, 4294901760
        %v3598 = vsub.f32 %v361, %v3597
        %v3599 = vand.u32 %v3598, 4294901760
        %v3600 = vsub.f32 %v3598, %v3599
        %v3601 = vand.u32 %v3600, 4294901760
        %3602 = vmatprep.subr.mxu0 %v3601
        %v3603 = vand.u32 %v360, 4294901760
        %v3604 = vsub.f32 %v360, %v3603
        %v3605 = vand.u32 %v3604, 4294901760
        %v3606 = vsub.f32 %v3604, %v3605
        %v3607 = vand.u32 %v3606, 4294901760
        %3608 = vmatpush1.msra.mxu0 %v3607
        %v3609 = vand.u32 %v506, 4294901760
        %3610 = vmatprep.mubr.f32.mxu0 %v3609
        %v3611 = vand.u32 %v498, 4294901760
        %3612 = vmatmul.mubr.f32.gmra.mrb[0].mxu0 %v3611
        %v3613 = vpop.f32.mrb[0].mxu0
        %v3614 = vadd.f32 %v3221, %v3613
        %v3615 = vpop.f32.mrb[0].mxu0
        %v3616 = vadd.f32 %v3223, %v3615
        %3617 = vdwg.mxu0
        %v3618 = vand.u32 %v237, 4294901760
        %v3619 = vsub.f32 %v237, %v3618
        %3620 = vmatprep.subr.mxu0 %v3619
        %v3621 = vand.u32 %v236, 4294901760
        %v3622 = vsub.f32 %v236, %v3621
        %3623 = vmatpush1.msra.mxu0 %v3622
        %v3624 = vand.u32 %v241, 4294901760
        %v3625 = vsub.f32 %v241, %v3624
        %3626 = vmatprep.subr.mxu0 %v3625
        %v3627 = vand.u32 %v240, 4294901760
        %v3628 = vsub.f32 %v240, %v3627
        %3629 = vmatpush1.msra.mxu0 %v3628
        %v3630 = vand.u32 %v245, 4294901760
        %v3631 = vsub.f32 %v245, %v3630
        %3632 = vmatprep.subr.mxu0 %v3631
        %v3633 = vand.u32 %v244, 4294901760
        %v3634 = vsub.f32 %v244, %v3633
        %3635 = vmatpush1.msra.mxu0 %v3634
        %v3636 = vand.u32 %v249, 4294901760
        %v3637 = vsub.f32 %v249, %v3636
        %3638 = vmatprep.subr.mxu0 %v3637
        %v3639 = vand.u32 %v248, 4294901760
        %v3640 = vsub.f32 %v248, %v3639
        %3641 = vmatpush1.msra.mxu0 %v3640
        %v3642 = vand.u32 %v253, 4294901760
        %v3643 = vsub.f32 %v253, %v3642
        %3644 = vmatprep.subr.mxu0 %v3643
        %v3645 = vand.u32 %v252, 4294901760
        %v3646 = vsub.f32 %v252, %v3645
        %3647 = vmatpush1.msra.mxu0 %v3646
        %v3648 = vand.u32 %v257, 4294901760
        %v3649 = vsub.f32 %v257, %v3648
        %3650 = vmatprep.subr.mxu0 %v3649
        %v3651 = vand.u32 %v256, 4294901760
        %v3652 = vsub.f32 %v256, %v3651
        %3653 = vmatpush1.msra.mxu0 %v3652
        %v3654 = vand.u32 %v261, 4294901760
        %v3655 = vsub.f32 %v261, %v3654
        %3656 = vmatprep.subr.mxu0 %v3655
        %v3657 = vand.u32 %v260, 4294901760
        %v3658 = vsub.f32 %v260, %v3657
        %3659 = vmatpush1.msra.mxu0 %v3658
        %v3660 = vand.u32 %v265, 4294901760
        %v3661 = vsub.f32 %v265, %v3660
        %3662 = vmatprep.subr.mxu0 %v3661
        %v3663 = vand.u32 %v264, 4294901760
        %v3664 = vsub.f32 %v264, %v3663
        %3665 = vmatpush1.msra.mxu0 %v3664
        %v3666 = vand.u32 %v269, 4294901760
        %v3667 = vsub.f32 %v269, %v3666
        %3668 = vmatprep.subr.mxu0 %v3667
        %v3669 = vand.u32 %v268, 4294901760
        %v3670 = vsub.f32 %v268, %v3669
        %3671 = vmatpush1.msra.mxu0 %v3670
        %v3672 = vand.u32 %v273, 4294901760
        %v3673 = vsub.f32 %v273, %v3672
        %3674 = vmatprep.subr.mxu0 %v3673
        %v3675 = vand.u32 %v272, 4294901760
        %v3676 = vsub.f32 %v272, %v3675
        %3677 = vmatpush1.msra.mxu0 %v3676
        %v3678 = vand.u32 %v277, 4294901760
        %v3679 = vsub.f32 %v277, %v3678
        %3680 = vmatprep.subr.mxu0 %v3679
        %v3681 = vand.u32 %v276, 4294901760
        %v3682 = vsub.f32 %v276, %v3681
        %3683 = vmatpush1.msra.mxu0 %v3682
        %v3684 = vand.u32 %v281, 4294901760
        %v3685 = vsub.f32 %v281, %v3684
        %3686 = vmatprep.subr.mxu0 %v3685
        %v3687 = vand.u32 %v280, 4294901760
        %v3688 = vsub.f32 %v280, %v3687
        %3689 = vmatpush1.msra.mxu0 %v3688
        %v3690 = vand.u32 %v285, 4294901760
        %v3691 = vsub.f32 %v285, %v3690
        %3692 = vmatprep.subr.mxu0 %v3691
        %v3693 = vand.u32 %v284, 4294901760
        %v3694 = vsub.f32 %v284, %v3693
        %3695 = vmatpush1.msra.mxu0 %v3694
        %v3696 = vand.u32 %v289, 4294901760
        %v3697 = vsub.f32 %v289, %v3696
        %3698 = vmatprep.subr.mxu0 %v3697
        %v3699 = vand.u32 %v288, 4294901760
        %v3700 = vsub.f32 %v288, %v3699
        %3701 = vmatpush1.msra.mxu0 %v3700
        %v3702 = vand.u32 %v293, 4294901760
        %v3703 = vsub.f32 %v293, %v3702
        %3704 = vmatprep.subr.mxu0 %v3703
        %v3705 = vand.u32 %v292, 4294901760
        %v3706 = vsub.f32 %v292, %v3705
        %3707 = vmatpush1.msra.mxu0 %v3706
        %v3708 = vand.u32 %v297, 4294901760
        %v3709 = vsub.f32 %v297, %v3708
        %3710 = vmatprep.subr.mxu0 %v3709
        %v3711 = vand.u32 %v296, 4294901760
        %v3712 = vsub.f32 %v296, %v3711
        %3713 = vmatpush1.msra.mxu0 %v3712
        %v3714 = vand.u32 %v301, 4294901760
        %v3715 = vsub.f32 %v301, %v3714
        %3716 = vmatprep.subr.mxu0 %v3715
        %v3717 = vand.u32 %v300, 4294901760
        %v3718 = vsub.f32 %v300, %v3717
        %3719 = vmatpush1.msra.mxu0 %v3718
        %v3720 = vand.u32 %v305, 4294901760
        %v3721 = vsub.f32 %v305, %v3720
        %3722 = vmatprep.subr.mxu0 %v3721
        %v3723 = vand.u32 %v304, 4294901760
        %v3724 = vsub.f32 %v304, %v3723
        %3725 = vmatpush1.msra.mxu0 %v3724
        %v3726 = vand.u32 %v309, 4294901760
        %v3727 = vsub.f32 %v309, %v3726
        %3728 = vmatprep.subr.mxu0 %v3727
        %v3729 = vand.u32 %v308, 4294901760
        %v3730 = vsub.f32 %v308, %v3729
        %3731 = vmatpush1.msra.mxu0 %v3730
        %v3732 = vand.u32 %v313, 4294901760
        %v3733 = vsub.f32 %v313, %v3732
        %3734 = vmatprep.subr.mxu0 %v3733
        %v3735 = vand.u32 %v312, 4294901760
        %v3736 = vsub.f32 %v312, %v3735
        %3737 = vmatpush1.msra.mxu0 %v3736
        %v3738 = vand.u32 %v317, 4294901760
        %v3739 = vsub.f32 %v317, %v3738
        %3740 = vmatprep.subr.mxu0 %v3739
        %v3741 = vand.u32 %v316, 4294901760
        %v3742 = vsub.f32 %v316, %v3741
        %3743 = vmatpush1.msra.mxu0 %v3742
        %v3744 = vand.u32 %v321, 4294901760
        %v3745 = vsub.f32 %v321, %v3744
        %3746 = vmatprep.subr.mxu0 %v3745
        %v3747 = vand.u32 %v320, 4294901760
        %v3748 = vsub.f32 %v320, %v3747
        %3749 = vmatpush1.msra.mxu0 %v3748
        %v3750 = vand.u32 %v325, 4294901760
        %v3751 = vsub.f32 %v325, %v3750
        %3752 = vmatprep.subr.mxu0 %v3751
        %v3753 = vand.u32 %v324, 4294901760
        %v3754 = vsub.f32 %v324, %v3753
        %3755 = vmatpush1.msra.mxu0 %v3754
        %v3756 = vand.u32 %v329, 4294901760
        %v3757 = vsub.f32 %v329, %v3756
        %3758 = vmatprep.subr.mxu0 %v3757
        %v3759 = vand.u32 %v328, 4294901760
        %v3760 = vsub.f32 %v328, %v3759
        %3761 = vmatpush1.msra.mxu0 %v3760
        %v3762 = vand.u32 %v333, 4294901760
        %v3763 = vsub.f32 %v333, %v3762
        %3764 = vmatprep.subr.mxu0 %v3763
        %v3765 = vand.u32 %v332, 4294901760
        %v3766 = vsub.f32 %v332, %v3765
        %3767 = vmatpush1.msra.mxu0 %v3766
        %v3768 = vand.u32 %v337, 4294901760
        %v3769 = vsub.f32 %v337, %v3768
        %3770 = vmatprep.subr.mxu0 %v3769
        %v3771 = vand.u32 %v336, 4294901760
        %v3772 = vsub.f32 %v336, %v3771
        %3773 = vmatpush1.msra.mxu0 %v3772
        %v3774 = vand.u32 %v341, 4294901760
        %v3775 = vsub.f32 %v341, %v3774
        %3776 = vmatprep.subr.mxu0 %v3775
        %v3777 = vand.u32 %v340, 4294901760
        %v3778 = vsub.f32 %v340, %v3777
        %3779 = vmatpush1.msra.mxu0 %v3778
        %v3780 = vand.u32 %v345, 4294901760
        %v3781 = vsub.f32 %v345, %v3780
        %3782 = vmatprep.subr.mxu0 %v3781
        %v3783 = vand.u32 %v344, 4294901760
        %v3784 = vsub.f32 %v344, %v3783
        %3785 = vmatpush1.msra.mxu0 %v3784
        %v3786 = vand.u32 %v349, 4294901760
        %v3787 = vsub.f32 %v349, %v3786
        %3788 = vmatprep.subr.mxu0 %v3787
        %v3789 = vand.u32 %v348, 4294901760
        %v3790 = vsub.f32 %v348, %v3789
        %3791 = vmatpush1.msra.mxu0 %v3790
        %v3792 = vand.u32 %v353, 4294901760
        %v3793 = vsub.f32 %v353, %v3792
        %3794 = vmatprep.subr.mxu0 %v3793
        %v3795 = vand.u32 %v352, 4294901760
        %v3796 = vsub.f32 %v352, %v3795
        %3797 = vmatpush1.msra.mxu0 %v3796
        %v3798 = vand.u32 %v357, 4294901760
        %v3799 = vsub.f32 %v357, %v3798
        %3800 = vmatprep.subr.mxu0 %v3799
        %v3801 = vand.u32 %v356, 4294901760
        %v3802 = vsub.f32 %v356, %v3801
        %3803 = vmatpush1.msra.mxu0 %v3802
        %v3804 = vand.u32 %v361, 4294901760
        %v3805 = vsub.f32 %v361, %v3804
        %3806 = vmatprep.subr.mxu0 %v3805
        %v3807 = vand.u32 %v360, 4294901760
        %v3808 = vsub.f32 %v360, %v3807
        %3809 = vmatpush1.msra.mxu0 %v3808
        %v3810 = vand.u32 %v506, 4294901760
        %v3811 = vsub.f32 %v506, %v3810
        %3812 = vmatprep.mubr.f32.mxu0 %v3811
        %v3813 = vand.u32 %v498, 4294901760
        %v3814 = vsub.f32 %v498, %v3813
        %3815 = vmatmul.mubr.f32.gmra.mrb[0].mxu0 %v3814
        %v3816 = vpop.f32.mrb[0].mxu0
        %v3817 = vadd.f32 %v3614, %v3816
        %v3818 = vpop.f32.mrb[0].mxu0
        %v3819 = vadd.f32 %v3616, %v3818
        %3820 = vdwg.mxu0
        %v3821 = vand.u32 %v237, 4294901760
        %3822 = vmatprep.subr.mxu0 %v3821
        %v3823 = vand.u32 %v236, 4294901760
        %3824 = vmatpush1.msra.mxu0 %v3823
        %v3825 = vand.u32 %v241, 4294901760
        %3826 = vmatprep.subr.mxu0 %v3825
        %v3827 = vand.u32 %v240, 4294901760
        %3828 = vmatpush1.msra.mxu0 %v3827
        %v3829 = vand.u32 %v245, 4294901760
        %3830 = vmatprep.subr.mxu0 %v3829
        %v3831 = vand.u32 %v244, 4294901760
        %3832 = vmatpush1.msra.mxu0 %v3831
        %v3833 = vand.u32 %v249, 4294901760
        %3834 = vmatprep.subr.mxu0 %v3833
        %v3835 = vand.u32 %v248, 4294901760
        %3836 = vmatpush1.msra.mxu0 %v3835
        %v3837 = vand.u32 %v253, 4294901760
        %3838 = vmatprep.subr.mxu0 %v3837
        %v3839 = vand.u32 %v252, 4294901760
        %3840 = vmatpush1.msra.mxu0 %v3839
        %v3841 = vand.u32 %v257, 4294901760
        %3842 = vmatprep.subr.mxu0 %v3841
        %v3843 = vand.u32 %v256, 4294901760
        %3844 = vmatpush1.msra.mxu0 %v3843
        %v3845 = vand.u32 %v261, 4294901760
        %3846 = vmatprep.subr.mxu0 %v3845
        %v3847 = vand.u32 %v260, 4294901760
        %3848 = vmatpush1.msra.mxu0 %v3847
        %v3849 = vand.u32 %v265, 4294901760
        %3850 = vmatprep.subr.mxu0 %v3849
        %v3851 = vand.u32 %v264, 4294901760
        %3852 = vmatpush1.msra.mxu0 %v3851
        %v3853 = vand.u32 %v269, 4294901760
        %3854 = vmatprep.subr.mxu0 %v3853
        %v3855 = vand.u32 %v268, 4294901760
        %3856 = vmatpush1.msra.mxu0 %v3855
        %v3857 = vand.u32 %v273, 4294901760
        %3858 = vmatprep.subr.mxu0 %v3857
        %v3859 = vand.u32 %v272, 4294901760
        %3860 = vmatpush1.msra.mxu0 %v3859
        %v3861 = vand.u32 %v277, 4294901760
        %3862 = vmatprep.subr.mxu0 %v3861
        %v3863 = vand.u32 %v276, 4294901760
        %3864 = vmatpush1.msra.mxu0 %v3863
        %v3865 = vand.u32 %v281, 4294901760
        %3866 = vmatprep.subr.mxu0 %v3865
        %v3867 = vand.u32 %v280, 4294901760
        %3868 = vmatpush1.msra.mxu0 %v3867
        %v3869 = vand.u32 %v285, 4294901760
        %3870 = vmatprep.subr.mxu0 %v3869
        %v3871 = vand.u32 %v284, 4294901760
        %3872 = vmatpush1.msra.mxu0 %v3871
        %v3873 = vand.u32 %v289, 4294901760
        %3874 = vmatprep.subr.mxu0 %v3873
        %v3875 = vand.u32 %v288, 4294901760
        %3876 = vmatpush1.msra.mxu0 %v3875
        %v3877 = vand.u32 %v293, 4294901760
        %3878 = vmatprep.subr.mxu0 %v3877
        %v3879 = vand.u32 %v292, 4294901760
        %3880 = vmatpush1.msra.mxu0 %v3879
        %v3881 = vand.u32 %v297, 4294901760
        %3882 = vmatprep.subr.mxu0 %v3881
        %v3883 = vand.u32 %v296, 4294901760
        %3884 = vmatpush1.msra.mxu0 %v3883
        %v3885 = vand.u32 %v301, 4294901760
        %3886 = vmatprep.subr.mxu0 %v3885
        %v3887 = vand.u32 %v300, 4294901760
        %3888 = vmatpush1.msra.mxu0 %v3887
        %v3889 = vand.u32 %v305, 4294901760
        %3890 = vmatprep.subr.mxu0 %v3889
        %v3891 = vand.u32 %v304, 4294901760
        %3892 = vmatpush1.msra.mxu0 %v3891
        %v3893 = vand.u32 %v309, 4294901760
        %3894 = vmatprep.subr.mxu0 %v3893
        %v3895 = vand.u32 %v308, 4294901760
        %3896 = vmatpush1.msra.mxu0 %v3895
        %v3897 = vand.u32 %v313, 4294901760
        %3898 = vmatprep.subr.mxu0 %v3897
        %v3899 = vand.u32 %v312, 4294901760
        %3900 = vmatpush1.msra.mxu0 %v3899
        %v3901 = vand.u32 %v317, 4294901760
        %3902 = vmatprep.subr.mxu0 %v3901
        %v3903 = vand.u32 %v316, 4294901760
        %3904 = vmatpush1.msra.mxu0 %v3903
        %v3905 = vand.u32 %v321, 4294901760
        %3906 = vmatprep.subr.mxu0 %v3905
        %v3907 = vand.u32 %v320, 4294901760
        %3908 = vmatpush1.msra.mxu0 %v3907
        %v3909 = vand.u32 %v325, 4294901760
        %3910 = vmatprep.subr.mxu0 %v3909
        %v3911 = vand.u32 %v324, 4294901760
        %3912 = vmatpush1.msra.mxu0 %v3911
        %v3913 = vand.u32 %v329, 4294901760
        %3914 = vmatprep.subr.mxu0 %v3913
        %v3915 = vand.u32 %v328, 4294901760
        %3916 = vmatpush1.msra.mxu0 %v3915
        %v3917 = vand.u32 %v333, 4294901760
        %3918 = vmatprep.subr.mxu0 %v3917
        %v3919 = vand.u32 %v332, 4294901760
        %3920 = vmatpush1.msra.mxu0 %v3919
        %v3921 = vand.u32 %v337, 4294901760
        %3922 = vmatprep.subr.mxu0 %v3921
        %v3923 = vand.u32 %v336, 4294901760
        %3924 = vmatpush1.msra.mxu0 %v3923
        %v3925 = vand.u32 %v341, 4294901760
        %3926 = vmatprep.subr.mxu0 %v3925
        %v3927 = vand.u32 %v340, 4294901760
        %3928 = vmatpush1.msra.mxu0 %v3927
        %v3929 = vand.u32 %v345, 4294901760
        %3930 = vmatprep.subr.mxu0 %v3929
        %v3931 = vand.u32 %v344, 4294901760
        %3932 = vmatpush1.msra.mxu0 %v3931
        %v3933 = vand.u32 %v349, 4294901760
        %3934 = vmatprep.subr.mxu0 %v3933
        %v3935 = vand.u32 %v348, 4294901760
        %3936 = vmatpush1.msra.mxu0 %v3935
        %v3937 = vand.u32 %v353, 4294901760
        %3938 = vmatprep.subr.mxu0 %v3937
        %v3939 = vand.u32 %v352, 4294901760
        %3940 = vmatpush1.msra.mxu0 %v3939
        %v3941 = vand.u32 %v357, 4294901760
        %3942 = vmatprep.subr.mxu0 %v3941
        %v3943 = vand.u32 %v356, 4294901760
        %3944 = vmatpush1.msra.mxu0 %v3943
        %v3945 = vand.u32 %v361, 4294901760
        %3946 = vmatprep.subr.mxu0 %v3945
        %v3947 = vand.u32 %v360, 4294901760
        %3948 = vmatpush1.msra.mxu0 %v3947
        %v3949 = vand.u32 %v506, 4294901760
        %v3950 = vsub.f32 %v506, %v3949
        %v3951 = vand.u32 %v3950, 4294901760
        %3952 = vmatprep.mubr.f32.mxu0 %v3951
        %v3953 = vand.u32 %v498, 4294901760
        %v3954 = vsub.f32 %v498, %v3953
        %v3955 = vand.u32 %v3954, 4294901760
        %3956 = vmatmul.mubr.f32.gmra.mrb[0].mxu0 %v3955
        %v3957 = vpop.f32.mrb[0].mxu0
        %v3958 = vadd.f32 %v3817, %v3957
        %v3959 = vpop.f32.mrb[0].mxu0
        %v3960 = vadd.f32 %v3819, %v3959
        %3961 = vdwg.mxu0
        %v3962 = vand.u32 %v237, 4294901760
        %v3963 = vsub.f32 %v237, %v3962
        %v3964 = vand.u32 %v3963, 4294901760
        %3965 = vmatprep.subr.mxu0 %v3964
        %v3966 = vand.u32 %v236, 4294901760
        %v3967 = vsub.f32 %v236, %v3966
        %v3968 = vand.u32 %v3967, 4294901760
        %3969 = vmatpush1.msra.mxu0 %v3968
        %v3970 = vand.u32 %v241, 4294901760
        %v3971 = vsub.f32 %v241, %v3970
        %v3972 = vand.u32 %v3971, 4294901760
        %3973 = vmatprep.subr.mxu0 %v3972
        %v3974 = vand.u32 %v240, 4294901760
        %v3975 = vsub.f32 %v240, %v3974
        %v3976 = vand.u32 %v3975, 4294901760
        %3977 = vmatpush1.msra.mxu0 %v3976
        %v3978 = vand.u32 %v245, 4294901760
        %v3979 = vsub.f32 %v245, %v3978
        %v3980 = vand.u32 %v3979, 4294901760
        %3981 = vmatprep.subr.mxu0 %v3980
        %v3982 = vand.u32 %v244, 4294901760
        %v3983 = vsub.f32 %v244, %v3982
        %v3984 = vand.u32 %v3983, 4294901760
        %3985 = vmatpush1.msra.mxu0 %v3984
        %v3986 = vand.u32 %v249, 4294901760
        %v3987 = vsub.f32 %v249, %v3986
        %v3988 = vand.u32 %v3987, 4294901760
        %3989 = vmatprep.subr.mxu0 %v3988
        %v3990 = vand.u32 %v248, 4294901760
        %v3991 = vsub.f32 %v248, %v3990
        %v3992 = vand.u32 %v3991, 4294901760
        %3993 = vmatpush1.msra.mxu0 %v3992
        %v3994 = vand.u32 %v253, 4294901760
        %v3995 = vsub.f32 %v253, %v3994
        %v3996 = vand.u32 %v3995, 4294901760
        %3997 = vmatprep.subr.mxu0 %v3996
        %v3998 = vand.u32 %v252, 4294901760
        %v3999 = vsub.f32 %v252, %v3998
        %v4000 = vand.u32 %v3999, 4294901760
        %4001 = vmatpush1.msra.mxu0 %v4000
        %v4002 = vand.u32 %v257, 4294901760
        %v4003 = vsub.f32 %v257, %v4002
        %v4004 = vand.u32 %v4003, 4294901760
        %4005 = vmatprep.subr.mxu0 %v4004
        %v4006 = vand.u32 %v256, 4294901760
        %v4007 = vsub.f32 %v256, %v4006
        %v4008 = vand.u32 %v4007, 4294901760
        %4009 = vmatpush1.msra.mxu0 %v4008
        %v4010 = vand.u32 %v261, 4294901760
        %v4011 = vsub.f32 %v261, %v4010
        %v4012 = vand.u32 %v4011, 4294901760
        %4013 = vmatprep.subr.mxu0 %v4012
        %v4014 = vand.u32 %v260, 4294901760
        %v4015 = vsub.f32 %v260, %v4014
        %v4016 = vand.u32 %v4015, 4294901760
        %4017 = vmatpush1.msra.mxu0 %v4016
        %v4018 = vand.u32 %v265, 4294901760
        %v4019 = vsub.f32 %v265, %v4018
        %v4020 = vand.u32 %v4019, 4294901760
        %4021 = vmatprep.subr.mxu0 %v4020
        %v4022 = vand.u32 %v264, 4294901760
        %v4023 = vsub.f32 %v264, %v4022
        %v4024 = vand.u32 %v4023, 4294901760
        %4025 = vmatpush1.msra.mxu0 %v4024
        %v4026 = vand.u32 %v269, 4294901760
        %v4027 = vsub.f32 %v269, %v4026
        %v4028 = vand.u32 %v4027, 4294901760
        %4029 = vmatprep.subr.mxu0 %v4028
        %v4030 = vand.u32 %v268, 4294901760
        %v4031 = vsub.f32 %v268, %v4030
        %v4032 = vand.u32 %v4031, 4294901760
        %4033 = vmatpush1.msra.mxu0 %v4032
        %v4034 = vand.u32 %v273, 4294901760
        %v4035 = vsub.f32 %v273, %v4034
        %v4036 = vand.u32 %v4035, 4294901760
        %4037 = vmatprep.subr.mxu0 %v4036
        %v4038 = vand.u32 %v272, 4294901760
        %v4039 = vsub.f32 %v272, %v4038
        %v4040 = vand.u32 %v4039, 4294901760
        %4041 = vmatpush1.msra.mxu0 %v4040
        %v4042 = vand.u32 %v277, 4294901760
        %v4043 = vsub.f32 %v277, %v4042
        %v4044 = vand.u32 %v4043, 4294901760
        %4045 = vmatprep.subr.mxu0 %v4044
        %v4046 = vand.u32 %v276, 4294901760
        %v4047 = vsub.f32 %v276, %v4046
        %v4048 = vand.u32 %v4047, 4294901760
        %4049 = vmatpush1.msra.mxu0 %v4048
        %v4050 = vand.u32 %v281, 4294901760
        %v4051 = vsub.f32 %v281, %v4050
        %v4052 = vand.u32 %v4051, 4294901760
        %4053 = vmatprep.subr.mxu0 %v4052
        %v4054 = vand.u32 %v280, 4294901760
        %v4055 = vsub.f32 %v280, %v4054
        %v4056 = vand.u32 %v4055, 4294901760
        %4057 = vmatpush1.msra.mxu0 %v4056
        %v4058 = vand.u32 %v285, 4294901760
        %v4059 = vsub.f32 %v285, %v4058
        %v4060 = vand.u32 %v4059, 4294901760
        %4061 = vmatprep.subr.mxu0 %v4060
        %v4062 = vand.u32 %v284, 4294901760
        %v4063 = vsub.f32 %v284, %v4062
        %v4064 = vand.u32 %v4063, 4294901760
        %4065 = vmatpush1.msra.mxu0 %v4064
        %v4066 = vand.u32 %v289, 4294901760
        %v4067 = vsub.f32 %v289, %v4066
        %v4068 = vand.u32 %v4067, 4294901760
        %4069 = vmatprep.subr.mxu0 %v4068
        %v4070 = vand.u32 %v288, 4294901760
        %v4071 = vsub.f32 %v288, %v4070
        %v4072 = vand.u32 %v4071, 4294901760
        %4073 = vmatpush1.msra.mxu0 %v4072
        %v4074 = vand.u32 %v293, 4294901760
        %v4075 = vsub.f32 %v293, %v4074
        %v4076 = vand.u32 %v4075, 4294901760
        %4077 = vmatprep.subr.mxu0 %v4076
        %v4078 = vand.u32 %v292, 4294901760
        %v4079 = vsub.f32 %v292, %v4078
        %v4080 = vand.u32 %v4079, 4294901760
        %4081 = vmatpush1.msra.mxu0 %v4080
        %v4082 = vand.u32 %v297, 4294901760
        %v4083 = vsub.f32 %v297, %v4082
        %v4084 = vand.u32 %v4083, 4294901760
        %4085 = vmatprep.subr.mxu0 %v4084
        %v4086 = vand.u32 %v296, 4294901760
        %v4087 = vsub.f32 %v296, %v4086
        %v4088 = vand.u32 %v4087, 4294901760
        %4089 = vmatpush1.msra.mxu0 %v4088
        %v4090 = vand.u32 %v301, 4294901760
        %v4091 = vsub.f32 %v301, %v4090
        %v4092 = vand.u32 %v4091, 4294901760
        %4093 = vmatprep.subr.mxu0 %v4092
        %v4094 = vand.u32 %v300, 4294901760
        %v4095 = vsub.f32 %v300, %v4094
        %v4096 = vand.u32 %v4095, 4294901760
        %4097 = vmatpush1.msra.mxu0 %v4096
        %v4098 = vand.u32 %v305, 4294901760
        %v4099 = vsub.f32 %v305, %v4098
        %v4100 = vand.u32 %v4099, 4294901760
        %4101 = vmatprep.subr.mxu0 %v4100
        %v4102 = vand.u32 %v304, 4294901760
        %v4103 = vsub.f32 %v304, %v4102
        %v4104 = vand.u32 %v4103, 4294901760
        %4105 = vmatpush1.msra.mxu0 %v4104
        %v4106 = vand.u32 %v309, 4294901760
        %v4107 = vsub.f32 %v309, %v4106
        %v4108 = vand.u32 %v4107, 4294901760
        %4109 = vmatprep.subr.mxu0 %v4108
        %v4110 = vand.u32 %v308, 4294901760
        %v4111 = vsub.f32 %v308, %v4110
        %v4112 = vand.u32 %v4111, 4294901760
        %4113 = vmatpush1.msra.mxu0 %v4112
        %v4114 = vand.u32 %v313, 4294901760
        %v4115 = vsub.f32 %v313, %v4114
        %v4116 = vand.u32 %v4115, 4294901760
        %4117 = vmatprep.subr.mxu0 %v4116
        %v4118 = vand.u32 %v312, 4294901760
        %v4119 = vsub.f32 %v312, %v4118
        %v4120 = vand.u32 %v4119, 4294901760
        %4121 = vmatpush1.msra.mxu0 %v4120
        %v4122 = vand.u32 %v317, 4294901760
        %v4123 = vsub.f32 %v317, %v4122
        %v4124 = vand.u32 %v4123, 4294901760
        %4125 = vmatprep.subr.mxu0 %v4124
        %v4126 = vand.u32 %v316, 4294901760
        %v4127 = vsub.f32 %v316, %v4126
        %v4128 = vand.u32 %v4127, 4294901760
        %4129 = vmatpush1.msra.mxu0 %v4128
        %v4130 = vand.u32 %v321, 4294901760
        %v4131 = vsub.f32 %v321, %v4130
        %v4132 = vand.u32 %v4131, 4294901760
        %4133 = vmatprep.subr.mxu0 %v4132
        %v4134 = vand.u32 %v320, 4294901760
        %v4135 = vsub.f32 %v320, %v4134
        %v4136 = vand.u32 %v4135, 4294901760
        %4137 = vmatpush1.msra.mxu0 %v4136
        %v4138 = vand.u32 %v325, 4294901760
        %v4139 = vsub.f32 %v325, %v4138
        %v4140 = vand.u32 %v4139, 4294901760
        %4141 = vmatprep.subr.mxu0 %v4140
        %v4142 = vand.u32 %v324, 4294901760
        %v4143 = vsub.f32 %v324, %v4142
        %v4144 = vand.u32 %v4143, 4294901760
        %4145 = vmatpush1.msra.mxu0 %v4144
        %v4146 = vand.u32 %v329, 4294901760
        %v4147 = vsub.f32 %v329, %v4146
        %v4148 = vand.u32 %v4147, 4294901760
        %4149 = vmatprep.subr.mxu0 %v4148
        %v4150 = vand.u32 %v328, 4294901760
        %v4151 = vsub.f32 %v328, %v4150
        %v4152 = vand.u32 %v4151, 4294901760
        %4153 = vmatpush1.msra.mxu0 %v4152
        %v4154 = vand.u32 %v333, 4294901760
        %v4155 = vsub.f32 %v333, %v4154
        %v4156 = vand.u32 %v4155, 4294901760
        %4157 = vmatprep.subr.mxu0 %v4156
        %v4158 = vand.u32 %v332, 4294901760
        %v4159 = vsub.f32 %v332, %v4158
        %v4160 = vand.u32 %v4159, 4294901760
        %4161 = vmatpush1.msra.mxu0 %v4160
        %v4162 = vand.u32 %v337, 4294901760
        %v4163 = vsub.f32 %v337, %v4162
        %v4164 = vand.u32 %v4163, 4294901760
        %4165 = vmatprep.subr.mxu0 %v4164
        %v4166 = vand.u32 %v336, 4294901760
        %v4167 = vsub.f32 %v336, %v4166
        %v4168 = vand.u32 %v4167, 4294901760
        %4169 = vmatpush1.msra.mxu0 %v4168
        %v4170 = vand.u32 %v341, 4294901760
        %v4171 = vsub.f32 %v341, %v4170
        %v4172 = vand.u32 %v4171, 4294901760
        %4173 = vmatprep.subr.mxu0 %v4172
        %v4174 = vand.u32 %v340, 4294901760
        %v4175 = vsub.f32 %v340, %v4174
        %v4176 = vand.u32 %v4175, 4294901760
        %4177 = vmatpush1.msra.mxu0 %v4176
        %v4178 = vand.u32 %v345, 4294901760
        %v4179 = vsub.f32 %v345, %v4178
        %v4180 = vand.u32 %v4179, 4294901760
        %4181 = vmatprep.subr.mxu0 %v4180
        %v4182 = vand.u32 %v344, 4294901760
        %v4183 = vsub.f32 %v344, %v4182
        %v4184 = vand.u32 %v4183, 4294901760
        %4185 = vmatpush1.msra.mxu0 %v4184
        %v4186 = vand.u32 %v349, 4294901760
        %v4187 = vsub.f32 %v349, %v4186
        %v4188 = vand.u32 %v4187, 4294901760
        %4189 = vmatprep.subr.mxu0 %v4188
        %v4190 = vand.u32 %v348, 4294901760
        %v4191 = vsub.f32 %v348, %v4190
        %v4192 = vand.u32 %v4191, 4294901760
        %4193 = vmatpush1.msra.mxu0 %v4192
        %v4194 = vand.u32 %v353, 4294901760
        %v4195 = vsub.f32 %v353, %v4194
        %v4196 = vand.u32 %v4195, 4294901760
        %4197 = vmatprep.subr.mxu0 %v4196
        %v4198 = vand.u32 %v352, 4294901760
        %v4199 = vsub.f32 %v352, %v4198
        %v4200 = vand.u32 %v4199, 4294901760
        %4201 = vmatpush1.msra.mxu0 %v4200
        %v4202 = vand.u32 %v357, 4294901760
        %v4203 = vsub.f32 %v357, %v4202
        %v4204 = vand.u32 %v4203, 4294901760
        %4205 = vmatprep.subr.mxu0 %v4204
        %v4206 = vand.u32 %v356, 4294901760
        %v4207 = vsub.f32 %v356, %v4206
        %v4208 = vand.u32 %v4207, 4294901760
        %4209 = vmatpush1.msra.mxu0 %v4208
        %v4210 = vand.u32 %v361, 4294901760
        %v4211 = vsub.f32 %v361, %v4210
        %v4212 = vand.u32 %v4211, 4294901760
        %4213 = vmatprep.subr.mxu0 %v4212
        %v4214 = vand.u32 %v360, 4294901760
        %v4215 = vsub.f32 %v360, %v4214
        %v4216 = vand.u32 %v4215, 4294901760
        %4217 = vmatpush1.msra.mxu0 %v4216
        %v4218 = vand.u32 %v506, 4294901760
        %4219 = vmatprep.mubr.f32.mxu0 %v4218
        %v4220 = vand.u32 %v498, 4294901760
        %4221 = vmatmul.mubr.f32.gmra.mrb[0].mxu0 %v4220
        %v4222 = vpop.f32.mrb[0].mxu0
        %v4223 = vadd.f32 %v3958, %v4222
        %v4224 = vpop.f32.mrb[0].mxu0
        %v4225 = vadd.f32 %v3960, %v4224
        %4226 = vdwg.mxu0
        %v4227 = vand.u32 %v237, 4294901760
        %4228 = vmatprep.subr.mxu0 %v4227
        %v4229 = vand.u32 %v236, 4294901760
        %4230 = vmatpush1.msra.mxu0 %v4229
        %v4231 = vand.u32 %v241, 4294901760
        %4232 = vmatprep.subr.mxu0 %v4231
        %v4233 = vand.u32 %v240, 4294901760
        %4234 = vmatpush1.msra.mxu0 %v4233
        %v4235 = vand.u32 %v245, 4294901760
        %4236 = vmatprep.subr.mxu0 %v4235
        %v4237 = vand.u32 %v244, 4294901760
        %4238 = vmatpush1.msra.mxu0 %v4237
        %v4239 = vand.u32 %v249, 4294901760
        %4240 = vmatprep.subr.mxu0 %v4239
        %v4241 = vand.u32 %v248, 4294901760
        %4242 = vmatpush1.msra.mxu0 %v4241
        %v4243 = vand.u32 %v253, 4294901760
        %4244 = vmatprep.subr.mxu0 %v4243
        %v4245 = vand.u32 %v252, 4294901760
        %4246 = vmatpush1.msra.mxu0 %v4245
        %v4247 = vand.u32 %v257, 4294901760
        %4248 = vmatprep.subr.mxu0 %v4247
        %v4249 = vand.u32 %v256, 4294901760
        %4250 = vmatpush1.msra.mxu0 %v4249
        %v4251 = vand.u32 %v261, 4294901760
        %4252 = vmatprep.subr.mxu0 %v4251
        %v4253 = vand.u32 %v260, 4294901760
        %4254 = vmatpush1.msra.mxu0 %v4253
        %v4255 = vand.u32 %v265, 4294901760
        %4256 = vmatprep.subr.mxu0 %v4255
        %v4257 = vand.u32 %v264, 4294901760
        %4258 = vmatpush1.msra.mxu0 %v4257
        %v4259 = vand.u32 %v269, 4294901760
        %4260 = vmatprep.subr.mxu0 %v4259
        %v4261 = vand.u32 %v268, 4294901760
        %4262 = vmatpush1.msra.mxu0 %v4261
        %v4263 = vand.u32 %v273, 4294901760
        %4264 = vmatprep.subr.mxu0 %v4263
        %v4265 = vand.u32 %v272, 4294901760
        %4266 = vmatpush1.msra.mxu0 %v4265
        %v4267 = vand.u32 %v277, 4294901760
        %4268 = vmatprep.subr.mxu0 %v4267
        %v4269 = vand.u32 %v276, 4294901760
        %4270 = vmatpush1.msra.mxu0 %v4269
        %v4271 = vand.u32 %v281, 4294901760
        %4272 = vmatprep.subr.mxu0 %v4271
        %v4273 = vand.u32 %v280, 4294901760
        %4274 = vmatpush1.msra.mxu0 %v4273
        %v4275 = vand.u32 %v285, 4294901760
        %4276 = vmatprep.subr.mxu0 %v4275
        %v4277 = vand.u32 %v284, 4294901760
        %4278 = vmatpush1.msra.mxu0 %v4277
        %v4279 = vand.u32 %v289, 4294901760
        %4280 = vmatprep.subr.mxu0 %v4279
        %v4281 = vand.u32 %v288, 4294901760
        %4282 = vmatpush1.msra.mxu0 %v4281
        %v4283 = vand.u32 %v293, 4294901760
        %4284 = vmatprep.subr.mxu0 %v4283
        %v4285 = vand.u32 %v292, 4294901760
        %4286 = vmatpush1.msra.mxu0 %v4285
        %v4287 = vand.u32 %v297, 4294901760
        %4288 = vmatprep.subr.mxu0 %v4287
        %v4289 = vand.u32 %v296, 4294901760
        %4290 = vmatpush1.msra.mxu0 %v4289
        %v4291 = vand.u32 %v301, 4294901760
        %4292 = vmatprep.subr.mxu0 %v4291
        %v4293 = vand.u32 %v300, 4294901760
        %4294 = vmatpush1.msra.mxu0 %v4293
        %v4295 = vand.u32 %v305, 4294901760
        %4296 = vmatprep.subr.mxu0 %v4295
        %v4297 = vand.u32 %v304, 4294901760
        %4298 = vmatpush1.msra.mxu0 %v4297
        %v4299 = vand.u32 %v309, 4294901760
        %4300 = vmatprep.subr.mxu0 %v4299
        %v4301 = vand.u32 %v308, 4294901760
        %4302 = vmatpush1.msra.mxu0 %v4301
        %v4303 = vand.u32 %v313, 4294901760
        %4304 = vmatprep.subr.mxu0 %v4303
        %v4305 = vand.u32 %v312, 4294901760
        %4306 = vmatpush1.msra.mxu0 %v4305
        %v4307 = vand.u32 %v317, 4294901760
        %4308 = vmatprep.subr.mxu0 %v4307
        %v4309 = vand.u32 %v316, 4294901760
        %4310 = vmatpush1.msra.mxu0 %v4309
        %v4311 = vand.u32 %v321, 4294901760
        %4312 = vmatprep.subr.mxu0 %v4311
        %v4313 = vand.u32 %v320, 4294901760
        %4314 = vmatpush1.msra.mxu0 %v4313
        %v4315 = vand.u32 %v325, 4294901760
        %4316 = vmatprep.subr.mxu0 %v4315
        %v4317 = vand.u32 %v324, 4294901760
        %4318 = vmatpush1.msra.mxu0 %v4317
        %v4319 = vand.u32 %v329, 4294901760
        %4320 = vmatprep.subr.mxu0 %v4319
        %v4321 = vand.u32 %v328, 4294901760
        %4322 = vmatpush1.msra.mxu0 %v4321
        %v4323 = vand.u32 %v333, 4294901760
        %4324 = vmatprep.subr.mxu0 %v4323
        %v4325 = vand.u32 %v332, 4294901760
        %4326 = vmatpush1.msra.mxu0 %v4325
        %v4327 = vand.u32 %v337, 4294901760
        %4328 = vmatprep.subr.mxu0 %v4327
        %v4329 = vand.u32 %v336, 4294901760
        %4330 = vmatpush1.msra.mxu0 %v4329
        %v4331 = vand.u32 %v341, 4294901760
        %4332 = vmatprep.subr.mxu0 %v4331
        %v4333 = vand.u32 %v340, 4294901760
        %4334 = vmatpush1.msra.mxu0 %v4333
        %v4335 = vand.u32 %v345, 4294901760
        %4336 = vmatprep.subr.mxu0 %v4335
        %v4337 = vand.u32 %v344, 4294901760
        %4338 = vmatpush1.msra.mxu0 %v4337
        %v4339 = vand.u32 %v349, 4294901760
        %4340 = vmatprep.subr.mxu0 %v4339
        %v4341 = vand.u32 %v348, 4294901760
        %4342 = vmatpush1.msra.mxu0 %v4341
        %v4343 = vand.u32 %v353, 4294901760
        %4344 = vmatprep.subr.mxu0 %v4343
        %v4345 = vand.u32 %v352, 4294901760
        %4346 = vmatpush1.msra.mxu0 %v4345
        %v4347 = vand.u32 %v357, 4294901760
        %4348 = vmatprep.subr.mxu0 %v4347
        %v4349 = vand.u32 %v356, 4294901760
        %4350 = vmatpush1.msra.mxu0 %v4349
        %v4351 = vand.u32 %v361, 4294901760
        %4352 = vmatprep.subr.mxu0 %v4351
        %v4353 = vand.u32 %v360, 4294901760
        %4354 = vmatpush1.msra.mxu0 %v4353
        %v4355 = vand.u32 %v506, 4294901760
        %4356 = vmatprep.mubr.f32.mxu0 %v4355
        %v4357 = vand.u32 %v498, 4294901760
        %4358 = vmatmul.mubr.f32.gmra.mrb[0].mxu0 %v4357
        %v4359 = vpop.f32.mrb[0].mxu0
        %v4360 = vadd.f32 %v4223, %v4359
        %v4361 = vpop.f32.mrb[0].mxu0
        %v4362 = vadd.f32 %v4225, %v4361
        %4363 = vdwg.mxu0
        %v4364 = vand.u32 %v365, 4294901760
        %4365 = vmatprep.subr.mxu0 %v4364
        %v4366 = vand.u32 %v364, 4294901760
        %4367 = vmatpush1.msra.mxu0 %v4366
        %v4368 = vand.u32 %v369, 4294901760
        %4369 = vmatprep.subr.mxu0 %v4368
        %v4370 = vand.u32 %v368, 4294901760
        %4371 = vmatpush1.msra.mxu0 %v4370
        %v4372 = vand.u32 %v373, 4294901760
        %4373 = vmatprep.subr.mxu0 %v4372
        %v4374 = vand.u32 %v372, 4294901760
        %4375 = vmatpush1.msra.mxu0 %v4374
        %v4376 = vand.u32 %v377, 4294901760
        %4377 = vmatprep.subr.mxu0 %v4376
        %v4378 = vand.u32 %v376, 4294901760
        %4379 = vmatpush1.msra.mxu0 %v4378
        %v4380 = vand.u32 %v381, 4294901760
        %4381 = vmatprep.subr.mxu0 %v4380
        %v4382 = vand.u32 %v380, 4294901760
        %4383 = vmatpush1.msra.mxu0 %v4382
        %v4384 = vand.u32 %v385, 4294901760
        %4385 = vmatprep.subr.mxu0 %v4384
        %v4386 = vand.u32 %v384, 4294901760
        %4387 = vmatpush1.msra.mxu0 %v4386
        %v4388 = vand.u32 %v389, 4294901760
        %4389 = vmatprep.subr.mxu0 %v4388
        %v4390 = vand.u32 %v388, 4294901760
        %4391 = vmatpush1.msra.mxu0 %v4390
        %v4392 = vand.u32 %v393, 4294901760
        %4393 = vmatprep.subr.mxu0 %v4392
        %v4394 = vand.u32 %v392, 4294901760
        %4395 = vmatpush1.msra.mxu0 %v4394
        %v4396 = vand.u32 %v397, 4294901760
        %4397 = vmatprep.subr.mxu0 %v4396
        %v4398 = vand.u32 %v396, 4294901760
        %4399 = vmatpush1.msra.mxu0 %v4398
        %v4400 = vand.u32 %v401, 4294901760
        %4401 = vmatprep.subr.mxu0 %v4400
        %v4402 = vand.u32 %v400, 4294901760
        %4403 = vmatpush1.msra.mxu0 %v4402
        %v4404 = vand.u32 %v405, 4294901760
        %4405 = vmatprep.subr.mxu0 %v4404
        %v4406 = vand.u32 %v404, 4294901760
        %4407 = vmatpush1.msra.mxu0 %v4406
        %v4408 = vand.u32 %v409, 4294901760
        %4409 = vmatprep.subr.mxu0 %v4408
        %v4410 = vand.u32 %v408, 4294901760
        %4411 = vmatpush1.msra.mxu0 %v4410
        %v4412 = vand.u32 %v413, 4294901760
        %4413 = vmatprep.subr.mxu0 %v4412
        %v4414 = vand.u32 %v412, 4294901760
        %4415 = vmatpush1.msra.mxu0 %v4414
        %v4416 = vand.u32 %v417, 4294901760
        %4417 = vmatprep.subr.mxu0 %v4416
        %v4418 = vand.u32 %v416, 4294901760
        %4419 = vmatpush1.msra.mxu0 %v4418
        %v4420 = vand.u32 %v421, 4294901760
        %4421 = vmatprep.subr.mxu0 %v4420
        %v4422 = vand.u32 %v420, 4294901760
        %4423 = vmatpush1.msra.mxu0 %v4422
        %v4424 = vand.u32 %v425, 4294901760
        %4425 = vmatprep.subr.mxu0 %v4424
        %v4426 = vand.u32 %v424, 4294901760
        %4427 = vmatpush1.msra.mxu0 %v4426
        %v4428 = vand.u32 %v429, 4294901760
        %4429 = vmatprep.subr.mxu0 %v4428
        %v4430 = vand.u32 %v428, 4294901760
        %4431 = vmatpush1.msra.mxu0 %v4430
        %v4432 = vand.u32 %v433, 4294901760
        %4433 = vmatprep.subr.mxu0 %v4432
        %v4434 = vand.u32 %v432, 4294901760
        %4435 = vmatpush1.msra.mxu0 %v4434
        %v4436 = vand.u32 %v437, 4294901760
        %4437 = vmatprep.subr.mxu0 %v4436
        %v4438 = vand.u32 %v436, 4294901760
        %4439 = vmatpush1.msra.mxu0 %v4438
        %v4440 = vand.u32 %v441, 4294901760
        %4441 = vmatprep.subr.mxu0 %v4440
        %v4442 = vand.u32 %v440, 4294901760
        %4443 = vmatpush1.msra.mxu0 %v4442
        %v4444 = vand.u32 %v445, 4294901760
        %4445 = vmatprep.subr.mxu0 %v4444
        %v4446 = vand.u32 %v444, 4294901760
        %4447 = vmatpush1.msra.mxu0 %v4446
        %v4448 = vand.u32 %v449, 4294901760
        %4449 = vmatprep.subr.mxu0 %v4448
        %v4450 = vand.u32 %v448, 4294901760
        %4451 = vmatpush1.msra.mxu0 %v4450
        %v4452 = vand.u32 %v453, 4294901760
        %4453 = vmatprep.subr.mxu0 %v4452
        %v4454 = vand.u32 %v452, 4294901760
        %4455 = vmatpush1.msra.mxu0 %v4454
        %v4456 = vand.u32 %v457, 4294901760
        %4457 = vmatprep.subr.mxu0 %v4456
        %v4458 = vand.u32 %v456, 4294901760
        %4459 = vmatpush1.msra.mxu0 %v4458
        %v4460 = vand.u32 %v461, 4294901760
        %4461 = vmatprep.subr.mxu0 %v4460
        %v4462 = vand.u32 %v460, 4294901760
        %4463 = vmatpush1.msra.mxu0 %v4462
        %v4464 = vand.u32 %v465, 4294901760
        %4465 = vmatprep.subr.mxu0 %v4464
        %v4466 = vand.u32 %v464, 4294901760
        %4467 = vmatpush1.msra.mxu0 %v4466
        %v4468 = vand.u32 %v469, 4294901760
        %4469 = vmatprep.subr.mxu0 %v4468
        %v4470 = vand.u32 %v468, 4294901760
        %4471 = vmatpush1.msra.mxu0 %v4470
        %v4472 = vand.u32 %v473, 4294901760
        %4473 = vmatprep.subr.mxu0 %v4472
        %v4474 = vand.u32 %v472, 4294901760
        %4475 = vmatpush1.msra.mxu0 %v4474
        %v4476 = vand.u32 %v477, 4294901760
        %4477 = vmatprep.subr.mxu0 %v4476
        %v4478 = vand.u32 %v476, 4294901760
        %4479 = vmatpush1.msra.mxu0 %v4478
        %v4480 = vand.u32 %v481, 4294901760
        %4481 = vmatprep.subr.mxu0 %v4480
        %v4482 = vand.u32 %v480, 4294901760
        %4483 = vmatpush1.msra.mxu0 %v4482
        %v4484 = vand.u32 %v485, 4294901760
        %4485 = vmatprep.subr.mxu0 %v4484
        %v4486 = vand.u32 %v484, 4294901760
        %4487 = vmatpush1.msra.mxu0 %v4486
        %v4488 = vand.u32 %v489, 4294901760
        %4489 = vmatprep.subr.mxu0 %v4488
        %v4490 = vand.u32 %v488, 4294901760
        %4491 = vmatpush1.msra.mxu0 %v4490
        %v4492 = vand.u32 %v507, 4294901760
        %v4493 = vsub.f32 %v507, %v4492
        %v4494 = vand.u32 %v4493, 4294901760
        %v4495 = vsub.f32 %v4493, %v4494
        %v4496 = vand.u32 %v4495, 4294901760
        %4497 = vmatprep.mubr.f32.mxu0 %v4496
        %v4498 = vand.u32 %v505, 4294901760
        %v4499 = vsub.f32 %v505, %v4498
        %v4500 = vand.u32 %v4499, 4294901760
        %v4501 = vsub.f32 %v4499, %v4500
        %v4502 = vand.u32 %v4501, 4294901760
        %4503 = vmatmul.mubr.f32.gmra.mrb[0].mxu0 %v4502
        %v4504 = vpop.f32.mrb[0].mxu0
        %v4505 = vadd.f32 %v4360, %v4504
        %v4506 = vpop.f32.mrb[0].mxu0
        %v4507 = vadd.f32 %v4362, %v4506
        %4508 = vdwg.mxu0
        %v4509 = vand.u32 %v365, 4294901760
        %v4510 = vsub.f32 %v365, %v4509
        %v4511 = vand.u32 %v4510, 4294901760
        %v4512 = vsub.f32 %v4510, %v4511
        %v4513 = vand.u32 %v4512, 4294901760
        %4514 = vmatprep.subr.mxu0 %v4513
        %v4515 = vand.u32 %v364, 4294901760
        %v4516 = vsub.f32 %v364, %v4515
        %v4517 = vand.u32 %v4516, 4294901760
        %v4518 = vsub.f32 %v4516, %v4517
        %v4519 = vand.u32 %v4518, 4294901760
        %4520 = vmatpush1.msra.mxu0 %v4519
        %v4521 = vand.u32 %v369, 4294901760
        %v4522 = vsub.f32 %v369, %v4521
        %v4523 = vand.u32 %v4522, 4294901760
        %v4524 = vsub.f32 %v4522, %v4523
        %v4525 = vand.u32 %v4524, 4294901760
        %4526 = vmatprep.subr.mxu0 %v4525
        %v4527 = vand.u32 %v368, 4294901760
        %v4528 = vsub.f32 %v368, %v4527
        %v4529 = vand.u32 %v4528, 4294901760
        %v4530 = vsub.f32 %v4528, %v4529
        %v4531 = vand.u32 %v4530, 4294901760
        %4532 = vmatpush1.msra.mxu0 %v4531
        %v4533 = vand.u32 %v373, 4294901760
        %v4534 = vsub.f32 %v373, %v4533
        %v4535 = vand.u32 %v4534, 4294901760
        %v4536 = vsub.f32 %v4534, %v4535
        %v4537 = vand.u32 %v4536, 4294901760
        %4538 = vmatprep.subr.mxu0 %v4537
        %v4539 = vand.u32 %v372, 4294901760
        %v4540 = vsub.f32 %v372, %v4539
        %v4541 = vand.u32 %v4540, 4294901760
        %v4542 = vsub.f32 %v4540, %v4541
        %v4543 = vand.u32 %v4542, 4294901760
        %4544 = vmatpush1.msra.mxu0 %v4543
        %v4545 = vand.u32 %v377, 4294901760
        %v4546 = vsub.f32 %v377, %v4545
        %v4547 = vand.u32 %v4546, 4294901760
        %v4548 = vsub.f32 %v4546, %v4547
        %v4549 = vand.u32 %v4548, 4294901760
        %4550 = vmatprep.subr.mxu0 %v4549
        %v4551 = vand.u32 %v376, 4294901760
        %v4552 = vsub.f32 %v376, %v4551
        %v4553 = vand.u32 %v4552, 4294901760
        %v4554 = vsub.f32 %v4552, %v4553
        %v4555 = vand.u32 %v4554, 4294901760
        %4556 = vmatpush1.msra.mxu0 %v4555
        %v4557 = vand.u32 %v381, 4294901760
        %v4558 = vsub.f32 %v381, %v4557
        %v4559 = vand.u32 %v4558, 4294901760
        %v4560 = vsub.f32 %v4558, %v4559
        %v4561 = vand.u32 %v4560, 4294901760
        %4562 = vmatprep.subr.mxu0 %v4561
        %v4563 = vand.u32 %v380, 4294901760
        %v4564 = vsub.f32 %v380, %v4563
        %v4565 = vand.u32 %v4564, 4294901760
        %v4566 = vsub.f32 %v4564, %v4565
        %v4567 = vand.u32 %v4566, 4294901760
        %4568 = vmatpush1.msra.mxu0 %v4567
        %v4569 = vand.u32 %v385, 4294901760
        %v4570 = vsub.f32 %v385, %v4569
        %v4571 = vand.u32 %v4570, 4294901760
        %v4572 = vsub.f32 %v4570, %v4571
        %v4573 = vand.u32 %v4572, 4294901760
        %4574 = vmatprep.subr.mxu0 %v4573
        %v4575 = vand.u32 %v384, 4294901760
        %v4576 = vsub.f32 %v384, %v4575
        %v4577 = vand.u32 %v4576, 4294901760
        %v4578 = vsub.f32 %v4576, %v4577
        %v4579 = vand.u32 %v4578, 4294901760
        %4580 = vmatpush1.msra.mxu0 %v4579
        %v4581 = vand.u32 %v389, 4294901760
        %v4582 = vsub.f32 %v389, %v4581
        %v4583 = vand.u32 %v4582, 4294901760
        %v4584 = vsub.f32 %v4582, %v4583
        %v4585 = vand.u32 %v4584, 4294901760
        %4586 = vmatprep.subr.mxu0 %v4585
        %v4587 = vand.u32 %v388, 4294901760
        %v4588 = vsub.f32 %v388, %v4587
        %v4589 = vand.u32 %v4588, 4294901760
        %v4590 = vsub.f32 %v4588, %v4589
        %v4591 = vand.u32 %v4590, 4294901760
        %4592 = vmatpush1.msra.mxu0 %v4591
        %v4593 = vand.u32 %v393, 4294901760
        %v4594 = vsub.f32 %v393, %v4593
        %v4595 = vand.u32 %v4594, 4294901760
        %v4596 = vsub.f32 %v4594, %v4595
        %v4597 = vand.u32 %v4596, 4294901760
        %4598 = vmatprep.subr.mxu0 %v4597
        %v4599 = vand.u32 %v392, 4294901760
        %v4600 = vsub.f32 %v392, %v4599
        %v4601 = vand.u32 %v4600, 4294901760
        %v4602 = vsub.f32 %v4600, %v4601
        %v4603 = vand.u32 %v4602, 4294901760
        %4604 = vmatpush1.msra.mxu0 %v4603
        %v4605 = vand.u32 %v397, 4294901760
        %v4606 = vsub.f32 %v397, %v4605
        %v4607 = vand.u32 %v4606, 4294901760
        %v4608 = vsub.f32 %v4606, %v4607
        %v4609 = vand.u32 %v4608, 4294901760
        %4610 = vmatprep.subr.mxu0 %v4609
        %v4611 = vand.u32 %v396, 4294901760
        %v4612 = vsub.f32 %v396, %v4611
        %v4613 = vand.u32 %v4612, 4294901760
        %v4614 = vsub.f32 %v4612, %v4613
        %v4615 = vand.u32 %v4614, 4294901760
        %4616 = vmatpush1.msra.mxu0 %v4615
        %v4617 = vand.u32 %v401, 4294901760
        %v4618 = vsub.f32 %v401, %v4617
        %v4619 = vand.u32 %v4618, 4294901760
        %v4620 = vsub.f32 %v4618, %v4619
        %v4621 = vand.u32 %v4620, 4294901760
        %4622 = vmatprep.subr.mxu0 %v4621
        %v4623 = vand.u32 %v400, 4294901760
        %v4624 = vsub.f32 %v400, %v4623
        %v4625 = vand.u32 %v4624, 4294901760
        %v4626 = vsub.f32 %v4624, %v4625
        %v4627 = vand.u32 %v4626, 4294901760
        %4628 = vmatpush1.msra.mxu0 %v4627
        %v4629 = vand.u32 %v405, 4294901760
        %v4630 = vsub.f32 %v405, %v4629
        %v4631 = vand.u32 %v4630, 4294901760
        %v4632 = vsub.f32 %v4630, %v4631
        %v4633 = vand.u32 %v4632, 4294901760
        %4634 = vmatprep.subr.mxu0 %v4633
        %v4635 = vand.u32 %v404, 4294901760
        %v4636 = vsub.f32 %v404, %v4635
        %v4637 = vand.u32 %v4636, 4294901760
        %v4638 = vsub.f32 %v4636, %v4637
        %v4639 = vand.u32 %v4638, 4294901760
        %4640 = vmatpush1.msra.mxu0 %v4639
        %v4641 = vand.u32 %v409, 4294901760
        %v4642 = vsub.f32 %v409, %v4641
        %v4643 = vand.u32 %v4642, 4294901760
        %v4644 = vsub.f32 %v4642, %v4643
        %v4645 = vand.u32 %v4644, 4294901760
        %4646 = vmatprep.subr.mxu0 %v4645
        %v4647 = vand.u32 %v408, 4294901760
        %v4648 = vsub.f32 %v408, %v4647
        %v4649 = vand.u32 %v4648, 4294901760
        %v4650 = vsub.f32 %v4648, %v4649
        %v4651 = vand.u32 %v4650, 4294901760
        %4652 = vmatpush1.msra.mxu0 %v4651
        %v4653 = vand.u32 %v413, 4294901760
        %v4654 = vsub.f32 %v413, %v4653
        %v4655 = vand.u32 %v4654, 4294901760
        %v4656 = vsub.f32 %v4654, %v4655
        %v4657 = vand.u32 %v4656, 4294901760
        %4658 = vmatprep.subr.mxu0 %v4657
        %v4659 = vand.u32 %v412, 4294901760
        %v4660 = vsub.f32 %v412, %v4659
        %v4661 = vand.u32 %v4660, 4294901760
        %v4662 = vsub.f32 %v4660, %v4661
        %v4663 = vand.u32 %v4662, 4294901760
        %4664 = vmatpush1.msra.mxu0 %v4663
        %v4665 = vand.u32 %v417, 4294901760
        %v4666 = vsub.f32 %v417, %v4665
        %v4667 = vand.u32 %v4666, 4294901760
        %v4668 = vsub.f32 %v4666, %v4667
        %v4669 = vand.u32 %v4668, 4294901760
        %4670 = vmatprep.subr.mxu0 %v4669
        %v4671 = vand.u32 %v416, 4294901760
        %v4672 = vsub.f32 %v416, %v4671
        %v4673 = vand.u32 %v4672, 4294901760
        %v4674 = vsub.f32 %v4672, %v4673
        %v4675 = vand.u32 %v4674, 4294901760
        %4676 = vmatpush1.msra.mxu0 %v4675
        %v4677 = vand.u32 %v421, 4294901760
        %v4678 = vsub.f32 %v421, %v4677
        %v4679 = vand.u32 %v4678, 4294901760
        %v4680 = vsub.f32 %v4678, %v4679
        %v4681 = vand.u32 %v4680, 4294901760
        %4682 = vmatprep.subr.mxu0 %v4681
        %v4683 = vand.u32 %v420, 4294901760
        %v4684 = vsub.f32 %v420, %v4683
        %v4685 = vand.u32 %v4684, 4294901760
        %v4686 = vsub.f32 %v4684, %v4685
        %v4687 = vand.u32 %v4686, 4294901760
        %4688 = vmatpush1.msra.mxu0 %v4687
        %v4689 = vand.u32 %v425, 4294901760
        %v4690 = vsub.f32 %v425, %v4689
        %v4691 = vand.u32 %v4690, 4294901760
        %v4692 = vsub.f32 %v4690, %v4691
        %v4693 = vand.u32 %v4692, 4294901760
        %4694 = vmatprep.subr.mxu0 %v4693
        %v4695 = vand.u32 %v424, 4294901760
        %v4696 = vsub.f32 %v424, %v4695
        %v4697 = vand.u32 %v4696, 4294901760
        %v4698 = vsub.f32 %v4696, %v4697
        %v4699 = vand.u32 %v4698, 4294901760
        %4700 = vmatpush1.msra.mxu0 %v4699
        %v4701 = vand.u32 %v429, 4294901760
        %v4702 = vsub.f32 %v429, %v4701
        %v4703 = vand.u32 %v4702, 4294901760
        %v4704 = vsub.f32 %v4702, %v4703
        %v4705 = vand.u32 %v4704, 4294901760
        %4706 = vmatprep.subr.mxu0 %v4705
        %v4707 = vand.u32 %v428, 4294901760
        %v4708 = vsub.f32 %v428, %v4707
        %v4709 = vand.u32 %v4708, 4294901760
        %v4710 = vsub.f32 %v4708, %v4709
        %v4711 = vand.u32 %v4710, 4294901760
        %4712 = vmatpush1.msra.mxu0 %v4711
        %v4713 = vand.u32 %v433, 4294901760
        %v4714 = vsub.f32 %v433, %v4713
        %v4715 = vand.u32 %v4714, 4294901760
        %v4716 = vsub.f32 %v4714, %v4715
        %v4717 = vand.u32 %v4716, 4294901760
        %4718 = vmatprep.subr.mxu0 %v4717
        %v4719 = vand.u32 %v432, 4294901760
        %v4720 = vsub.f32 %v432, %v4719
        %v4721 = vand.u32 %v4720, 4294901760
        %v4722 = vsub.f32 %v4720, %v4721
        %v4723 = vand.u32 %v4722, 4294901760
        %4724 = vmatpush1.msra.mxu0 %v4723
        %v4725 = vand.u32 %v437, 4294901760
        %v4726 = vsub.f32 %v437, %v4725
        %v4727 = vand.u32 %v4726, 4294901760
        %v4728 = vsub.f32 %v4726, %v4727
        %v4729 = vand.u32 %v4728, 4294901760
        %4730 = vmatprep.subr.mxu0 %v4729
        %v4731 = vand.u32 %v436, 4294901760
        %v4732 = vsub.f32 %v436, %v4731
        %v4733 = vand.u32 %v4732, 4294901760
        %v4734 = vsub.f32 %v4732, %v4733
        %v4735 = vand.u32 %v4734, 4294901760
        %4736 = vmatpush1.msra.mxu0 %v4735
        %v4737 = vand.u32 %v441, 4294901760
        %v4738 = vsub.f32 %v441, %v4737
        %v4739 = vand.u32 %v4738, 4294901760
        %v4740 = vsub.f32 %v4738, %v4739
        %v4741 = vand.u32 %v4740, 4294901760
        %4742 = vmatprep.subr.mxu0 %v4741
        %v4743 = vand.u32 %v440, 4294901760
        %v4744 = vsub.f32 %v440, %v4743
        %v4745 = vand.u32 %v4744, 4294901760
        %v4746 = vsub.f32 %v4744, %v4745
        %v4747 = vand.u32 %v4746, 4294901760
        %4748 = vmatpush1.msra.mxu0 %v4747
        %v4749 = vand.u32 %v445, 4294901760
        %v4750 = vsub.f32 %v445, %v4749
        %v4751 = vand.u32 %v4750, 4294901760
        %v4752 = vsub.f32 %v4750, %v4751
        %v4753 = vand.u32 %v4752, 4294901760
        %4754 = vmatprep.subr.mxu0 %v4753
        %v4755 = vand.u32 %v444, 4294901760
        %v4756 = vsub.f32 %v444, %v4755
        %v4757 = vand.u32 %v4756, 4294901760
        %v4758 = vsub.f32 %v4756, %v4757
        %v4759 = vand.u32 %v4758, 4294901760
        %4760 = vmatpush1.msra.mxu0 %v4759
        %v4761 = vand.u32 %v449, 4294901760
        %v4762 = vsub.f32 %v449, %v4761
        %v4763 = vand.u32 %v4762, 4294901760
        %v4764 = vsub.f32 %v4762, %v4763
        %v4765 = vand.u32 %v4764, 4294901760
        %4766 = vmatprep.subr.mxu0 %v4765
        %v4767 = vand.u32 %v448, 4294901760
        %v4768 = vsub.f32 %v448, %v4767
        %v4769 = vand.u32 %v4768, 4294901760
        %v4770 = vsub.f32 %v4768, %v4769
        %v4771 = vand.u32 %v4770, 4294901760
        %4772 = vmatpush1.msra.mxu0 %v4771
        %v4773 = vand.u32 %v453, 4294901760
        %v4774 = vsub.f32 %v453, %v4773
        %v4775 = vand.u32 %v4774, 4294901760
        %v4776 = vsub.f32 %v4774, %v4775
        %v4777 = vand.u32 %v4776, 4294901760
        %4778 = vmatprep.subr.mxu0 %v4777
        %v4779 = vand.u32 %v452, 4294901760
        %v4780 = vsub.f32 %v452, %v4779
        %v4781 = vand.u32 %v4780, 4294901760
        %v4782 = vsub.f32 %v4780, %v4781
        %v4783 = vand.u32 %v4782, 4294901760
        %4784 = vmatpush1.msra.mxu0 %v4783
        %v4785 = vand.u32 %v457, 4294901760
        %v4786 = vsub.f32 %v457, %v4785
        %v4787 = vand.u32 %v4786, 4294901760
        %v4788 = vsub.f32 %v4786, %v4787
        %v4789 = vand.u32 %v4788, 4294901760
        %4790 = vmatprep.subr.mxu0 %v4789
        %v4791 = vand.u32 %v456, 4294901760
        %v4792 = vsub.f32 %v456, %v4791
        %v4793 = vand.u32 %v4792, 4294901760
        %v4794 = vsub.f32 %v4792, %v4793
        %v4795 = vand.u32 %v4794, 4294901760
        %4796 = vmatpush1.msra.mxu0 %v4795
        %v4797 = vand.u32 %v461, 4294901760
        %v4798 = vsub.f32 %v461, %v4797
        %v4799 = vand.u32 %v4798, 4294901760
        %v4800 = vsub.f32 %v4798, %v4799
        %v4801 = vand.u32 %v4800, 4294901760
        %4802 = vmatprep.subr.mxu0 %v4801
        %v4803 = vand.u32 %v460, 4294901760
        %v4804 = vsub.f32 %v460, %v4803
        %v4805 = vand.u32 %v4804, 4294901760
        %v4806 = vsub.f32 %v4804, %v4805
        %v4807 = vand.u32 %v4806, 4294901760
        %4808 = vmatpush1.msra.mxu0 %v4807
        %v4809 = vand.u32 %v465, 4294901760
        %v4810 = vsub.f32 %v465, %v4809
        %v4811 = vand.u32 %v4810, 4294901760
        %v4812 = vsub.f32 %v4810, %v4811
        %v4813 = vand.u32 %v4812, 4294901760
        %4814 = vmatprep.subr.mxu0 %v4813
        %v4815 = vand.u32 %v464, 4294901760
        %v4816 = vsub.f32 %v464, %v4815
        %v4817 = vand.u32 %v4816, 4294901760
        %v4818 = vsub.f32 %v4816, %v4817
        %v4819 = vand.u32 %v4818, 4294901760
        %4820 = vmatpush1.msra.mxu0 %v4819
        %v4821 = vand.u32 %v469, 4294901760
        %v4822 = vsub.f32 %v469, %v4821
        %v4823 = vand.u32 %v4822, 4294901760
        %v4824 = vsub.f32 %v4822, %v4823
        %v4825 = vand.u32 %v4824, 4294901760
        %4826 = vmatprep.subr.mxu0 %v4825
        %v4827 = vand.u32 %v468, 4294901760
        %v4828 = vsub.f32 %v468, %v4827
        %v4829 = vand.u32 %v4828, 4294901760
        %v4830 = vsub.f32 %v4828, %v4829
        %v4831 = vand.u32 %v4830, 4294901760
        %4832 = vmatpush1.msra.mxu0 %v4831
        %v4833 = vand.u32 %v473, 4294901760
        %v4834 = vsub.f32 %v473, %v4833
        %v4835 = vand.u32 %v4834, 4294901760
        %v4836 = vsub.f32 %v4834, %v4835
        %v4837 = vand.u32 %v4836, 4294901760
        %4838 = vmatprep.subr.mxu0 %v4837
        %v4839 = vand.u32 %v472, 4294901760
        %v4840 = vsub.f32 %v472, %v4839
        %v4841 = vand.u32 %v4840, 4294901760
        %v4842 = vsub.f32 %v4840, %v4841
        %v4843 = vand.u32 %v4842, 4294901760
        %4844 = vmatpush1.msra.mxu0 %v4843
        %v4845 = vand.u32 %v477, 4294901760
        %v4846 = vsub.f32 %v477, %v4845
        %v4847 = vand.u32 %v4846, 4294901760
        %v4848 = vsub.f32 %v4846, %v4847
        %v4849 = vand.u32 %v4848, 4294901760
        %4850 = vmatprep.subr.mxu0 %v4849
        %v4851 = vand.u32 %v476, 4294901760
        %v4852 = vsub.f32 %v476, %v4851
        %v4853 = vand.u32 %v4852, 4294901760
        %v4854 = vsub.f32 %v4852, %v4853
        %v4855 = vand.u32 %v4854, 4294901760
        %4856 = vmatpush1.msra.mxu0 %v4855
        %v4857 = vand.u32 %v481, 4294901760
        %v4858 = vsub.f32 %v481, %v4857
        %v4859 = vand.u32 %v4858, 4294901760
        %v4860 = vsub.f32 %v4858, %v4859
        %v4861 = vand.u32 %v4860, 4294901760
        %4862 = vmatprep.subr.mxu0 %v4861
        %v4863 = vand.u32 %v480, 4294901760
        %v4864 = vsub.f32 %v480, %v4863
        %v4865 = vand.u32 %v4864, 4294901760
        %v4866 = vsub.f32 %v4864, %v4865
        %v4867 = vand.u32 %v4866, 4294901760
        %4868 = vmatpush1.msra.mxu0 %v4867
        %v4869 = vand.u32 %v485, 4294901760
        %v4870 = vsub.f32 %v485, %v4869
        %v4871 = vand.u32 %v4870, 4294901760
        %v4872 = vsub.f32 %v4870, %v4871
        %v4873 = vand.u32 %v4872, 4294901760
        %4874 = vmatprep.subr.mxu0 %v4873
        %v4875 = vand.u32 %v484, 4294901760
        %v4876 = vsub.f32 %v484, %v4875
        %v4877 = vand.u32 %v4876, 4294901760
        %v4878 = vsub.f32 %v4876, %v4877
        %v4879 = vand.u32 %v4878, 4294901760
        %4880 = vmatpush1.msra.mxu0 %v4879
        %v4881 = vand.u32 %v489, 4294901760
        %v4882 = vsub.f32 %v489, %v4881
        %v4883 = vand.u32 %v4882, 4294901760
        %v4884 = vsub.f32 %v4882, %v4883
        %v4885 = vand.u32 %v4884, 4294901760
        %4886 = vmatprep.subr.mxu0 %v4885
        %v4887 = vand.u32 %v488, 4294901760
        %v4888 = vsub.f32 %v488, %v4887
        %v4889 = vand.u32 %v4888, 4294901760
        %v4890 = vsub.f32 %v4888, %v4889
        %v4891 = vand.u32 %v4890, 4294901760
        %4892 = vmatpush1.msra.mxu0 %v4891
        %v4893 = vand.u32 %v507, 4294901760
        %4894 = vmatprep.mubr.f32.mxu0 %v4893
        %v4895 = vand.u32 %v505, 4294901760
        %4896 = vmatmul.mubr.f32.gmra.mrb[0].mxu0 %v4895
        %v4897 = vpop.f32.mrb[0].mxu0
        %v4898 = vadd.f32 %v4505, %v4897
        %v4899 = vpop.f32.mrb[0].mxu0
        %v4900 = vadd.f32 %v4507, %v4899
        %4901 = vdwg.mxu0
        %v4902 = vand.u32 %v365, 4294901760
        %v4903 = vsub.f32 %v365, %v4902
        %4904 = vmatprep.subr.mxu0 %v4903
        %v4905 = vand.u32 %v364, 4294901760
        %v4906 = vsub.f32 %v364, %v4905
        %4907 = vmatpush1.msra.mxu0 %v4906
        %v4908 = vand.u32 %v369, 4294901760
        %v4909 = vsub.f32 %v369, %v4908
        %4910 = vmatprep.subr.mxu0 %v4909
        %v4911 = vand.u32 %v368, 4294901760
        %v4912 = vsub.f32 %v368, %v4911
        %4913 = vmatpush1.msra.mxu0 %v4912
        %v4914 = vand.u32 %v373, 4294901760
        %v4915 = vsub.f32 %v373, %v4914
        %4916 = vmatprep.subr.mxu0 %v4915
        %v4917 = vand.u32 %v372, 4294901760
        %v4918 = vsub.f32 %v372, %v4917
        %4919 = vmatpush1.msra.mxu0 %v4918
        %v4920 = vand.u32 %v377, 4294901760
        %v4921 = vsub.f32 %v377, %v4920
        %4922 = vmatprep.subr.mxu0 %v4921
        %v4923 = vand.u32 %v376, 4294901760
        %v4924 = vsub.f32 %v376, %v4923
        %4925 = vmatpush1.msra.mxu0 %v4924
        %v4926 = vand.u32 %v381, 4294901760
        %v4927 = vsub.f32 %v381, %v4926
        %4928 = vmatprep.subr.mxu0 %v4927
        %v4929 = vand.u32 %v380, 4294901760
        %v4930 = vsub.f32 %v380, %v4929
        %4931 = vmatpush1.msra.mxu0 %v4930
        %v4932 = vand.u32 %v385, 4294901760
        %v4933 = vsub.f32 %v385, %v4932
        %4934 = vmatprep.subr.mxu0 %v4933
        %v4935 = vand.u32 %v384, 4294901760
        %v4936 = vsub.f32 %v384, %v4935
        %4937 = vmatpush1.msra.mxu0 %v4936
        %v4938 = vand.u32 %v389, 4294901760
        %v4939 = vsub.f32 %v389, %v4938
        %4940 = vmatprep.subr.mxu0 %v4939
        %v4941 = vand.u32 %v388, 4294901760
        %v4942 = vsub.f32 %v388, %v4941
        %4943 = vmatpush1.msra.mxu0 %v4942
        %v4944 = vand.u32 %v393, 4294901760
        %v4945 = vsub.f32 %v393, %v4944
        %4946 = vmatprep.subr.mxu0 %v4945
        %v4947 = vand.u32 %v392, 4294901760
        %v4948 = vsub.f32 %v392, %v4947
        %4949 = vmatpush1.msra.mxu0 %v4948
        %v4950 = vand.u32 %v397, 4294901760
        %v4951 = vsub.f32 %v397, %v4950
        %4952 = vmatprep.subr.mxu0 %v4951
        %v4953 = vand.u32 %v396, 4294901760
        %v4954 = vsub.f32 %v396, %v4953
        %4955 = vmatpush1.msra.mxu0 %v4954
        %v4956 = vand.u32 %v401, 4294901760
        %v4957 = vsub.f32 %v401, %v4956
        %4958 = vmatprep.subr.mxu0 %v4957
        %v4959 = vand.u32 %v400, 4294901760
        %v4960 = vsub.f32 %v400, %v4959
        %4961 = vmatpush1.msra.mxu0 %v4960
        %v4962 = vand.u32 %v405, 4294901760
        %v4963 = vsub.f32 %v405, %v4962
        %4964 = vmatprep.subr.mxu0 %v4963
        %v4965 = vand.u32 %v404, 4294901760
        %v4966 = vsub.f32 %v404, %v4965
        %4967 = vmatpush1.msra.mxu0 %v4966
        %v4968 = vand.u32 %v409, 4294901760
        %v4969 = vsub.f32 %v409, %v4968
        %4970 = vmatprep.subr.mxu0 %v4969
        %v4971 = vand.u32 %v408, 4294901760
        %v4972 = vsub.f32 %v408, %v4971
        %4973 = vmatpush1.msra.mxu0 %v4972
        %v4974 = vand.u32 %v413, 4294901760
        %v4975 = vsub.f32 %v413, %v4974
        %4976 = vmatprep.subr.mxu0 %v4975
        %v4977 = vand.u32 %v412, 4294901760
        %v4978 = vsub.f32 %v412, %v4977
        %4979 = vmatpush1.msra.mxu0 %v4978
        %v4980 = vand.u32 %v417, 4294901760
        %v4981 = vsub.f32 %v417, %v4980
        %4982 = vmatprep.subr.mxu0 %v4981
        %v4983 = vand.u32 %v416, 4294901760
        %v4984 = vsub.f32 %v416, %v4983
        %4985 = vmatpush1.msra.mxu0 %v4984
        %v4986 = vand.u32 %v421, 4294901760
        %v4987 = vsub.f32 %v421, %v4986
        %4988 = vmatprep.subr.mxu0 %v4987
        %v4989 = vand.u32 %v420, 4294901760
        %v4990 = vsub.f32 %v420, %v4989
        %4991 = vmatpush1.msra.mxu0 %v4990
        %v4992 = vand.u32 %v425, 4294901760
        %v4993 = vsub.f32 %v425, %v4992
        %4994 = vmatprep.subr.mxu0 %v4993
        %v4995 = vand.u32 %v424, 4294901760
        %v4996 = vsub.f32 %v424, %v4995
        %4997 = vmatpush1.msra.mxu0 %v4996
        %v4998 = vand.u32 %v429, 4294901760
        %v4999 = vsub.f32 %v429, %v4998
        %5000 = vmatprep.subr.mxu0 %v4999
        %v5001 = vand.u32 %v428, 4294901760
        %v5002 = vsub.f32 %v428, %v5001
        %5003 = vmatpush1.msra.mxu0 %v5002
        %v5004 = vand.u32 %v433, 4294901760
        %v5005 = vsub.f32 %v433, %v5004
        %5006 = vmatprep.subr.mxu0 %v5005
        %v5007 = vand.u32 %v432, 4294901760
        %v5008 = vsub.f32 %v432, %v5007
        %5009 = vmatpush1.msra.mxu0 %v5008
        %v5010 = vand.u32 %v437, 4294901760
        %v5011 = vsub.f32 %v437, %v5010
        %5012 = vmatprep.subr.mxu0 %v5011
        %v5013 = vand.u32 %v436, 4294901760
        %v5014 = vsub.f32 %v436, %v5013
        %5015 = vmatpush1.msra.mxu0 %v5014
        %v5016 = vand.u32 %v441, 4294901760
        %v5017 = vsub.f32 %v441, %v5016
        %5018 = vmatprep.subr.mxu0 %v5017
        %v5019 = vand.u32 %v440, 4294901760
        %v5020 = vsub.f32 %v440, %v5019
        %5021 = vmatpush1.msra.mxu0 %v5020
        %v5022 = vand.u32 %v445, 4294901760
        %v5023 = vsub.f32 %v445, %v5022
        %5024 = vmatprep.subr.mxu0 %v5023
        %v5025 = vand.u32 %v444, 4294901760
        %v5026 = vsub.f32 %v444, %v5025
        %5027 = vmatpush1.msra.mxu0 %v5026
        %v5028 = vand.u32 %v449, 4294901760
        %v5029 = vsub.f32 %v449, %v5028
        %5030 = vmatprep.subr.mxu0 %v5029
        %v5031 = vand.u32 %v448, 4294901760
        %v5032 = vsub.f32 %v448, %v5031
        %5033 = vmatpush1.msra.mxu0 %v5032
        %v5034 = vand.u32 %v453, 4294901760
        %v5035 = vsub.f32 %v453, %v5034
        %5036 = vmatprep.subr.mxu0 %v5035
        %v5037 = vand.u32 %v452, 4294901760
        %v5038 = vsub.f32 %v452, %v5037
        %5039 = vmatpush1.msra.mxu0 %v5038
        %v5040 = vand.u32 %v457, 4294901760
        %v5041 = vsub.f32 %v457, %v5040
        %5042 = vmatprep.subr.mxu0 %v5041
        %v5043 = vand.u32 %v456, 4294901760
        %v5044 = vsub.f32 %v456, %v5043
        %5045 = vmatpush1.msra.mxu0 %v5044
        %v5046 = vand.u32 %v461, 4294901760
        %v5047 = vsub.f32 %v461, %v5046
        %5048 = vmatprep.subr.mxu0 %v5047
        %v5049 = vand.u32 %v460, 4294901760
        %v5050 = vsub.f32 %v460, %v5049
        %5051 = vmatpush1.msra.mxu0 %v5050
        %v5052 = vand.u32 %v465, 4294901760
        %v5053 = vsub.f32 %v465, %v5052
        %5054 = vmatprep.subr.mxu0 %v5053
        %v5055 = vand.u32 %v464, 4294901760
        %v5056 = vsub.f32 %v464, %v5055
        %5057 = vmatpush1.msra.mxu0 %v5056
        %v5058 = vand.u32 %v469, 4294901760
        %v5059 = vsub.f32 %v469, %v5058
        %5060 = vmatprep.subr.mxu0 %v5059
        %v5061 = vand.u32 %v468, 4294901760
        %v5062 = vsub.f32 %v468, %v5061
        %5063 = vmatpush1.msra.mxu0 %v5062
        %v5064 = vand.u32 %v473, 4294901760
        %v5065 = vsub.f32 %v473, %v5064
        %5066 = vmatprep.subr.mxu0 %v5065
        %v5067 = vand.u32 %v472, 4294901760
        %v5068 = vsub.f32 %v472, %v5067
        %5069 = vmatpush1.msra.mxu0 %v5068
        %v5070 = vand.u32 %v477, 4294901760
        %v5071 = vsub.f32 %v477, %v5070
        %5072 = vmatprep.subr.mxu0 %v5071
        %v5073 = vand.u32 %v476, 4294901760
        %v5074 = vsub.f32 %v476, %v5073
        %5075 = vmatpush1.msra.mxu0 %v5074
        %v5076 = vand.u32 %v481, 4294901760
        %v5077 = vsub.f32 %v481, %v5076
        %5078 = vmatprep.subr.mxu0 %v5077
        %v5079 = vand.u32 %v480, 4294901760
        %v5080 = vsub.f32 %v480, %v5079
        %5081 = vmatpush1.msra.mxu0 %v5080
        %v5082 = vand.u32 %v485, 4294901760
        %v5083 = vsub.f32 %v485, %v5082
        %5084 = vmatprep.subr.mxu0 %v5083
        %v5085 = vand.u32 %v484, 4294901760
        %v5086 = vsub.f32 %v484, %v5085
        %5087 = vmatpush1.msra.mxu0 %v5086
        %v5088 = vand.u32 %v489, 4294901760
        %v5089 = vsub.f32 %v489, %v5088
        %5090 = vmatprep.subr.mxu0 %v5089
        %v5091 = vand.u32 %v488, 4294901760
        %v5092 = vsub.f32 %v488, %v5091
        %5093 = vmatpush1.msra.mxu0 %v5092
        %v5094 = vand.u32 %v507, 4294901760
        %v5095 = vsub.f32 %v507, %v5094
        %5096 = vmatprep.mubr.f32.mxu0 %v5095
        %v5097 = vand.u32 %v505, 4294901760
        %v5098 = vsub.f32 %v505, %v5097
        %5099 = vmatmul.mubr.f32.gmra.mrb[0].mxu0 %v5098
        %v5100 = vpop.f32.mrb[0].mxu0
        %v5101 = vadd.f32 %v4898, %v5100
        %v5102 = vpop.f32.mrb[0].mxu0
        %v5103 = vadd.f32 %v4900, %v5102
        %5104 = vdwg.mxu0
        %v5105 = vand.u32 %v365, 4294901760
        %5106 = vmatprep.subr.mxu0 %v5105
        %v5107 = vand.u32 %v364, 4294901760
        %5108 = vmatpush1.msra.mxu0 %v5107
        %v5109 = vand.u32 %v369, 4294901760
        %5110 = vmatprep.subr.mxu0 %v5109
        %v5111 = vand.u32 %v368, 4294901760
        %5112 = vmatpush1.msra.mxu0 %v5111
        %v5113 = vand.u32 %v373, 4294901760
        %5114 = vmatprep.subr.mxu0 %v5113
        %v5115 = vand.u32 %v372, 4294901760
        %5116 = vmatpush1.msra.mxu0 %v5115
        %v5117 = vand.u32 %v377, 4294901760
        %5118 = vmatprep.subr.mxu0 %v5117
        %v5119 = vand.u32 %v376, 4294901760
        %5120 = vmatpush1.msra.mxu0 %v5119
        %v5121 = vand.u32 %v381, 4294901760
        %5122 = vmatprep.subr.mxu0 %v5121
        %v5123 = vand.u32 %v380, 4294901760
        %5124 = vmatpush1.msra.mxu0 %v5123
        %v5125 = vand.u32 %v385, 4294901760
        %5126 = vmatprep.subr.mxu0 %v5125
        %v5127 = vand.u32 %v384, 4294901760
        %5128 = vmatpush1.msra.mxu0 %v5127
        %v5129 = vand.u32 %v389, 4294901760
        %5130 = vmatprep.subr.mxu0 %v5129
        %v5131 = vand.u32 %v388, 4294901760
        %5132 = vmatpush1.msra.mxu0 %v5131
        %v5133 = vand.u32 %v393, 4294901760
        %5134 = vmatprep.subr.mxu0 %v5133
        %v5135 = vand.u32 %v392, 4294901760
        %5136 = vmatpush1.msra.mxu0 %v5135
        %v5137 = vand.u32 %v397, 4294901760
        %5138 = vmatprep.subr.mxu0 %v5137
        %v5139 = vand.u32 %v396, 4294901760
        %5140 = vmatpush1.msra.mxu0 %v5139
        %v5141 = vand.u32 %v401, 4294901760
        %5142 = vmatprep.subr.mxu0 %v5141
        %v5143 = vand.u32 %v400, 4294901760
        %5144 = vmatpush1.msra.mxu0 %v5143
        %v5145 = vand.u32 %v405, 4294901760
        %5146 = vmatprep.subr.mxu0 %v5145
        %v5147 = vand.u32 %v404, 4294901760
        %5148 = vmatpush1.msra.mxu0 %v5147
        %v5149 = vand.u32 %v409, 4294901760
        %5150 = vmatprep.subr.mxu0 %v5149
        %v5151 = vand.u32 %v408, 4294901760
        %5152 = vmatpush1.msra.mxu0 %v5151
        %v5153 = vand.u32 %v413, 4294901760
        %5154 = vmatprep.subr.mxu0 %v5153
        %v5155 = vand.u32 %v412, 4294901760
        %5156 = vmatpush1.msra.mxu0 %v5155
        %v5157 = vand.u32 %v417, 4294901760
        %5158 = vmatprep.subr.mxu0 %v5157
        %v5159 = vand.u32 %v416, 4294901760
        %5160 = vmatpush1.msra.mxu0 %v5159
        %v5161 = vand.u32 %v421, 4294901760
        %5162 = vmatprep.subr.mxu0 %v5161
        %v5163 = vand.u32 %v420, 4294901760
        %5164 = vmatpush1.msra.mxu0 %v5163
        %v5165 = vand.u32 %v425, 4294901760
        %5166 = vmatprep.subr.mxu0 %v5165
        %v5167 = vand.u32 %v424, 4294901760
        %5168 = vmatpush1.msra.mxu0 %v5167
        %v5169 = vand.u32 %v429, 4294901760
        %5170 = vmatprep.subr.mxu0 %v5169
        %v5171 = vand.u32 %v428, 4294901760
        %5172 = vmatpush1.msra.mxu0 %v5171
        %v5173 = vand.u32 %v433, 4294901760
        %5174 = vmatprep.subr.mxu0 %v5173
        %v5175 = vand.u32 %v432, 4294901760
        %5176 = vmatpush1.msra.mxu0 %v5175
        %v5177 = vand.u32 %v437, 4294901760
        %5178 = vmatprep.subr.mxu0 %v5177
        %v5179 = vand.u32 %v436, 4294901760
        %5180 = vmatpush1.msra.mxu0 %v5179
        %v5181 = vand.u32 %v441, 4294901760
        %5182 = vmatprep.subr.mxu0 %v5181
        %v5183 = vand.u32 %v440, 4294901760
        %5184 = vmatpush1.msra.mxu0 %v5183
        %v5185 = vand.u32 %v445, 4294901760
        %5186 = vmatprep.subr.mxu0 %v5185
        %v5187 = vand.u32 %v444, 4294901760
        %5188 = vmatpush1.msra.mxu0 %v5187
        %v5189 = vand.u32 %v449, 4294901760
        %5190 = vmatprep.subr.mxu0 %v5189
        %v5191 = vand.u32 %v448, 4294901760
        %5192 = vmatpush1.msra.mxu0 %v5191
        %v5193 = vand.u32 %v453, 4294901760
        %5194 = vmatprep.subr.mxu0 %v5193
        %v5195 = vand.u32 %v452, 4294901760
        %5196 = vmatpush1.msra.mxu0 %v5195
        %v5197 = vand.u32 %v457, 4294901760
        %5198 = vmatprep.subr.mxu0 %v5197
        %v5199 = vand.u32 %v456, 4294901760
        %5200 = vmatpush1.msra.mxu0 %v5199
        %v5201 = vand.u32 %v461, 4294901760
        %5202 = vmatprep.subr.mxu0 %v5201
        %v5203 = vand.u32 %v460, 4294901760
        %5204 = vmatpush1.msra.mxu0 %v5203
        %v5205 = vand.u32 %v465, 4294901760
        %5206 = vmatprep.subr.mxu0 %v5205
        %v5207 = vand.u32 %v464, 4294901760
        %5208 = vmatpush1.msra.mxu0 %v5207
        %v5209 = vand.u32 %v469, 4294901760
        %5210 = vmatprep.subr.mxu0 %v5209
        %v5211 = vand.u32 %v468, 4294901760
        %5212 = vmatpush1.msra.mxu0 %v5211
        %v5213 = vand.u32 %v473, 4294901760
        %5214 = vmatprep.subr.mxu0 %v5213
        %v5215 = vand.u32 %v472, 4294901760
        %5216 = vmatpush1.msra.mxu0 %v5215
        %v5217 = vand.u32 %v477, 4294901760
        %5218 = vmatprep.subr.mxu0 %v5217
        %v5219 = vand.u32 %v476, 4294901760
        %5220 = vmatpush1.msra.mxu0 %v5219
        %v5221 = vand.u32 %v481, 4294901760
        %5222 = vmatprep.subr.mxu0 %v5221
        %v5223 = vand.u32 %v480, 4294901760
        %5224 = vmatpush1.msra.mxu0 %v5223
        %v5225 = vand.u32 %v485, 4294901760
        %5226 = vmatprep.subr.mxu0 %v5225
        %v5227 = vand.u32 %v484, 4294901760
        %5228 = vmatpush1.msra.mxu0 %v5227
        %v5229 = vand.u32 %v489, 4294901760
        %5230 = vmatprep.subr.mxu0 %v5229
        %v5231 = vand.u32 %v488, 4294901760
        %5232 = vmatpush1.msra.mxu0 %v5231
        %v5233 = vand.u32 %v507, 4294901760
        %v5234 = vsub.f32 %v507, %v5233
        %v5235 = vand.u32 %v5234, 4294901760
        %5236 = vmatprep.mubr.f32.mxu0 %v5235
        %v5237 = vand.u32 %v505, 4294901760
        %v5238 = vsub.f32 %v505, %v5237
        %v5239 = vand.u32 %v5238, 4294901760
        %5240 = vmatmul.mubr.f32.gmra.mrb[0].mxu0 %v5239
        %v5241 = vpop.f32.mrb[0].mxu0
        %v5242 = vadd.f32 %v5101, %v5241
        %v5243 = vpop.f32.mrb[0].mxu0
        %v5244 = vadd.f32 %v5103, %v5243
        %5245 = vdwg.mxu0
        %v5246 = vand.u32 %v365, 4294901760
        %v5247 = vsub.f32 %v365, %v5246
        %v5248 = vand.u32 %v5247, 4294901760
        %5249 = vmatprep.subr.mxu0 %v5248
        %v5250 = vand.u32 %v364, 4294901760
        %v5251 = vsub.f32 %v364, %v5250
        %v5252 = vand.u32 %v5251, 4294901760
        %5253 = vmatpush1.msra.mxu0 %v5252
        %v5254 = vand.u32 %v369, 4294901760
        %v5255 = vsub.f32 %v369, %v5254
        %v5256 = vand.u32 %v5255, 4294901760
        %5257 = vmatprep.subr.mxu0 %v5256
        %v5258 = vand.u32 %v368, 4294901760
        %v5259 = vsub.f32 %v368, %v5258
        %v5260 = vand.u32 %v5259, 4294901760
        %5261 = vmatpush1.msra.mxu0 %v5260
        %v5262 = vand.u32 %v373, 4294901760
        %v5263 = vsub.f32 %v373, %v5262
        %v5264 = vand.u32 %v5263, 4294901760
        %5265 = vmatprep.subr.mxu0 %v5264
        %v5266 = vand.u32 %v372, 4294901760
        %v5267 = vsub.f32 %v372, %v5266
        %v5268 = vand.u32 %v5267, 4294901760
        %5269 = vmatpush1.msra.mxu0 %v5268
        %v5270 = vand.u32 %v377, 4294901760
        %v5271 = vsub.f32 %v377, %v5270
        %v5272 = vand.u32 %v5271, 4294901760
        %5273 = vmatprep.subr.mxu0 %v5272
        %v5274 = vand.u32 %v376, 4294901760
        %v5275 = vsub.f32 %v376, %v5274
        %v5276 = vand.u32 %v5275, 4294901760
        %5277 = vmatpush1.msra.mxu0 %v5276
        %v5278 = vand.u32 %v381, 4294901760
        %v5279 = vsub.f32 %v381, %v5278
        %v5280 = vand.u32 %v5279, 4294901760
        %5281 = vmatprep.subr.mxu0 %v5280
        %v5282 = vand.u32 %v380, 4294901760
        %v5283 = vsub.f32 %v380, %v5282
        %v5284 = vand.u32 %v5283, 4294901760
        %5285 = vmatpush1.msra.mxu0 %v5284
        %v5286 = vand.u32 %v385, 4294901760
        %v5287 = vsub.f32 %v385, %v5286
        %v5288 = vand.u32 %v5287, 4294901760
        %5289 = vmatprep.subr.mxu0 %v5288
        %v5290 = vand.u32 %v384, 4294901760
        %v5291 = vsub.f32 %v384, %v5290
        %v5292 = vand.u32 %v5291, 4294901760
        %5293 = vmatpush1.msra.mxu0 %v5292
        %v5294 = vand.u32 %v389, 4294901760
        %v5295 = vsub.f32 %v389, %v5294
        %v5296 = vand.u32 %v5295, 4294901760
        %5297 = vmatprep.subr.mxu0 %v5296
        %v5298 = vand.u32 %v388, 4294901760
        %v5299 = vsub.f32 %v388, %v5298
        %v5300 = vand.u32 %v5299, 4294901760
        %5301 = vmatpush1.msra.mxu0 %v5300
        %v5302 = vand.u32 %v393, 4294901760
        %v5303 = vsub.f32 %v393, %v5302
        %v5304 = vand.u32 %v5303, 4294901760
        %5305 = vmatprep.subr.mxu0 %v5304
        %v5306 = vand.u32 %v392, 4294901760
        %v5307 = vsub.f32 %v392, %v5306
        %v5308 = vand.u32 %v5307, 4294901760
        %5309 = vmatpush1.msra.mxu0 %v5308
        %v5310 = vand.u32 %v397, 4294901760
        %v5311 = vsub.f32 %v397, %v5310
        %v5312 = vand.u32 %v5311, 4294901760
        %5313 = vmatprep.subr.mxu0 %v5312
        %v5314 = vand.u32 %v396, 4294901760
        %v5315 = vsub.f32 %v396, %v5314
        %v5316 = vand.u32 %v5315, 4294901760
        %5317 = vmatpush1.msra.mxu0 %v5316
        %v5318 = vand.u32 %v401, 4294901760
        %v5319 = vsub.f32 %v401, %v5318
        %v5320 = vand.u32 %v5319, 4294901760
        %5321 = vmatprep.subr.mxu0 %v5320
        %v5322 = vand.u32 %v400, 4294901760
        %v5323 = vsub.f32 %v400, %v5322
        %v5324 = vand.u32 %v5323, 4294901760
        %5325 = vmatpush1.msra.mxu0 %v5324
        %v5326 = vand.u32 %v405, 4294901760
        %v5327 = vsub.f32 %v405, %v5326
        %v5328 = vand.u32 %v5327, 4294901760
        %5329 = vmatprep.subr.mxu0 %v5328
        %v5330 = vand.u32 %v404, 4294901760
        %v5331 = vsub.f32 %v404, %v5330
        %v5332 = vand.u32 %v5331, 4294901760
        %5333 = vmatpush1.msra.mxu0 %v5332
        %v5334 = vand.u32 %v409, 4294901760
        %v5335 = vsub.f32 %v409, %v5334
        %v5336 = vand.u32 %v5335, 4294901760
        %5337 = vmatprep.subr.mxu0 %v5336
        %v5338 = vand.u32 %v408, 4294901760
        %v5339 = vsub.f32 %v408, %v5338
        %v5340 = vand.u32 %v5339, 4294901760
        %5341 = vmatpush1.msra.mxu0 %v5340
        %v5342 = vand.u32 %v413, 4294901760
        %v5343 = vsub.f32 %v413, %v5342
        %v5344 = vand.u32 %v5343, 4294901760
        %5345 = vmatprep.subr.mxu0 %v5344
        %v5346 = vand.u32 %v412, 4294901760
        %v5347 = vsub.f32 %v412, %v5346
        %v5348 = vand.u32 %v5347, 4294901760
        %5349 = vmatpush1.msra.mxu0 %v5348
        %v5350 = vand.u32 %v417, 4294901760
        %v5351 = vsub.f32 %v417, %v5350
        %v5352 = vand.u32 %v5351, 4294901760
        %5353 = vmatprep.subr.mxu0 %v5352
        %v5354 = vand.u32 %v416, 4294901760
        %v5355 = vsub.f32 %v416, %v5354
        %v5356 = vand.u32 %v5355, 4294901760
        %5357 = vmatpush1.msra.mxu0 %v5356
        %v5358 = vand.u32 %v421, 4294901760
        %v5359 = vsub.f32 %v421, %v5358
        %v5360 = vand.u32 %v5359, 4294901760
        %5361 = vmatprep.subr.mxu0 %v5360
        %v5362 = vand.u32 %v420, 4294901760
        %v5363 = vsub.f32 %v420, %v5362
        %v5364 = vand.u32 %v5363, 4294901760
        %5365 = vmatpush1.msra.mxu0 %v5364
        %v5366 = vand.u32 %v425, 4294901760
        %v5367 = vsub.f32 %v425, %v5366
        %v5368 = vand.u32 %v5367, 4294901760
        %5369 = vmatprep.subr.mxu0 %v5368
        %v5370 = vand.u32 %v424, 4294901760
        %v5371 = vsub.f32 %v424, %v5370
        %v5372 = vand.u32 %v5371, 4294901760
        %5373 = vmatpush1.msra.mxu0 %v5372
        %v5374 = vand.u32 %v429, 4294901760
        %v5375 = vsub.f32 %v429, %v5374
        %v5376 = vand.u32 %v5375, 4294901760
        %5377 = vmatprep.subr.mxu0 %v5376
        %v5378 = vand.u32 %v428, 4294901760
        %v5379 = vsub.f32 %v428, %v5378
        %v5380 = vand.u32 %v5379, 4294901760
        %5381 = vmatpush1.msra.mxu0 %v5380
        %v5382 = vand.u32 %v433, 4294901760
        %v5383 = vsub.f32 %v433, %v5382
        %v5384 = vand.u32 %v5383, 4294901760
        %5385 = vmatprep.subr.mxu0 %v5384
        %v5386 = vand.u32 %v432, 4294901760
        %v5387 = vsub.f32 %v432, %v5386
        %v5388 = vand.u32 %v5387, 4294901760
        %5389 = vmatpush1.msra.mxu0 %v5388
        %v5390 = vand.u32 %v437, 4294901760
        %v5391 = vsub.f32 %v437, %v5390
        %v5392 = vand.u32 %v5391, 4294901760
        %5393 = vmatprep.subr.mxu0 %v5392
        %v5394 = vand.u32 %v436, 4294901760
        %v5395 = vsub.f32 %v436, %v5394
        %v5396 = vand.u32 %v5395, 4294901760
        %5397 = vmatpush1.msra.mxu0 %v5396
        %v5398 = vand.u32 %v441, 4294901760
        %v5399 = vsub.f32 %v441, %v5398
        %v5400 = vand.u32 %v5399, 4294901760
        %5401 = vmatprep.subr.mxu0 %v5400
        %v5402 = vand.u32 %v440, 4294901760
        %v5403 = vsub.f32 %v440, %v5402
        %v5404 = vand.u32 %v5403, 4294901760
        %5405 = vmatpush1.msra.mxu0 %v5404
        %v5406 = vand.u32 %v445, 4294901760
        %v5407 = vsub.f32 %v445, %v5406
        %v5408 = vand.u32 %v5407, 4294901760
        %5409 = vmatprep.subr.mxu0 %v5408
        %v5410 = vand.u32 %v444, 4294901760
        %v5411 = vsub.f32 %v444, %v5410
        %v5412 = vand.u32 %v5411, 4294901760
        %5413 = vmatpush1.msra.mxu0 %v5412
        %v5414 = vand.u32 %v449, 4294901760
        %v5415 = vsub.f32 %v449, %v5414
        %v5416 = vand.u32 %v5415, 4294901760
        %5417 = vmatprep.subr.mxu0 %v5416
        %v5418 = vand.u32 %v448, 4294901760
        %v5419 = vsub.f32 %v448, %v5418
        %v5420 = vand.u32 %v5419, 4294901760
        %5421 = vmatpush1.msra.mxu0 %v5420
        %v5422 = vand.u32 %v453, 4294901760
        %v5423 = vsub.f32 %v453, %v5422
        %v5424 = vand.u32 %v5423, 4294901760
        %5425 = vmatprep.subr.mxu0 %v5424
        %v5426 = vand.u32 %v452, 4294901760
        %v5427 = vsub.f32 %v452, %v5426
        %v5428 = vand.u32 %v5427, 4294901760
        %5429 = vmatpush1.msra.mxu0 %v5428
        %v5430 = vand.u32 %v457, 4294901760
        %v5431 = vsub.f32 %v457, %v5430
        %v5432 = vand.u32 %v5431, 4294901760
        %5433 = vmatprep.subr.mxu0 %v5432
        %v5434 = vand.u32 %v456, 4294901760
        %v5435 = vsub.f32 %v456, %v5434
        %v5436 = vand.u32 %v5435, 4294901760
        %5437 = vmatpush1.msra.mxu0 %v5436
        %v5438 = vand.u32 %v461, 4294901760
        %v5439 = vsub.f32 %v461, %v5438
        %v5440 = vand.u32 %v5439, 4294901760
        %5441 = vmatprep.subr.mxu0 %v5440
        %v5442 = vand.u32 %v460, 4294901760
        %v5443 = vsub.f32 %v460, %v5442
        %v5444 = vand.u32 %v5443, 4294901760
        %5445 = vmatpush1.msra.mxu0 %v5444
        %v5446 = vand.u32 %v465, 4294901760
        %v5447 = vsub.f32 %v465, %v5446
        %v5448 = vand.u32 %v5447, 4294901760
        %5449 = vmatprep.subr.mxu0 %v5448
        %v5450 = vand.u32 %v464, 4294901760
        %v5451 = vsub.f32 %v464, %v5450
        %v5452 = vand.u32 %v5451, 4294901760
        %5453 = vmatpush1.msra.mxu0 %v5452
        %v5454 = vand.u32 %v469, 4294901760
        %v5455 = vsub.f32 %v469, %v5454
        %v5456 = vand.u32 %v5455, 4294901760
        %5457 = vmatprep.subr.mxu0 %v5456
        %v5458 = vand.u32 %v468, 4294901760
        %v5459 = vsub.f32 %v468, %v5458
        %v5460 = vand.u32 %v5459, 4294901760
        %5461 = vmatpush1.msra.mxu0 %v5460
        %v5462 = vand.u32 %v473, 4294901760
        %v5463 = vsub.f32 %v473, %v5462
        %v5464 = vand.u32 %v5463, 4294901760
        %5465 = vmatprep.subr.mxu0 %v5464
        %v5466 = vand.u32 %v472, 4294901760
        %v5467 = vsub.f32 %v472, %v5466
        %v5468 = vand.u32 %v5467, 4294901760
        %5469 = vmatpush1.msra.mxu0 %v5468
        %v5470 = vand.u32 %v477, 4294901760
        %v5471 = vsub.f32 %v477, %v5470
        %v5472 = vand.u32 %v5471, 4294901760
        %5473 = vmatprep.subr.mxu0 %v5472
        %v5474 = vand.u32 %v476, 4294901760
        %v5475 = vsub.f32 %v476, %v5474
        %v5476 = vand.u32 %v5475, 4294901760
        %5477 = vmatpush1.msra.mxu0 %v5476
        %v5478 = vand.u32 %v481, 4294901760
        %v5479 = vsub.f32 %v481, %v5478
        %v5480 = vand.u32 %v5479, 4294901760
        %5481 = vmatprep.subr.mxu0 %v5480
        %v5482 = vand.u32 %v480, 4294901760
        %v5483 = vsub.f32 %v480, %v5482
        %v5484 = vand.u32 %v5483, 4294901760
        %5485 = vmatpush1.msra.mxu0 %v5484
        %v5486 = vand.u32 %v485, 4294901760
        %v5487 = vsub.f32 %v485, %v5486
        %v5488 = vand.u32 %v5487, 4294901760
        %5489 = vmatprep.subr.mxu0 %v5488
        %v5490 = vand.u32 %v484, 4294901760
        %v5491 = vsub.f32 %v484, %v5490
        %v5492 = vand.u32 %v5491, 4294901760
        %5493 = vmatpush1.msra.mxu0 %v5492
        %v5494 = vand.u32 %v489, 4294901760
        %v5495 = vsub.f32 %v489, %v5494
        %v5496 = vand.u32 %v5495, 4294901760
        %5497 = vmatprep.subr.mxu0 %v5496
        %v5498 = vand.u32 %v488, 4294901760
        %v5499 = vsub.f32 %v488, %v5498
        %v5500 = vand.u32 %v5499, 4294901760
        %5501 = vmatpush1.msra.mxu0 %v5500
        %v5502 = vand.u32 %v507, 4294901760
        %5503 = vmatprep.mubr.f32.mxu0 %v5502
        %v5504 = vand.u32 %v505, 4294901760
        %5505 = vmatmul.mubr.f32.gmra.mrb[0].mxu0 %v5504
        %v5506 = vpop.f32.mrb[0].mxu0
        %v5507 = vadd.f32 %v5242, %v5506
        %v5508 = vpop.f32.mrb[0].mxu0
        %v5509 = vadd.f32 %v5244, %v5508
        %5510 = vdwg.mxu0
        %v5511 = vand.u32 %v365, 4294901760
        %5512 = vmatprep.subr.mxu0 %v5511
        %v5513 = vand.u32 %v364, 4294901760
        %5514 = vmatpush1.msra.mxu0 %v5513
        %v5515 = vand.u32 %v369, 4294901760
        %5516 = vmatprep.subr.mxu0 %v5515
        %v5517 = vand.u32 %v368, 4294901760
        %5518 = vmatpush1.msra.mxu0 %v5517
        %v5519 = vand.u32 %v373, 4294901760
        %5520 = vmatprep.subr.mxu0 %v5519
        %v5521 = vand.u32 %v372, 4294901760
        %5522 = vmatpush1.msra.mxu0 %v5521
        %v5523 = vand.u32 %v377, 4294901760
        %5524 = vmatprep.subr.mxu0 %v5523
        %v5525 = vand.u32 %v376, 4294901760
        %5526 = vmatpush1.msra.mxu0 %v5525
        %v5527 = vand.u32 %v381, 4294901760
        %5528 = vmatprep.subr.mxu0 %v5527
        %v5529 = vand.u32 %v380, 4294901760
        %5530 = vmatpush1.msra.mxu0 %v5529
        %v5531 = vand.u32 %v385, 4294901760
        %5532 = vmatprep.subr.mxu0 %v5531
        %v5533 = vand.u32 %v384, 4294901760
        %5534 = vmatpush1.msra.mxu0 %v5533
        %v5535 = vand.u32 %v389, 4294901760
        %5536 = vmatprep.subr.mxu0 %v5535
        %v5537 = vand.u32 %v388, 4294901760
        %5538 = vmatpush1.msra.mxu0 %v5537
        %v5539 = vand.u32 %v393, 4294901760
        %5540 = vmatprep.subr.mxu0 %v5539
        %v5541 = vand.u32 %v392, 4294901760
        %5542 = vmatpush1.msra.mxu0 %v5541
        %v5543 = vand.u32 %v397, 4294901760
        %5544 = vmatprep.subr.mxu0 %v5543
        %v5545 = vand.u32 %v396, 4294901760
        %5546 = vmatpush1.msra.mxu0 %v5545
        %v5547 = vand.u32 %v401, 4294901760
        %5548 = vmatprep.subr.mxu0 %v5547
        %v5549 = vand.u32 %v400, 4294901760
        %5550 = vmatpush1.msra.mxu0 %v5549
        %v5551 = vand.u32 %v405, 4294901760
        %5552 = vmatprep.subr.mxu0 %v5551
        %v5553 = vand.u32 %v404, 4294901760
        %5554 = vmatpush1.msra.mxu0 %v5553
        %v5555 = vand.u32 %v409, 4294901760
        %5556 = vmatprep.subr.mxu0 %v5555
        %v5557 = vand.u32 %v408, 4294901760
        %5558 = vmatpush1.msra.mxu0 %v5557
        %v5559 = vand.u32 %v413, 4294901760
        %5560 = vmatprep.subr.mxu0 %v5559
        %v5561 = vand.u32 %v412, 4294901760
        %5562 = vmatpush1.msra.mxu0 %v5561
        %v5563 = vand.u32 %v417, 4294901760
        %5564 = vmatprep.subr.mxu0 %v5563
        %v5565 = vand.u32 %v416, 4294901760
        %5566 = vmatpush1.msra.mxu0 %v5565
        %v5567 = vand.u32 %v421, 4294901760
        %5568 = vmatprep.subr.mxu0 %v5567
        %v5569 = vand.u32 %v420, 4294901760
        %5570 = vmatpush1.msra.mxu0 %v5569
        %v5571 = vand.u32 %v425, 4294901760
        %5572 = vmatprep.subr.mxu0 %v5571
        %v5573 = vand.u32 %v424, 4294901760
        %5574 = vmatpush1.msra.mxu0 %v5573
        %v5575 = vand.u32 %v429, 4294901760
        %5576 = vmatprep.subr.mxu0 %v5575
        %v5577 = vand.u32 %v428, 4294901760
        %5578 = vmatpush1.msra.mxu0 %v5577
        %v5579 = vand.u32 %v433, 4294901760
        %5580 = vmatprep.subr.mxu0 %v5579
        %v5581 = vand.u32 %v432, 4294901760
        %5582 = vmatpush1.msra.mxu0 %v5581
        %v5583 = vand.u32 %v437, 4294901760
        %5584 = vmatprep.subr.mxu0 %v5583
        %v5585 = vand.u32 %v436, 4294901760
        %5586 = vmatpush1.msra.mxu0 %v5585
        %v5587 = vand.u32 %v441, 4294901760
        %5588 = vmatprep.subr.mxu0 %v5587
        %v5589 = vand.u32 %v440, 4294901760
        %5590 = vmatpush1.msra.mxu0 %v5589
        %v5591 = vand.u32 %v445, 4294901760
        %5592 = vmatprep.subr.mxu0 %v5591
        %v5593 = vand.u32 %v444, 4294901760
        %5594 = vmatpush1.msra.mxu0 %v5593
        %v5595 = vand.u32 %v449, 4294901760
        %5596 = vmatprep.subr.mxu0 %v5595
        %v5597 = vand.u32 %v448, 4294901760
        %5598 = vmatpush1.msra.mxu0 %v5597
        %v5599 = vand.u32 %v453, 4294901760
        %5600 = vmatprep.subr.mxu0 %v5599
        %v5601 = vand.u32 %v452, 4294901760
        %5602 = vmatpush1.msra.mxu0 %v5601
        %v5603 = vand.u32 %v457, 4294901760
        %5604 = vmatprep.subr.mxu0 %v5603
        %v5605 = vand.u32 %v456, 4294901760
        %5606 = vmatpush1.msra.mxu0 %v5605
        %v5607 = vand.u32 %v461, 4294901760
        %5608 = vmatprep.subr.mxu0 %v5607
        %v5609 = vand.u32 %v460, 4294901760
        %5610 = vmatpush1.msra.mxu0 %v5609
        %v5611 = vand.u32 %v465, 4294901760
        %5612 = vmatprep.subr.mxu0 %v5611
        %v5613 = vand.u32 %v464, 4294901760
        %5614 = vmatpush1.msra.mxu0 %v5613
        %v5615 = vand.u32 %v469, 4294901760
        %5616 = vmatprep.subr.mxu0 %v5615
        %v5617 = vand.u32 %v468, 4294901760
        %5618 = vmatpush1.msra.mxu0 %v5617
        %v5619 = vand.u32 %v473, 4294901760
        %5620 = vmatprep.subr.mxu0 %v5619
        %v5621 = vand.u32 %v472, 4294901760
        %5622 = vmatpush1.msra.mxu0 %v5621
        %v5623 = vand.u32 %v477, 4294901760
        %5624 = vmatprep.subr.mxu0 %v5623
        %v5625 = vand.u32 %v476, 4294901760
        %5626 = vmatpush1.msra.mxu0 %v5625
        %v5627 = vand.u32 %v481, 4294901760
        %5628 = vmatprep.subr.mxu0 %v5627
        %v5629 = vand.u32 %v480, 4294901760
        %5630 = vmatpush1.msra.mxu0 %v5629
        %v5631 = vand.u32 %v485, 4294901760
        %5632 = vmatprep.subr.mxu0 %v5631
        %v5633 = vand.u32 %v484, 4294901760
        %5634 = vmatpush1.msra.mxu0 %v5633
        %v5635 = vand.u32 %v489, 4294901760
        %5636 = vmatprep.subr.mxu0 %v5635
        %v5637 = vand.u32 %v488, 4294901760
        %5638 = vmatpush1.msra.mxu0 %v5637
        %v5639 = vand.u32 %v507, 4294901760
        %5640 = vmatprep.mubr.f32.mxu0 %v5639
        %v5641 = vand.u32 %v505, 4294901760
        %5642 = vmatmul.mubr.f32.gmra.mrb[0].mxu0 %v5641
        %v5643 = vpop.f32.mrb[0].mxu0
        %v5644 = vadd.f32 %v5507, %v5643
        %v5645 = vpop.f32.mrb[0].mxu0
        %v5646 = vadd.f32 %v5509, %v5645
        %5647 = vdwg.mxu0
        %5648 = vst [vmem:[%s225] sm:$0x3] %v3076
        %5649 = vst [vmem:[%s232] sm:$0x3] %v3078
        %s5650 = scalar_lea.vmem %s232, 2 [#allocation8]
        %5651 = vst [vmem:[%s5650] sm:$0x3] %v5644
        %s5652 = scalar_lea.vmem %s232, 4 [#allocation8]
        %5653 = vst [vmem:[%s5652] sm:$0x3] %v5646
        %s5654 = sand.u32 %s96, 1
        %s5655 = scalar_lea.sflag [#allocation4], %s5654
        %s5656 = sand.u32 %s96, 1
        %s5657 = smul.addr %s5656, 2
        %s5658 = scalar_lea.vmem [#allocation7], %s5657
        %s5659 = sand.u32 %s124, 1
        %s5660 = scalar_lea.sflag [#allocation9], %s5659
        %s5661 = sand.u32 %s124, 1
        %s5662 = smul.addr %s5661, 6
        %s5663 = scalar_lea.vmem [#allocation8], %s5662
        // Predicated region
        $region37: #{tpu_custom_call.1} parent=27 // pred_check
          %p5664 = pneg %p106
        $region38: #{tpu_custom_call.1} parent=27 // pred_check_branch
          %5666 = sbr.rel (%p5664) target = $region40
        $region39: #{tpu_custom_call.1} parent=27 // pred_region
          %s5668 = ssub.s32 32, 32
          %5669 = vsyncadd %s5655, %s5668
          %s5670 = sadd.s32 %s30, %s29
          %s5671 = smul.addr %s5670, 32
          %s5672 = scalar_lea.hbm %s2, %s5671
          %s5674 = sshll.u32 %s5658, 4
          %s5675 = int_to_ptr.vmem [resolvable:$true] %s5674
          %5677 = dma.vmem_to_hbm [thread:$0]  %s5675, 32, %s5672, %s5655
        $region40: #{tpu_custom_call.1} parent=27 // pred_fallthru
          _
        // Predicated region
        $region41: #{tpu_custom_call.1} parent=27 // pred_check
          %p5678 = pneg %p134
        $region42: #{tpu_custom_call.1} parent=27 // pred_check_branch
          %5680 = sbr.rel (%p5678) target = $region44
        $region43: #{tpu_custom_call.1} parent=27 // pred_region
          %s5682 = ssub.s32 96, 96
          %5683 = vsyncadd %s5660, %s5682
          %s5684 = smul.addr %s29, 3
          %s5685 = sadd.s32 %s30, %s5684
          %s5686 = smul.addr %s5685, 32
          %s5687 = scalar_lea.hbm %s3, %s5686
          %s5688 = sshll.u32 %s5663, 4
          %s5689 = int_to_ptr.vmem [resolvable:$true] %s5688
          %5694 = dma.vmem_to_hbm [thread:$0]  %s5689, 96, %s5687, %s5660, 32, 32, 2
        $region44: #{tpu_custom_call.1} parent=27 // pred_fallthru
          _
      $region28: #{tpu_custom_call.1} parent=5 // pred_fallthru
        _
      %p5695 = scmp.le.s32.totalorder 2, %s20
      // Predicated region
      $region45: #{tpu_custom_call.1} parent=5 // pred_check
        %p5696 = pneg %p5695
      $region46: #{tpu_custom_call.1} parent=5 // pred_check_branch
        %5698 = sbr.rel (%p5696) target = $region48
      $region47: #{tpu_custom_call.1} parent=5 // pred_region
        %s5699 = ssub.s32 %s20, 2
        // Predicated region
        $region49: #{tpu_custom_call.1} parent=47 // pred_check
          %p5700 = pneg %p112
        $region50: #{tpu_custom_call.1} parent=47 // pred_check_branch
          %5702 = sbr.rel (%p5700) target = $region52
        $region51: #{tpu_custom_call.1} parent=47 // pred_region
          %s5703 = sand.u32 %s97, 1
          %s5704 = scalar_lea.sflag [#allocation4], %s5703
          %s5705 = sand.u32 %s97, 1
          %s5706 = smul.addr %s5705, 2
          %s5707 = scalar_lea.vmem [#allocation7], %s5706
          %5708 = dma.done %s5704, 32
        $region52: #{tpu_custom_call.1} parent=47 // pred_fallthru
          _
        // Predicated region
        $region53: #{tpu_custom_call.1} parent=47 // pred_check
          %p5709 = pneg %p140
        $region54: #{tpu_custom_call.1} parent=47 // pred_check_branch
          %5711 = sbr.rel (%p5709) target = $region56
        $region55: #{tpu_custom_call.1} parent=47 // pred_region
          %s5712 = sand.u32 %s125, 1
          %s5713 = scalar_lea.sflag [#allocation9], %s5712
          %s5714 = sand.u32 %s125, 1
          %s5715 = smul.addr %s5714, 6
          %s5716 = scalar_lea.vmem [#allocation8], %s5715
          %5717 = dma.done %s5713, 96
        $region56: #{tpu_custom_call.1} parent=47 // pred_fallthru
          _
      $region48: #{tpu_custom_call.1} parent=5 // pred_fallthru
        _
    $region6: #{tpu_custom_call.1} parent=1 // loop_footer
      %s24 = sadd.s32 1, %s20
    $region7: #{tpu_custom_call.1} parent=1 // loop_footer_branch
      %19 = sbr.rel target = $region3
    $region8: #{tpu_custom_call.1} parent=1 // loop_exit
      _
    %5718 = vsyncpa [#allocation3], 1
    %s5719 = scalar_lea.sflag [#allocation3], 1
    %5720 = vsyncpa %s5719, 1
    %5721 = vsyncpa [#allocation6], 1
    %s5722 = scalar_lea.sflag [#allocation6], 1
    %5723 = vsyncpa %s5722, 1
    %5724 = vsyncpa [#allocation4], 1
    %s5725 = scalar_lea.sflag [#allocation4], 1
    %5726 = vsyncpa %s5725, 1
    %5727 = vsyncpa [#allocation9], 1
    %s5728 = scalar_lea.sflag [#allocation9], 1
    %5729 = vsyncpa %s5728, 1

</llo_original>
